<compile_context>
chip_gen: v6e
topology: v6e:2x2x1
jax: 0.10.0
libtpu: 0.0.40
codegen_flags: <defaults>
</compile_context>

<pallas_src>
import functools

import jax
import jax.numpy as jnp
import numpy as np
from jax.experimental import pallas as pl
from jax.experimental.pallas import tpu as pltpu

BN_EPS = 1e-5
LANE = 128


def _round_up(x, m):
    return (x + m - 1) // m * m


def _pick_row_tile(n, target=16):
    t = min(n, target)
    while n % t:
        t -= 1
    return t


# ---------------------------------------------------------------------------
# Pass 1: conv as 16 shifted matmuls on the space-to-depth input, plus
#         per-tile channel sum / sum-of-squares for the BN batch statistics.
# ---------------------------------------------------------------------------
def _conv_stats_kernel(y_ref, w_ref, conv_ref, stats_ref, acc_ref,
                       *, tr, ow, kdim, npad):
    # y_ref    : (1, Hs, Ws, kdim)   space-to-depth image (resident across row tiles)
    # w_ref    : (16, kdim, npad)    tap-major weights (resident)
    # conv_ref : (1, tr, ow, npad)   this row-tile's conv output
    # stats_ref: (1, 1, 2, npad)     [channel sum, channel sum of squares]
    # acc_ref  : (tr*ow, npad) f32   VMEM accumulator
    r = pl.program_id(1)
    row0 = r * tr
    for t in range(16):
        dh, dw = t // 4, t % 4
        win = y_ref[0, pl.ds(row0 + dh, tr), dw:dw + ow, :]      # (tr, ow, kdim)
        prod = jnp.dot(win.reshape(tr * ow, kdim), w_ref[t],
                       preferred_element_type=jnp.float32)
        if t == 0:
            acc_ref[...] = prod
        else:
            acc_ref[...] += prod
    acc = acc_ref[...]
    conv_ref[0] = acc.reshape(tr, ow, npad).astype(conv_ref.dtype)
    ssum = jnp.sum(acc, axis=0, keepdims=True)
    ssq = jnp.sum(acc * acc, axis=0, keepdims=True)
    stats_ref[0, 0] = jnp.concatenate([ssum, ssq], axis=0)


# ---------------------------------------------------------------------------
# Pass 2: folded BN affine (scale/shift) + ReLU + fused 3x3/s2/p1 max pool.
#
# x_ref is the conv activation re-viewed as (1, PH, 2, PW, 2*npad):
#   dim 2 (size 2)       = conv-row parity   (2p / 2p+1)
#   lanes [0 : npad)     = even conv columns (2q)
#   lanes [npad : 2npad) = odd  conv columns (2q+1)
# Zero is a neutral padding value for the shifted pool taps (post-ReLU >= 0).
# ---------------------------------------------------------------------------
def _bn_relu_pool_kernel(scale_ref, shift_ref, x_ref, o_ref, *, ph, pw, npad):
    scale = scale_ref[...]                     # (1, npad) broadcasts over (ph, pw, npad)
    shift = shift_ref[...]

    def bn_relu(v):
        return jnp.maximum(v.astype(jnp.float32) * scale + shift, 0.0)

    a = bn_relu(x_ref[0, :, 0, :, 0:npad])            # rows 2p,   cols 2q
    b = bn_relu(x_ref[0, :, 0, :, npad:2 * npad])     # rows 2p,   cols 2q+1
    c = bn_relu(x_ref[0, :, 1, :, 0:npad])            # rows 2p+1, cols 2q
    d = bn_relu(x_ref[0, :, 1, :, npad:2 * npad])     # rows 2p+1, cols 2q+1

    # pooled(p,q) = max over conv rows {2p-1,2p,2p+1} x cols {2q-1,2q,2q+1}
    core = jnp.maximum(jnp.maximum(a, b), jnp.maximum(c, d))
    zero_col = jnp.zeros((ph, 1, npad), jnp.float32)
    zero_row = jnp.zeros((1, pw, npad), jnp.float32)

    bd = jnp.maximum(b, d)                               # column 2q-1 taps
    cd = jnp.maximum(c, d)                               # row 2p-1 taps
    if pw > 1:
        left = jnp.concatenate([zero_col, bd[:, :pw - 1, :]], axis=1)
        dcol = jnp.concatenate([zero_col, d[:, :pw - 1, :]], axis=1)
    else:
        left, dcol = zero_col, zero_col
    if ph > 1:
        up = jnp.concatenate([zero_row, cd[:ph - 1, :, :]], axis=0)
        corner = jnp.concatenate([zero_row, dcol[:ph - 1, :, :]], axis=0)
    else:
        up, corner = zero_row, zero_row

    out = jnp.maximum(jnp.maximum(core, left), jnp.maximum(up, corner))
    o_ref[0] = out.astype(o_ref.dtype)


# ---------------------------------------------------------------------------
# Wrapper (NCHW in / NCHW out, like PyTorch)
# ---------------------------------------------------------------------------
def conv2_forward(x_nchw, w_oihw, gamma, beta, *, compute_dtype=jnp.bfloat16):
    B, Cin, H, W = x_nchw.shape
    Cout = w_oihw.shape[0]
    KH = KW = 7
    S, P = 2, 3
    OH = (H + 2 * P - KH) // S + 1
    OW = (W + 2 * P - KW) // S + 1
    # TODO(synk): odd conv-output sizes would need one extra zero row/col before
    # the fused even/odd max pool; typical stems (and this test) are even.
    assert OH % 2 == 0 and OW % 2 == 0, "fused maxpool path assumes even conv output"
    PH, PW = OH // 2, OW // 2
    Npad = _round_up(Cout, LANE)
    Kdim = 4 * Cin
    Hs, Ws = OH + 3, OW + 3

    # ---- glue: space-to-depth input (B, Hs, Ws, 4*Cin), ~1x the input size --
    x_nhwc = jnp.transpose(x_nchw, (0, 2, 3, 1)).astype(jnp.float32)
    xpad = jnp.pad(x_nhwc, ((0, 0),
                            (P, 2 * Hs - H - P),
                            (P, 2 * Ws - W - P),
                            (0, 0)))
    y = xpad.reshape(B, Hs, 2, Ws, 2, Cin)
    y = jnp.transpose(y, (0, 1, 3, 2, 4, 5)).reshape(B, Hs, Ws, Kdim)
    y = y.astype(compute_dtype)

    # ---- glue: weights (Cout,Cin,7,7) -> (16, 4*Cin, Npad), tap t = dh*4+dw -
    w_hwio = jnp.transpose(w_oihw, (2, 3, 1, 0)).astype(jnp.float32)
    w_pad = jnp.pad(w_hwio, ((0, 1), (0, 1), (0, 0), (0, Npad - Cout)))
    w2 = w_pad.reshape(4, 2, 4, 2, Cin, Npad)
    w2 = jnp.transpose(w2, (0, 2, 1, 3, 4, 5)).reshape(16, Kdim, Npad)
    w2 = w2.astype(compute_dtype)

    TR = _pick_row_tile(OH, 16)
    RT = OH // TR

    kernel1 = functools.partial(_conv_stats_kernel,
                                tr=TR, ow=OW, kdim=Kdim, npad=Npad)
    conv_act, stats = pl.pallas_call(
        kernel1,
        out_shape=(
            jax.ShapeDtypeStruct((B, OH, OW, Npad), compute_dtype),
            jax.ShapeDtypeStruct((B, RT, 2, Npad), jnp.float32),
        ),
        grid=(B, RT),
        in_specs=[
            pl.BlockSpec((1, Hs, Ws, Kdim), lambda b, r: (b, 0, 0, 0)),
            pl.BlockSpec((16, Kdim, Npad), lambda b, r: (0, 0, 0)),
        ],
        out_specs=(
            pl.BlockSpec((1, TR, OW, Npad), lambda b, r: (b, r, 0, 0)),
            pl.BlockSpec((1, 1, 2, Npad), lambda b, r: (b, r, 0, 0)),
        ),
        scratch_shapes=[pltpu.VMEM((TR * OW, Npad), jnp.float32)],
        compiler_params=pltpu.CompilerParams(
            dimension_semantics=("parallel", "parallel")),
    )(y, w2)

    # ---- fold BN batch stats + gamma/beta into per-channel scale/shift ------
    M_total = B * OH * OW
    s = jnp.sum(stats, axis=(0, 1))                       # (2, Npad) f32
    mean = s[0] / M_total
    var = jnp.maximum(s[1] / M_total - mean * mean, 0.0)  # biased variance
    inv = jax.lax.rsqrt(var + BN_EPS)
    gamma_p = jnp.pad(gamma.astype(jnp.float32), (0, Npad - Cout))
    beta_p = jnp.pad(beta.astype(jnp.float32), (0, Npad - Cout))
    scale = (gamma_p * inv).reshape(1, Npad)
    shift = (beta_p - mean * gamma_p * inv).reshape(1, Npad)

    # free, contiguous re-view: (B, OH, OW, Npad) -> (B, PH, 2, PW, 2*Npad)
    conv5 = conv_act.reshape(B, PH, 2, PW, 2 * Npad)

    kernel2 = functools.partial(_bn_relu_pool_kernel, ph=PH, pw=PW, npad=Npad)
    pooled = pl.pallas_call(
        kernel2,
        out_shape=jax.ShapeDtypeStruct((B, PH, PW, Npad), jnp.float32),
        grid=(B,),
        in_specs=[
            pl.BlockSpec((1, Npad), lambda b: (0, 0)),
            pl.BlockSpec((1, Npad), lambda b: (0, 0)),
            pl.BlockSpec((1, PH, 2, PW, 2 * Npad), lambda b: (b, 0, 0, 0, 0)),
        ],
        out_specs=pl.BlockSpec((1, PH, PW, Npad), lambda b: (b, 0, 0, 0)),
        compiler_params=pltpu.CompilerParams(
            dimension_semantics=("parallel",)),
    )(scale, shift, conv5)

    out = pooled[:, :, :, :Cout]                 # drop lane padding
    return jnp.transpose(out, (0, 3, 1, 2))      # back to NCHW


# ---------------------------------------------------------------------------
# Pure-JAX reference (matches torch semantics) for self-check
# ---------------------------------------------------------------------------
def conv2_reference(x, w, gamma, beta):
    y = jax.lax.conv_general_dilated(
        x, w, window_strides=(2, 2), padding=((3, 3), (3, 3)),
        dimension_numbers=("NCHW", "OIHW", "NCHW"))
    mean = jnp.mean(y, axis=(0, 2, 3), keepdims=True)
    var = jnp.mean(jnp.square(y - mean), axis=(0, 2, 3), keepdims=True)
    y = (y - mean) * jax.lax.rsqrt(var + BN_EPS)
    y = y * gamma.reshape(1, -1, 1, 1) + beta.reshape(1, -1, 1, 1)
    y = jnp.maximum(y, 0.0)
    y = jax.lax.reduce_window(
        y, -jnp.inf, jax.lax.max,
        window_dimensions=(1, 1, 3, 3), window_strides=(1, 1, 2, 2),
        padding=((0, 0), (0, 0), (1, 1), (1, 1)))
    return y


if __name__ == "__main__":
    key = jax.random.PRNGKey(0)
    k_x, k_w, k_g, k_b = jax.random.split(key, 4)

    B, Cin, H, W = 2, 4, 16, 16
    Cout = 8

    x = jax.random.normal(k_x, (B, Cin, H, W), dtype=jnp.float32)
    fan_in = Cin * 7 * 7
    w = jax.random.normal(k_w, (Cout, Cin, 7, 7), dtype=jnp.float32) / np.sqrt(fan_in)
    gamma = 1.0 + 0.1 * jax.random.normal(k_g, (Cout,), dtype=jnp.float32)
    beta = 0.1 * jax.random.normal(k_b, (Cout,), dtype=jnp.float32)

    ref = jax.block_until_ready(conv2_reference(x, w, gamma, beta))

    # f32 operand path
    out32 = jax.block_until_ready(
        conv2_forward(x, w, gamma, beta, compute_dtype=jnp.float32))
    assert out32.shape == ref.shape == (B, Cout, 4, 4), (out32.shape, ref.shape)
    err32 = float(jnp.max(jnp.abs(out32 - ref)))
    assert err32 < 5e-2, f"f32 max abs err {err32}"

    # bf16 MXU operand path (f32 accumulation + f32 BN statistics)
    out16 = jax.block_until_ready(
        conv2_forward(x, w, gamma, beta, compute_dtype=jnp.bfloat16))
    assert out16.shape == ref.shape
    err16 = float(jnp.max(jnp.abs(out16 - ref)))
    assert err16 < 1.5e-1, f"bf16 max abs err {err16}"

    print("KERNEL_OK")
</pallas_src>

<mosaic_0001>
module attributes {stable_mosaic.version = 11 : i64} {
  func.func @_conv_stats_kernel(%arg0: i32, %arg1: i32, %arg2: memref<1x11x11x16xf32, #tpu.memory_space<vmem>>, %arg3: memref<16x16x128xf32, #tpu.memory_space<vmem>>, %arg4: memref<1x8x8x128xf32, #tpu.memory_space<vmem>>, %arg5: memref<1x1x2x128xf32, #tpu.memory_space<vmem>>, %arg6: memref<64x128xf32, #tpu.memory_space<vmem>>) attributes {dimension_semantics = [#tpu.dimension_semantics<parallel>, #tpu.dimension_semantics<parallel>], iteration_bounds = array<i64: 2, 1>, scalar_prefetch = 0 : i64, scratch_operands = 1 : i64, tpu.core_type = #tpu.core_type<tc>, window_params = [{transform_indices = @transform_0, window_bounds = array<i64: 1, 11, 11, 16>}, {pipeline_mode = #tpu.pipeline_mode<synchronous>, transform_indices = @transform_1, window_bounds = array<i64: 16, 16, 128>}, {transform_indices = @transform_2, window_bounds = array<i64: 1, 8, 8, 128>}, {transform_indices = @transform_3, window_bounds = array<i64: 1, 1, 2, 128>}]} {
    %c8_i32 = arith.constant 8 : i32
    %0 = arith.muli %arg1, %c8_i32 : i32
    %c0_i32 = arith.constant 0 : i32
    %1 = arith.addi %0, %c0_i32 : i32
    %c0 = arith.constant 0 : index
    %2 = arith.index_cast %1 : i32 to index
    %c0_0 = arith.constant 0 : index
    %c0_1 = arith.constant 0 : index
    %3 = vector.load %arg2[%c0, %2, %c0_0, %c0_1] : memref<1x11x11x16xf32, #tpu.memory_space<vmem>>, vector<1x8x8x16xf32>
    %4 = vector.shape_cast %3 : vector<1x8x8x16xf32> to vector<8x8x16xf32>
    %5 = vector.shape_cast %4 : vector<8x8x16xf32> to vector<64x16xf32>
    %c0_2 = arith.constant 0 : index
    %c0_3 = arith.constant 0 : index
    %c0_4 = arith.constant 0 : index
    %6 = vector.load %arg3[%c0_2, %c0_3, %c0_4] : memref<16x16x128xf32, #tpu.memory_space<vmem>>, vector<1x16x128xf32>
    %7 = vector.shape_cast %6 : vector<1x16x128xf32> to vector<16x128xf32>
    %cst = arith.constant dense<0.000000e+00> : vector<64x128xf32>
    %8 = tpu.matmul %5, %7, %cst {dimension_numbers = #tpu.dot_dimension_numbers<[1], [0], [0], [1], [0, 0, 1, 1], [], []>} : vector<64x16xf32>, vector<16x128xf32>, vector<64x128xf32> -> vector<64x128xf32>
    %c0_5 = arith.constant 0 : index
    %c0_6 = arith.constant 0 : index
    %9 = vector.load %arg6[%c0_5, %c0_6] : memref<64x128xf32, #tpu.memory_space<vmem>>, vector<64x128xf32>
    tpu.vector_store %arg6[%c0_5, %c0_6], %8 {strides = array<i32>} : memref<64x128xf32, #tpu.memory_space<vmem>>, vector<64x128xf32>,
    %c0_i32_7 = arith.constant 0 : i32
    %10 = arith.addi %0, %c0_i32_7 : i32
    %c0_8 = arith.constant 0 : index
    %11 = arith.index_cast %10 : i32 to index
    %c1 = arith.constant 1 : index
    %c0_9 = arith.constant 0 : index
    %12 = vector.load %arg2[%c0_8, %11, %c1, %c0_9] : memref<1x11x11x16xf32, #tpu.memory_space<vmem>>, vector<1x8x8x16xf32>
    %13 = vector.shape_cast %12 : vector<1x8x8x16xf32> to vector<8x8x16xf32>
    %14 = vector.shape_cast %13 : vector<8x8x16xf32> to vector<64x16xf32>
    %c1_10 = arith.constant 1 : index
    %c0_11 = arith.constant 0 : index
    %c0_12 = arith.constant 0 : index
    %15 = vector.load %arg3[%c1_10, %c0_11, %c0_12] : memref<16x16x128xf32, #tpu.memory_space<vmem>>, vector<1x16x128xf32>
    %16 = vector.shape_cast %15 : vector<1x16x128xf32> to vector<16x128xf32>
    %cst_13 = arith.constant dense<0.000000e+00> : vector<64x128xf32>
    %17 = tpu.matmul %14, %16, %cst_13 {dimension_numbers = #tpu.dot_dimension_numbers<[1], [0], [0], [1], [0, 0, 1, 1], [], []>} : vector<64x16xf32>, vector<16x128xf32>, vector<64x128xf32> -> vector<64x128xf32>
    %c0_14 = arith.constant 0 : index
    %c0_15 = arith.constant 0 : index
    %18 = vector.load %arg6[%c0_14, %c0_15] : memref<64x128xf32, #tpu.memory_space<vmem>>, vector<64x128xf32>
    %19 = arith.addf %18, %17 : vector<64x128xf32>
    %c0_16 = arith.constant 0 : index
    %c0_17 = arith.constant 0 : index
    %20 = vector.load %arg6[%c0_16, %c0_17] : memref<64x128xf32, #tpu.memory_space<vmem>>, vector<64x128xf32>
    tpu.vector_store %arg6[%c0_16, %c0_17], %19 {strides = array<i32>} : memref<64x128xf32, #tpu.memory_space<vmem>>, vector<64x128xf32>,
    %c0_i32_18 = arith.constant 0 : i32
    %21 = arith.addi %0, %c0_i32_18 : i32
    %c0_19 = arith.constant 0 : index
    %22 = arith.index_cast %21 : i32 to index
    %c2 = arith.constant 2 : index
    %c0_20 = arith.constant 0 : index
    %23 = vector.load %arg2[%c0_19, %22, %c2, %c0_20] : memref<1x11x11x16xf32, #tpu.memory_space<vmem>>, vector<1x8x8x16xf32>
    %24 = vector.shape_cast %23 : vector<1x8x8x16xf32> to vector<8x8x16xf32>
    %25 = vector.shape_cast %24 : vector<8x8x16xf32> to vector<64x16xf32>
    %c2_21 = arith.constant 2 : index
    %c0_22 = arith.constant 0 : index
    %c0_23 = arith.constant 0 : index
    %26 = vector.load %arg3[%c2_21, %c0_22, %c0_23] : memref<16x16x128xf32, #tpu.memory_space<vmem>>, vector<1x16x128xf32>
    %27 = vector.shape_cast %26 : vector<1x16x128xf32> to vector<16x128xf32>
    %cst_24 = arith.constant dense<0.000000e+00> : vector<64x128xf32>
    %28 = tpu.matmul %25, %27, %cst_24 {dimension_numbers = #tpu.dot_dimension_numbers<[1], [0], [0], [1], [0, 0, 1, 1], [], []>} : vector<64x16xf32>, vector<16x128xf32>, vector<64x128xf32> -> vector<64x128xf32>
    %c0_25 = arith.constant 0 : index
    %c0_26 = arith.constant 0 : index
    %29 = vector.load %arg6[%c0_25, %c0_26] : memref<64x128xf32, #tpu.memory_space<vmem>>, vector<64x128xf32>
    %30 = arith.addf %29, %28 : vector<64x128xf32>
    %c0_27 = arith.constant 0 : index
    %c0_28 = arith.constant 0 : index
    %31 = vector.load %arg6[%c0_27, %c0_28] : memref<64x128xf32, #tpu.memory_space<vmem>>, vector<64x128xf32>
    tpu.vector_store %arg6[%c0_27, %c0_28], %30 {strides = array<i32>} : memref<64x128xf32, #tpu.memory_space<vmem>>, vector<64x128xf32>,
    %c0_i32_29 = arith.constant 0 : i32
    %32 = arith.addi %0, %c0_i32_29 : i32
    %c0_30 = arith.constant 0 : index
    %33 = arith.index_cast %32 : i32 to index
    %c3 = arith.constant 3 : index
    %c0_31 = arith.constant 0 : index
    %34 = vector.load %arg2[%c0_30, %33, %c3, %c0_31] : memref<1x11x11x16xf32, #tpu.memory_space<vmem>>, vector<1x8x8x16xf32>
    %35 = vector.shape_cast %34 : vector<1x8x8x16xf32> to vector<8x8x16xf32>
    %36 = vector.shape_cast %35 : vector<8x8x16xf32> to vector<64x16xf32>
    %c3_32 = arith.constant 3 : index
    %c0_33 = arith.constant 0 : index
    %c0_34 = arith.constant 0 : index
    %37 = vector.load %arg3[%c3_32, %c0_33, %c0_34] : memref<16x16x128xf32, #tpu.memory_space<vmem>>, vector<1x16x128xf32>
    %38 = vector.shape_cast %37 : vector<1x16x128xf32> to vector<16x128xf32>
    %cst_35 = arith.constant dense<0.000000e+00> : vector<64x128xf32>
    %39 = tpu.matmul %36, %38, %cst_35 {dimension_numbers = #tpu.dot_dimension_numbers<[1], [0], [0], [1], [0, 0, 1, 1], [], []>} : vector<64x16xf32>, vector<16x128xf32>, vector<64x128xf32> -> vector<64x128xf32>
    %c0_36 = arith.constant 0 : index
    %c0_37 = arith.constant 0 : index
    %40 = vector.load %arg6[%c0_36, %c0_37] : memref<64x128xf32, #tpu.memory_space<vmem>>, vector<64x128xf32>
    %41 = arith.addf %40, %39 : vector<64x128xf32>
    %c0_38 = arith.constant 0 : index
    %c0_39 = arith.constant 0 : index
    %42 = vector.load %arg6[%c0_38, %c0_39] : memref<64x128xf32, #tpu.memory_space<vmem>>, vector<64x128xf32>
    tpu.vector_store %arg6[%c0_38, %c0_39], %41 {strides = array<i32>} : memref<64x128xf32, #tpu.memory_space<vmem>>, vector<64x128xf32>,
    %c1_i32 = arith.constant 1 : i32
    %43 = arith.addi %0, %c1_i32 : i32
    %c0_40 = arith.constant 0 : index
    %44 = arith.index_cast %43 : i32 to index
    %c0_41 = arith.constant 0 : index
    %c0_42 = arith.constant 0 : index
    %45 = vector.load %arg2[%c0_40, %44, %c0_41, %c0_42] : memref<1x11x11x16xf32, #tpu.memory_space<vmem>>, vector<1x8x8x16xf32>
    %46 = vector.shape_cast %45 : vector<1x8x8x16xf32> to vector<8x8x16xf32>
    %47 = vector.shape_cast %46 : vector<8x8x16xf32> to vector<64x16xf32>
    %c4 = arith.constant 4 : index
    %c0_43 = arith.constant 0 : index
    %c0_44 = arith.constant 0 : index
    %48 = vector.load %arg3[%c4, %c0_43, %c0_44] : memref<16x16x128xf32, #tpu.memory_space<vmem>>, vector<1x16x128xf32>
    %49 = vector.shape_cast %48 : vector<1x16x128xf32> to vector<16x128xf32>
    %cst_45 = arith.constant dense<0.000000e+00> : vector<64x128xf32>
    %50 = tpu.matmul %47, %49, %cst_45 {dimension_numbers = #tpu.dot_dimension_numbers<[1], [0], [0], [1], [0, 0, 1, 1], [], []>} : vector<64x16xf32>, vector<16x128xf32>, vector<64x128xf32> -> vector<64x128xf32>
    %c0_46 = arith.constant 0 : index
    %c0_47 = arith.constant 0 : index
    %51 = vector.load %arg6[%c0_46, %c0_47] : memref<64x128xf32, #tpu.memory_space<vmem>>, vector<64x128xf32>
    %52 = arith.addf %51, %50 : vector<64x128xf32>
    %c0_48 = arith.constant 0 : index
    %c0_49 = arith.constant 0 : index
    %53 = vector.load %arg6[%c0_48, %c0_49] : memref<64x128xf32, #tpu.memory_space<vmem>>, vector<64x128xf32>
    tpu.vector_store %arg6[%c0_48, %c0_49], %52 {strides = array<i32>} : memref<64x128xf32, #tpu.memory_space<vmem>>, vector<64x128xf32>,
    %c1_i32_50 = arith.constant 1 : i32
    %54 = arith.addi %0, %c1_i32_50 : i32
    %c0_51 = arith.constant 0 : index
    %55 = arith.index_cast %54 : i32 to index
    %c1_52 = arith.constant 1 : index
    %c0_53 = arith.constant 0 : index
    %56 = vector.load %arg2[%c0_51, %55, %c1_52, %c0_53] : memref<1x11x11x16xf32, #tpu.memory_space<vmem>>, vector<1x8x8x16xf32>
    %57 = vector.shape_cast %56 : vector<1x8x8x16xf32> to vector<8x8x16xf32>
    %58 = vector.shape_cast %57 : vector<8x8x16xf32> to vector<64x16xf32>
    %c5 = arith.constant 5 : index
    %c0_54 = arith.constant 0 : index
    %c0_55 = arith.constant 0 : index
    %59 = vector.load %arg3[%c5, %c0_54, %c0_55] : memref<16x16x128xf32, #tpu.memory_space<vmem>>, vector<1x16x128xf32>
    %60 = vector.shape_cast %59 : vector<1x16x128xf32> to vector<16x128xf32>
    %cst_56 = arith.constant dense<0.000000e+00> : vector<64x128xf32>
    %61 = tpu.matmul %58, %60, %cst_56 {dimension_numbers = #tpu.dot_dimension_numbers<[1], [0], [0], [1], [0, 0, 1, 1], [], []>} : vector<64x16xf32>, vector<16x128xf32>, vector<64x128xf32> -> vector<64x128xf32>
    %c0_57 = arith.constant 0 : index
    %c0_58 = arith.constant 0 : index
    %62 = vector.load %arg6[%c0_57, %c0_58] : memref<64x128xf32, #tpu.memory_space<vmem>>, vector<64x128xf32>
    %63 = arith.addf %62, %61 : vector<64x128xf32>
    %c0_59 = arith.constant 0 : index
    %c0_60 = arith.constant 0 : index
    %64 = vector.load %arg6[%c0_59, %c0_60] : memref<64x128xf32, #tpu.memory_space<vmem>>, vector<64x128xf32>
    tpu.vector_store %arg6[%c0_59, %c0_60], %63 {strides = array<i32>} : memref<64x128xf32, #tpu.memory_space<vmem>>, vector<64x128xf32>,
    %c1_i32_61 = arith.constant 1 : i32
    %65 = arith.addi %0, %c1_i32_61 : i32
    %c0_62 = arith.constant 0 : index
    %66 = arith.index_cast %65 : i32 to index
    %c2_63 = arith.constant 2 : index
    %c0_64 = arith.constant 0 : index
    %67 = vector.load %arg2[%c0_62, %66, %c2_63, %c0_64] : memref<1x11x11x16xf32, #tpu.memory_space<vmem>>, vector<1x8x8x16xf32>
    %68 = vector.shape_cast %67 : vector<1x8x8x16xf32> to vector<8x8x16xf32>
    %69 = vector.shape_cast %68 : vector<8x8x16xf32> to vector<64x16xf32>
    %c6 = arith.constant 6 : index
    %c0_65 = arith.constant 0 : index
    %c0_66 = arith.constant 0 : index
    %70 = vector.load %arg3[%c6, %c0_65, %c0_66] : memref<16x16x128xf32, #tpu.memory_space<vmem>>, vector<1x16x128xf32>
    %71 = vector.shape_cast %70 : vector<1x16x128xf32> to vector<16x128xf32>
    %cst_67 = arith.constant dense<0.000000e+00> : vector<64x128xf32>
    %72 = tpu.matmul %69, %71, %cst_67 {dimension_numbers = #tpu.dot_dimension_numbers<[1], [0], [0], [1], [0, 0, 1, 1], [], []>} : vector<64x16xf32>, vector<16x128xf32>, vector<64x128xf32> -> vector<64x128xf32>
    %c0_68 = arith.constant 0 : index
    %c0_69 = arith.constant 0 : index
    %73 = vector.load %arg6[%c0_68, %c0_69] : memref<64x128xf32, #tpu.memory_space<vmem>>, vector<64x128xf32>
    %74 = arith.addf %73, %72 : vector<64x128xf32>
    %c0_70 = arith.constant 0 : index
    %c0_71 = arith.constant 0 : index
    %75 = vector.load %arg6[%c0_70, %c0_71] : memref<64x128xf32, #tpu.memory_space<vmem>>, vector<64x128xf32>
    tpu.vector_store %arg6[%c0_70, %c0_71], %74 {strides = array<i32>} : memref<64x128xf32, #tpu.memory_space<vmem>>, vector<64x128xf32>,
    %c1_i32_72 = arith.constant 1 : i32
    %76 = arith.addi %0, %c1_i32_72 : i32
    %c0_73 = arith.constant 0 : index
    %77 = arith.index_cast %76 : i32 to index
    %c3_74 = arith.constant 3 : index
    %c0_75 = arith.constant 0 : index
    %78 = vector.load %arg2[%c0_73, %77, %c3_74, %c0_75] : memref<1x11x11x16xf32, #tpu.memory_space<vmem>>, vector<1x8x8x16xf32>
    %79 = vector.shape_cast %78 : vector<1x8x8x16xf32> to vector<8x8x16xf32>
    %80 = vector.shape_cast %79 : vector<8x8x16xf32> to vector<64x16xf32>
    %c7 = arith.constant 7 : index
    %c0_76 = arith.constant 0 : index
    %c0_77 = arith.constant 0 : index
    %81 = vector.load %arg3[%c7, %c0_76, %c0_77] : memref<16x16x128xf32, #tpu.memory_space<vmem>>, vector<1x16x128xf32>
    %82 = vector.shape_cast %81 : vector<1x16x128xf32> to vector<16x128xf32>
    %cst_78 = arith.constant dense<0.000000e+00> : vector<64x128xf32>
    %83 = tpu.matmul %80, %82, %cst_78 {dimension_numbers = #tpu.dot_dimension_numbers<[1], [0], [0], [1], [0, 0, 1, 1], [], []>} : vector<64x16xf32>, vector<16x128xf32>, vector<64x128xf32> -> vector<64x128xf32>
    %c0_79 = arith.constant 0 : index
    %c0_80 = arith.constant 0 : index
    %84 = vector.load %arg6[%c0_79, %c0_80] : memref<64x128xf32, #tpu.memory_space<vmem>>, vector<64x128xf32>
    %85 = arith.addf %84, %83 : vector<64x128xf32>
    %c0_81 = arith.constant 0 : index
    %c0_82 = arith.constant 0 : index
    %86 = vector.load %arg6[%c0_81, %c0_82] : memref<64x128xf32, #tpu.memory_space<vmem>>, vector<64x128xf32>
    tpu.vector_store %arg6[%c0_81, %c0_82], %85 {strides = array<i32>} : memref<64x128xf32, #tpu.memory_space<vmem>>, vector<64x128xf32>,
    %c2_i32 = arith.constant 2 : i32
    %87 = arith.addi %0, %c2_i32 : i32
    %c0_83 = arith.constant 0 : index
    %88 = arith.index_cast %87 : i32 to index
    %c0_84 = arith.constant 0 : index
    %c0_85 = arith.constant 0 : index
    %89 = vector.load %arg2[%c0_83, %88, %c0_84, %c0_85] : memref<1x11x11x16xf32, #tpu.memory_space<vmem>>, vector<1x8x8x16xf32>
    %90 = vector.shape_cast %89 : vector<1x8x8x16xf32> to vector<8x8x16xf32>
    %91 = vector.shape_cast %90 : vector<8x8x16xf32> to vector<64x16xf32>
    %c8 = arith.constant 8 : index
    %c0_86 = arith.constant 0 : index
    %c0_87 = arith.constant 0 : index
    %92 = vector.load %arg3[%c8, %c0_86, %c0_87] : memref<16x16x128xf32, #tpu.memory_space<vmem>>, vector<1x16x128xf32>
    %93 = vector.shape_cast %92 : vector<1x16x128xf32> to vector<16x128xf32>
    %cst_88 = arith.constant dense<0.000000e+00> : vector<64x128xf32>
    %94 = tpu.matmul %91, %93, %cst_88 {dimension_numbers = #tpu.dot_dimension_numbers<[1], [0], [0], [1], [0, 0, 1, 1], [], []>} : vector<64x16xf32>, vector<16x128xf32>, vector<64x128xf32> -> vector<64x128xf32>
    %c0_89 = arith.constant 0 : index
    %c0_90 = arith.constant 0 : index
    %95 = vector.load %arg6[%c0_89, %c0_90] : memref<64x128xf32, #tpu.memory_space<vmem>>, vector<64x128xf32>
    %96 = arith.addf %95, %94 : vector<64x128xf32>
    %c0_91 = arith.constant 0 : index
    %c0_92 = arith.constant 0 : index
    %97 = vector.load %arg6[%c0_91, %c0_92] : memref<64x128xf32, #tpu.memory_space<vmem>>, vector<64x128xf32>
    tpu.vector_store %arg6[%c0_91, %c0_92], %96 {strides = array<i32>} : memref<64x128xf32, #tpu.memory_space<vmem>>, vector<64x128xf32>,
    %c2_i32_93 = arith.constant 2 : i32
    %98 = arith.addi %0, %c2_i32_93 : i32
    %c0_94 = arith.constant 0 : index
    %99 = arith.index_cast %98 : i32 to index
    %c1_95 = arith.constant 1 : index
    %c0_96 = arith.constant 0 : index
    %100 = vector.load %arg2[%c0_94, %99, %c1_95, %c0_96] : memref<1x11x11x16xf32, #tpu.memory_space<vmem>>, vector<1x8x8x16xf32>
    %101 = vector.shape_cast %100 : vector<1x8x8x16xf32> to vector<8x8x16xf32>
    %102 = vector.shape_cast %101 : vector<8x8x16xf32> to vector<64x16xf32>
    %c9 = arith.constant 9 : index
    %c0_97 = arith.constant 0 : index
    %c0_98 = arith.constant 0 : index
    %103 = vector.load %arg3[%c9, %c0_97, %c0_98] : memref<16x16x128xf32, #tpu.memory_space<vmem>>, vector<1x16x128xf32>
    %104 = vector.shape_cast %103 : vector<1x16x128xf32> to vector<16x128xf32>
    %cst_99 = arith.constant dense<0.000000e+00> : vector<64x128xf32>
    %105 = tpu.matmul %102, %104, %cst_99 {dimension_numbers = #tpu.dot_dimension_numbers<[1], [0], [0], [1], [0, 0, 1, 1], [], []>} : vector<64x16xf32>, vector<16x128xf32>, vector<64x128xf32> -> vector<64x128xf32>
    %c0_100 = arith.constant 0 : index
    %c0_101 = arith.constant 0 : index
    %106 = vector.load %arg6[%c0_100, %c0_101] : memref<64x128xf32, #tpu.memory_space<vmem>>, vector<64x128xf32>
    %107 = arith.addf %106, %105 : vector<64x128xf32>
    %c0_102 = arith.constant 0 : index
    %c0_103 = arith.constant 0 : index
    %108 = vector.load %arg6[%c0_102, %c0_103] : memref<64x128xf32, #tpu.memory_space<vmem>>, vector<64x128xf32>
    tpu.vector_store %arg6[%c0_102, %c0_103], %107 {strides = array<i32>} : memref<64x128xf32, #tpu.memory_space<vmem>>, vector<64x128xf32>,
    %c2_i32_104 = arith.constant 2 : i32
    %109 = arith.addi %0, %c2_i32_104 : i32
    %c0_105 = arith.constant 0 : index
    %110 = arith.index_cast %109 : i32 to index
    %c2_106 = arith.constant 2 : index
    %c0_107 = arith.constant 0 : index
    %111 = vector.load %arg2[%c0_105, %110, %c2_106, %c0_107] : memref<1x11x11x16xf32, #tpu.memory_space<vmem>>, vector<1x8x8x16xf32>
    %112 = vector.shape_cast %111 : vector<1x8x8x16xf32> to vector<8x8x16xf32>
    %113 = vector.shape_cast %112 : vector<8x8x16xf32> to vector<64x16xf32>
    %c10 = arith.constant 10 : index
    %c0_108 = arith.constant 0 : index
    %c0_109 = arith.constant 0 : index
    %114 = vector.load %arg3[%c10, %c0_108, %c0_109] : memref<16x16x128xf32, #tpu.memory_space<vmem>>, vector<1x16x128xf32>
    %115 = vector.shape_cast %114 : vector<1x16x128xf32> to vector<16x128xf32>
    %cst_110 = arith.constant dense<0.000000e+00> : vector<64x128xf32>
    %116 = tpu.matmul %113, %115, %cst_110 {dimension_numbers = #tpu.dot_dimension_numbers<[1], [0], [0], [1], [0, 0, 1, 1], [], []>} : vector<64x16xf32>, vector<16x128xf32>, vector<64x128xf32> -> vector<64x128xf32>
    %c0_111 = arith.constant 0 : index
    %c0_112 = arith.constant 0 : index
    %117 = vector.load %arg6[%c0_111, %c0_112] : memref<64x128xf32, #tpu.memory_space<vmem>>, vector<64x128xf32>
    %118 = arith.addf %117, %116 : vector<64x128xf32>
    %c0_113 = arith.constant 0 : index
    %c0_114 = arith.constant 0 : index
    %119 = vector.load %arg6[%c0_113, %c0_114] : memref<64x128xf32, #tpu.memory_space<vmem>>, vector<64x128xf32>
    tpu.vector_store %arg6[%c0_113, %c0_114], %118 {strides = array<i32>} : memref<64x128xf32, #tpu.memory_space<vmem>>, vector<64x128xf32>,
    %c2_i32_115 = arith.constant 2 : i32
    %120 = arith.addi %0, %c2_i32_115 : i32
    %c0_116 = arith.constant 0 : index
    %121 = arith.index_cast %120 : i32 to index
    %c3_117 = arith.constant 3 : index
    %c0_118 = arith.constant 0 : index
    %122 = vector.load %arg2[%c0_116, %121, %c3_117, %c0_118] : memref<1x11x11x16xf32, #tpu.memory_space<vmem>>, vector<1x8x8x16xf32>
    %123 = vector.shape_cast %122 : vector<1x8x8x16xf32> to vector<8x8x16xf32>
    %124 = vector.shape_cast %123 : vector<8x8x16xf32> to vector<64x16xf32>
    %c11 = arith.constant 11 : index
    %c0_119 = arith.constant 0 : index
    %c0_120 = arith.constant 0 : index
    %125 = vector.load %arg3[%c11, %c0_119, %c0_120] : memref<16x16x128xf32, #tpu.memory_space<vmem>>, vector<1x16x128xf32>
    %126 = vector.shape_cast %125 : vector<1x16x128xf32> to vector<16x128xf32>
    %cst_121 = arith.constant dense<0.000000e+00> : vector<64x128xf32>
    %127 = tpu.matmul %124, %126, %cst_121 {dimension_numbers = #tpu.dot_dimension_numbers<[1], [0], [0], [1], [0, 0, 1, 1], [], []>} : vector<64x16xf32>, vector<16x128xf32>, vector<64x128xf32> -> vector<64x128xf32>
    %c0_122 = arith.constant 0 : index
    %c0_123 = arith.constant 0 : index
    %128 = vector.load %arg6[%c0_122, %c0_123] : memref<64x128xf32, #tpu.memory_space<vmem>>, vector<64x128xf32>
    %129 = arith.addf %128, %127 : vector<64x128xf32>
    %c0_124 = arith.constant 0 : index
    %c0_125 = arith.constant 0 : index
    %130 = vector.load %arg6[%c0_124, %c0_125] : memref<64x128xf32, #tpu.memory_space<vmem>>, vector<64x128xf32>
    tpu.vector_store %arg6[%c0_124, %c0_125], %129 {strides = array<i32>} : memref<64x128xf32, #tpu.memory_space<vmem>>, vector<64x128xf32>,
    %c3_i32 = arith.constant 3 : i32
    %131 = arith.addi %0, %c3_i32 : i32
    %c0_126 = arith.constant 0 : index
    %132 = arith.index_cast %131 : i32 to index
    %c0_127 = arith.constant 0 : index
    %c0_128 = arith.constant 0 : index
    %133 = vector.load %arg2[%c0_126, %132, %c0_127, %c0_128] : memref<1x11x11x16xf32, #tpu.memory_space<vmem>>, vector<1x8x8x16xf32>
    %134 = vector.shape_cast %133 : vector<1x8x8x16xf32> to vector<8x8x16xf32>
    %135 = vector.shape_cast %134 : vector<8x8x16xf32> to vector<64x16xf32>
    %c12 = arith.constant 12 : index
    %c0_129 = arith.constant 0 : index
    %c0_130 = arith.constant 0 : index
    %136 = vector.load %arg3[%c12, %c0_129, %c0_130] : memref<16x16x128xf32, #tpu.memory_space<vmem>>, vector<1x16x128xf32>
    %137 = vector.shape_cast %136 : vector<1x16x128xf32> to vector<16x128xf32>
    %cst_131 = arith.constant dense<0.000000e+00> : vector<64x128xf32>
    %138 = tpu.matmul %135, %137, %cst_131 {dimension_numbers = #tpu.dot_dimension_numbers<[1], [0], [0], [1], [0, 0, 1, 1], [], []>} : vector<64x16xf32>, vector<16x128xf32>, vector<64x128xf32> -> vector<64x128xf32>
    %c0_132 = arith.constant 0 : index
    %c0_133 = arith.constant 0 : index
    %139 = vector.load %arg6[%c0_132, %c0_133] : memref<64x128xf32, #tpu.memory_space<vmem>>, vector<64x128xf32>
    %140 = arith.addf %139, %138 : vector<64x128xf32>
    %c0_134 = arith.constant 0 : index
    %c0_135 = arith.constant 0 : index
    %141 = vector.load %arg6[%c0_134, %c0_135] : memref<64x128xf32, #tpu.memory_space<vmem>>, vector<64x128xf32>
    tpu.vector_store %arg6[%c0_134, %c0_135], %140 {strides = array<i32>} : memref<64x128xf32, #tpu.memory_space<vmem>>, vector<64x128xf32>,
    %c3_i32_136 = arith.constant 3 : i32
    %142 = arith.addi %0, %c3_i32_136 : i32
    %c0_137 = arith.constant 0 : index
    %143 = arith.index_cast %142 : i32 to index
    %c1_138 = arith.constant 1 : index
    %c0_139 = arith.constant 0 : index
    %144 = vector.load %arg2[%c0_137, %143, %c1_138, %c0_139] : memref<1x11x11x16xf32, #tpu.memory_space<vmem>>, vector<1x8x8x16xf32>
    %145 = vector.shape_cast %144 : vector<1x8x8x16xf32> to vector<8x8x16xf32>
    %146 = vector.shape_cast %145 : vector<8x8x16xf32> to vector<64x16xf32>
    %c13 = arith.constant 13 : index
    %c0_140 = arith.constant 0 : index
    %c0_141 = arith.constant 0 : index
    %147 = vector.load %arg3[%c13, %c0_140, %c0_141] : memref<16x16x128xf32, #tpu.memory_space<vmem>>, vector<1x16x128xf32>
    %148 = vector.shape_cast %147 : vector<1x16x128xf32> to vector<16x128xf32>
    %cst_142 = arith.constant dense<0.000000e+00> : vector<64x128xf32>
    %149 = tpu.matmul %146, %148, %cst_142 {dimension_numbers = #tpu.dot_dimension_numbers<[1], [0], [0], [1], [0, 0, 1, 1], [], []>} : vector<64x16xf32>, vector<16x128xf32>, vector<64x128xf32> -> vector<64x128xf32>
    %c0_143 = arith.constant 0 : index
    %c0_144 = arith.constant 0 : index
    %150 = vector.load %arg6[%c0_143, %c0_144] : memref<64x128xf32, #tpu.memory_space<vmem>>, vector<64x128xf32>
    %151 = arith.addf %150, %149 : vector<64x128xf32>
    %c0_145 = arith.constant 0 : index
    %c0_146 = arith.constant 0 : index
    %152 = vector.load %arg6[%c0_145, %c0_146] : memref<64x128xf32, #tpu.memory_space<vmem>>, vector<64x128xf32>
    tpu.vector_store %arg6[%c0_145, %c0_146], %151 {strides = array<i32>} : memref<64x128xf32, #tpu.memory_space<vmem>>, vector<64x128xf32>,
    %c3_i32_147 = arith.constant 3 : i32
    %153 = arith.addi %0, %c3_i32_147 : i32
    %c0_148 = arith.constant 0 : index
    %154 = arith.index_cast %153 : i32 to index
    %c2_149 = arith.constant 2 : index
    %c0_150 = arith.constant 0 : index
    %155 = vector.load %arg2[%c0_148, %154, %c2_149, %c0_150] : memref<1x11x11x16xf32, #tpu.memory_space<vmem>>, vector<1x8x8x16xf32>
    %156 = vector.shape_cast %155 : vector<1x8x8x16xf32> to vector<8x8x16xf32>
    %157 = vector.shape_cast %156 : vector<8x8x16xf32> to vector<64x16xf32>
    %c14 = arith.constant 14 : index
    %c0_151 = arith.constant 0 : index
    %c0_152 = arith.constant 0 : index
    %158 = vector.load %arg3[%c14, %c0_151, %c0_152] : memref<16x16x128xf32, #tpu.memory_space<vmem>>, vector<1x16x128xf32>
    %159 = vector.shape_cast %158 : vector<1x16x128xf32> to vector<16x128xf32>
    %cst_153 = arith.constant dense<0.000000e+00> : vector<64x128xf32>
    %160 = tpu.matmul %157, %159, %cst_153 {dimension_numbers = #tpu.dot_dimension_numbers<[1], [0], [0], [1], [0, 0, 1, 1], [], []>} : vector<64x16xf32>, vector<16x128xf32>, vector<64x128xf32> -> vector<64x128xf32>
    %c0_154 = arith.constant 0 : index
    %c0_155 = arith.constant 0 : index
    %161 = vector.load %arg6[%c0_154, %c0_155] : memref<64x128xf32, #tpu.memory_space<vmem>>, vector<64x128xf32>
    %162 = arith.addf %161, %160 : vector<64x128xf32>
    %c0_156 = arith.constant 0 : index
    %c0_157 = arith.constant 0 : index
    %163 = vector.load %arg6[%c0_156, %c0_157] : memref<64x128xf32, #tpu.memory_space<vmem>>, vector<64x128xf32>
    tpu.vector_store %arg6[%c0_156, %c0_157], %162 {strides = array<i32>} : memref<64x128xf32, #tpu.memory_space<vmem>>, vector<64x128xf32>,
    %c3_i32_158 = arith.constant 3 : i32
    %164 = arith.addi %0, %c3_i32_158 : i32
    %c0_159 = arith.constant 0 : index
    %165 = arith.index_cast %164 : i32 to index
    %c3_160 = arith.constant 3 : index
    %c0_161 = arith.constant 0 : index
    %166 = vector.load %arg2[%c0_159, %165, %c3_160, %c0_161] : memref<1x11x11x16xf32, #tpu.memory_space<vmem>>, vector<1x8x8x16xf32>
    %167 = vector.shape_cast %166 : vector<1x8x8x16xf32> to vector<8x8x16xf32>
    %168 = vector.shape_cast %167 : vector<8x8x16xf32> to vector<64x16xf32>
    %c15 = arith.constant 15 : index
    %c0_162 = arith.constant 0 : index
    %c0_163 = arith.constant 0 : index
    %169 = vector.load %arg3[%c15, %c0_162, %c0_163] : memref<16x16x128xf32, #tpu.memory_space<vmem>>, vector<1x16x128xf32>
    %170 = vector.shape_cast %169 : vector<1x16x128xf32> to vector<16x128xf32>
    %cst_164 = arith.constant dense<0.000000e+00> : vector<64x128xf32>
    %171 = tpu.matmul %168, %170, %cst_164 {dimension_numbers = #tpu.dot_dimension_numbers<[1], [0], [0], [1], [0, 0, 1, 1], [], []>} : vector<64x16xf32>, vector<16x128xf32>, vector<64x128xf32> -> vector<64x128xf32>
    %c0_165 = arith.constant 0 : index
    %c0_166 = arith.constant 0 : index
    %172 = vector.load %arg6[%c0_165, %c0_166] : memref<64x128xf32, #tpu.memory_space<vmem>>, vector<64x128xf32>
    %173 = arith.addf %172, %171 : vector<64x128xf32>
    %c0_167 = arith.constant 0 : index
    %c0_168 = arith.constant 0 : index
    %174 = vector.load %arg6[%c0_167, %c0_168] : memref<64x128xf32, #tpu.memory_space<vmem>>, vector<64x128xf32>
    tpu.vector_store %arg6[%c0_167, %c0_168], %173 {strides = array<i32>} : memref<64x128xf32, #tpu.memory_space<vmem>>, vector<64x128xf32>,
    %c0_169 = arith.constant 0 : index
    %c0_170 = arith.constant 0 : index
    %175 = vector.load %arg6[%c0_169, %c0_170] : memref<64x128xf32, #tpu.memory_space<vmem>>, vector<64x128xf32>
    %176 = vector.shape_cast %175 : vector<64x128xf32> to vector<8x8x128xf32>
    %c0_171 = arith.constant 0 : index
    %c0_172 = arith.constant 0 : index
    %c0_173 = arith.constant 0 : index
    %c0_174 = arith.constant 0 : index
    %177 = vector.load %arg4[%c0_171, %c0_172, %c0_173, %c0_174] : memref<1x8x8x128xf32, #tpu.memory_space<vmem>>, vector<1x8x8x128xf32>
    %178 = vector.shape_cast %177 : vector<1x8x8x128xf32> to vector<8x8x128xf32>
    %179 = vector.shape_cast %176 : vector<8x8x128xf32> to vector<1x8x8x128xf32>
    tpu.vector_store %arg4[%c0_171, %c0_172, %c0_173, %c0_174], %179 {strides = array<i32>} : memref<1x8x8x128xf32, #tpu.memory_space<vmem>>, vector<1x8x8x128xf32>,
    %cst_175 = arith.constant dense<0.000000e+00> : vector<128xf32>
    %180 = vector.multi_reduction <add>, %175, %cst_175 [0] : vector<64x128xf32> to vector<128xf32>
    %181 = vector.shape_cast %180 : vector<128xf32> to vector<1x128xf32>
    %182 = arith.mulf %175, %175 : vector<64x128xf32>
    %cst_176 = arith.constant dense<0.000000e+00> : vector<128xf32>
    %183 = vector.multi_reduction <add>, %182, %cst_176 [0] : vector<64x128xf32> to vector<128xf32>
    %184 = vector.shape_cast %183 : vector<128xf32> to vector<1x128xf32>
    %185 = tpu.concatenate %181, %184 in 0 : vector<1x128xf32>, vector<1x128xf32> -> vector<2x128xf32>
    %c0_177 = arith.constant 0 : index
    %c0_178 = arith.constant 0 : index
    %c0_179 = arith.constant 0 : index
    %c0_180 = arith.constant 0 : index
    %186 = vector.load %arg5[%c0_177, %c0_178, %c0_179, %c0_180] : memref<1x1x2x128xf32, #tpu.memory_space<vmem>>, vector<1x1x2x128xf32>
    %187 = vector.shape_cast %186 : vector<1x1x2x128xf32> to vector<2x128xf32>
    %188 = vector.shape_cast %185 : vector<2x128xf32> to vector<1x1x2x128xf32>
    tpu.vector_store %arg5[%c0_177, %c0_178, %c0_179, %c0_180], %188 {strides = array<i32>} : memref<1x1x2x128xf32, #tpu.memory_space<vmem>>, vector<1x1x2x128xf32>,
    return
  }
  func.func @transform_0(%arg0: i32, %arg1: i32) -> (i32, i32, i32, i32) {
    %c0_i32 = arith.constant 0 : i32
    %c0_i32_0 = arith.constant 0 : i32
    %c0_i32_1 = arith.constant 0 : i32
    %c0_i32_2 = arith.constant 0 : i32
    return %arg0, %c0_i32, %c0_i32_0, %c0_i32_1 : i32, i32, i32, i32
  }
  func.func @transform_1(%arg0: i32, %arg1: i32) -> (i32, i32, i32) {
    %c0_i32 = arith.constant 0 : i32
    %c0_i32_0 = arith.constant 0 : i32
    %c0_i32_1 = arith.constant 0 : i32
    %c0_i32_2 = arith.constant 0 : i32
    return %c0_i32, %c0_i32_0, %c0_i32_1 : i32, i32, i32
  }
  func.func @transform_2(%arg0: i32, %arg1: i32) -> (i32, i32, i32, i32) {
    %c0_i32 = arith.constant 0 : i32
    %c0_i32_0 = arith.constant 0 : i32
    %c0_i32_1 = arith.constant 0 : i32
    return %arg0, %arg1, %c0_i32, %c0_i32_0 : i32, i32, i32, i32
  }
  func.func @transform_3(%arg0: i32, %arg1: i32) -> (i32, i32, i32, i32) {
    %c0_i32 = arith.constant 0 : i32
    %c0_i32_0 = arith.constant 0 : i32
    %c0_i32_1 = arith.constant 0 : i32
    return %arg0, %arg1, %c0_i32, %c0_i32_0 : i32, i32, i32, i32
  }
}

</mosaic_0001>

<llo_original>
// kernel: tpu_custom_call.1
$region0: #{tpu_custom_call.1}
  #allocation0 [shape = 'u32[]', space=smem, size = 0x4, offset = 0x4, fixed_abs, tag = 'smem constant byte address 0x4 - core index']
  #allocation1 [shape = 'u32[144,128]{1,0:T(1,128)}', space=vmem, size = 0x12000, scoped, tag = 'internal scratch']
  #allocation2 [shape = 'f32[64,128]{1,0:T(8,128)}', space=vmem, size = 0x8000, scoped, tag = 'scratch operand']
  %s0 = inlined_call_operand.vmem [shape: f32[2,11,11,16], index: 0, kind: input, shape index: {}]
  %s1 = inlined_call_operand.vmem [shape: f32[16,16,128], index: 1, kind: input, shape index: {}]
  %s2 = inlined_call_operand.hbm [shape: f32[2,8,8,128], index: 2, kind: output, shape index: {0}]
  %s3 = inlined_call_operand.hbm [shape: f32[2,1,2,128], index: 3, kind: output, shape index: {1}]
  %4 = xla_tuple %s2, %s3
  %s5 = sld [smem:[#allocation0]]
  $region49: #{tpu_custom_call.1} parent=0
    _
  %s7 = ssub.s32 1, %s5
  %s8 = scalar_select 0, %s7, %s5
  $region1: #{tpu_custom_call.1} parent=0
    #allocation3 [shape = 'u8[65536]{0}', space=vmem, size = 0x10000, scoped, tag = 'output window, operand 0']
    #allocation4 [shape = 's32[2]{0}', space=sflag, size = 0x8, scoped, tag = 'scoped memory for tpu_custom_call.1']
    #allocation5 [shape = 'u8[2048]{0}', space=vmem, size = 0x800, scoped, tag = 'output window, operand 1']
    #allocation6 [shape = 's32[2]{0}', space=sflag, size = 0x8, scoped, tag = 'scoped memory for tpu_custom_call.1']
    %9 = vsyncpa [#allocation4], 0
    %s10 = scalar_lea.sflag [#allocation4], 1
    %11 = vsyncpa %s10, 0
    %12 = vsyncpa [#allocation6], 0
    %s13 = scalar_lea.sflag [#allocation6], 1
    %14 = vsyncpa %s13, 0
    loop: start=0, step=1, limit=4
    $region2: #{tpu_custom_call.1} parent=1 // loop_pre_header
      _
    $region3: #{tpu_custom_call.1} parent=1 // loop_header
      %s16 = sphi 0, %s20
      %p17 = scmp.ge.s32.totalorder %s16, 4
      %s23 = sphi 0, %s35
      %s24 = sphi 0, %s31
      %s25 = sphi 0, %s23
      %s26 = sphi 0, %s24
      %s27 = sphi 0, %s25
      %s28 = sphi 0, %s26
      %s38 = sphi 0, %s40
      %s41 = sphi 0, %s38
      %s42 = sphi 0, %s41
      %s58 = sphi 0, %s42
      %s62 = sphi 0, %s62
      %s64 = sphi 0, %s62
      %s65 = sphi 0, %s64
      %s79 = sphi 0, %s65
      %s87 = sphi 0, %s89
      %s90 = sphi 0, %s87
      %s91 = sphi 0, %s90
      %s107 = sphi 0, %s91
      %s115 = sphi 0, %s117
      %s118 = sphi 0, %s115
      %s119 = sphi 0, %s118
      %s135 = sphi 0, %s119
    $region4: #{tpu_custom_call.1} parent=1 // loop_header_branch
      %19 = sbr.rel (%p17) target = $region8
    $region5: #{tpu_custom_call.1} parent=1 // loop_body
      %s21 = ssub.s32 %s16, 1
      %s22 = ssub.s32 %s16, 2
      %s29 = sadd.s32 1, %s24
      %p30 = scmp.ge.s32.totalorder %s29, 1
      %s31 = scalar_select %p30, 0, %s29
      %s32 = sadd.s32 1, %s23
      %s33 = scalar_select %p30, %s32, %s23
      %p34 = scmp.ge.s32.totalorder %s33, 2
      %s35 = scalar_select %p34, 0, %s33
      %s36 = ssub.s32 %s23, %s35
      %p37 = scmp.eq.s32.totalorder %s36, 0
      %s39 = sadd.s32 %s38, 1
      %s40 = scalar_select %p37, %s38, %s39
      %p43 = pneg %p37
      %p44 = scmp.eq.s32.totalorder %s16, 1
      %p45 = por %p43, %p44
      %p46 = scmp.ne.s32.totalorder %s38, %s41
      %p47 = scmp.eq.s32.totalorder %s16, 0
      %p48 = por %p46, %p47
      %p49 = scmp.ne.s32.totalorder %s38, %s41
      %p50 = scmp.eq.s32.totalorder %s21, 1
      %p51 = por %p49, %p50
      %p52 = scmp.ne.s32.totalorder %s41, %s42
      %p53 = scmp.eq.s32.totalorder %s21, 0
      %p54 = por %p52, %p53
      %p55 = scmp.ne.s32.totalorder %s41, %s42
      %p56 = scmp.eq.s32.totalorder %s22, 1
      %p57 = por %p55, %p56
      %p59 = scmp.ne.s32.totalorder %s42, %s58
      %p60 = scmp.eq.s32.totalorder %s22, 0
      %p61 = por %p59, %p60
      %s63 = sadd.s32 %s62, 1
      %p66 = scmp.eq.s32.totalorder %s16, 1
      %p67 = scmp.ne.s32.totalorder %s62, %s64
      %p68 = scmp.eq.s32.totalorder %s16, 0
      %p69 = por %p67, %p68
      %p70 = scmp.ne.s32.totalorder %s62, %s64
      %p71 = scmp.eq.s32.totalorder %s21, 1
      %p72 = por %p70, %p71
      %p73 = scmp.ne.s32.totalorder %s64, %s65
      %p74 = scmp.eq.s32.totalorder %s21, 0
      %p75 = por %p73, %p74
      %p76 = scmp.ne.s32.totalorder %s64, %s65
      %p77 = scmp.eq.s32.totalorder %s22, 1
      %p78 = por %p76, %p77
      %p80 = scmp.ne.s32.totalorder %s65, %s79
      %p81 = scmp.eq.s32.totalorder %s22, 0
      %p82 = por %p80, %p81
      %s83 = ssub.s32 %s23, %s35
      %s84 = ssub.s32 %s24, %s31
      %s85 = sor.u32 %s83, %s84
      %p86 = scmp.eq.s32.totalorder %s85, 0
      %s88 = sadd.s32 %s87, 1
      %s89 = scalar_select %p86, %s87, %s88
      %p92 = pneg %p86
      %p93 = scmp.eq.s32.totalorder %s16, 1
      %p94 = por %p92, %p93
      %p95 = scmp.ne.s32.totalorder %s87, %s90
      %p96 = scmp.eq.s32.totalorder %s16, 0
      %p97 = por %p95, %p96
      %p98 = scmp.ne.s32.totalorder %s87, %s90
      %p99 = scmp.eq.s32.totalorder %s21, 1
      %p100 = por %p98, %p99
      %p101 = scmp.ne.s32.totalorder %s90, %s91
      %p102 = scmp.eq.s32.totalorder %s21, 0
      %p103 = por %p101, %p102
      %p104 = scmp.ne.s32.totalorder %s90, %s91
      %p105 = scmp.eq.s32.totalorder %s22, 1
      %p106 = por %p104, %p105
      %p108 = scmp.ne.s32.totalorder %s91, %s107
      %p109 = scmp.eq.s32.totalorder %s22, 0
      %p110 = por %p108, %p109
      %s111 = ssub.s32 %s23, %s35
      %s112 = ssub.s32 %s24, %s31
      %s113 = sor.u32 %s111, %s112
      %p114 = scmp.eq.s32.totalorder %s113, 0
      %s116 = sadd.s32 %s115, 1
      %s117 = scalar_select %p114, %s115, %s116
      %p120 = pneg %p114
      %p121 = scmp.eq.s32.totalorder %s16, 1
      %p122 = por %p120, %p121
      %p123 = scmp.ne.s32.totalorder %s115, %s118
      %p124 = scmp.eq.s32.totalorder %s16, 0
      %p125 = por %p123, %p124
      %p126 = scmp.ne.s32.totalorder %s115, %s118
      %p127 = scmp.eq.s32.totalorder %s21, 1
      %p128 = por %p126, %p127
      %p129 = scmp.ne.s32.totalorder %s118, %s119
      %p130 = scmp.eq.s32.totalorder %s21, 0
      %p131 = por %p129, %p130
      %p132 = scmp.ne.s32.totalorder %s118, %s119
      %p133 = scmp.eq.s32.totalorder %s22, 1
      %p134 = por %p132, %p133
      %p136 = scmp.ne.s32.totalorder %s119, %s135
      %p137 = scmp.eq.s32.totalorder %s22, 0
      %p138 = por %p136, %p137
      %p139 = scmp.le.s32.totalorder 1, %s16
      %p140 = scmp.lt.s32.totalorder %s16, 3
      %p141 = pnand %p139, %p140
      %p142 = pneg %p141
      // Predicated region
      $region9: #{tpu_custom_call.1} parent=5 // pred_check
        _
      $region10: #{tpu_custom_call.1} parent=5 // pred_check_branch
        %144 = sbr.rel (%p141) target = $region12
      $region11: #{tpu_custom_call.1} parent=5 // pred_region
        %s145 = ssub.s32 %s16, 1
        // Predicated region
        $region13: #{tpu_custom_call.1} parent=11 // pred_check
          %p146 = pneg %p75
        $region14: #{tpu_custom_call.1} parent=11 // pred_check_branch
          %148 = sbr.rel (%p146) target = $region16
        $region15: #{tpu_custom_call.1} parent=11 // pred_region
          _
        $region16: #{tpu_custom_call.1} parent=11 // pred_fallthru
          _
      $region12: #{tpu_custom_call.1} parent=5 // pred_fallthru
        _
      %p149 = scmp.lt.s32.totalorder %s16, 2
      // Predicated region
      $region17: #{tpu_custom_call.1} parent=5 // pred_check
        %p150 = pneg %p149
      $region18: #{tpu_custom_call.1} parent=5 // pred_check_branch
        %152 = sbr.rel (%p150) target = $region20
      $region19: #{tpu_custom_call.1} parent=5 // pred_region
        // Predicated region
        $region21: #{tpu_custom_call.1} parent=19 // pred_check
          %p153 = pneg %p48
        $region22: #{tpu_custom_call.1} parent=19 // pred_check_branch
          %155 = sbr.rel (%p153) target = $region24
        $region23: #{tpu_custom_call.1} parent=19 // pred_region
          %p156 = scmp.lt.s32.totalorder %s23, 1
          %s157 = scalar_select %p156, %s23, 1
          %s158 = smul.addr %s157, 22
          %s159 = smul.addr %s158, 8
          %s160 = scalar_lea.vmem %s0, %s159
        $region24: #{tpu_custom_call.1} parent=19 // pred_fallthru
          _
      $region20: #{tpu_custom_call.1} parent=5 // pred_fallthru
        _
      %p161 = scmp.le.s32.totalorder 1, %s16
      %p162 = scmp.lt.s32.totalorder %s16, 3
      %p163 = pnand %p161, %p162
      %p164 = pneg %p163
      // Predicated region
      $region25: #{tpu_custom_call.1} parent=5 // pred_check
        _
      $region26: #{tpu_custom_call.1} parent=5 // pred_check_branch
        %166 = sbr.rel (%p163) target = $region28
      $region27: #{tpu_custom_call.1} parent=5 // pred_region
        %s167 = ssub.s32 %s16, 1
        %p168 = scmp.lt.s32.totalorder %s25, 1
        %s169 = scalar_select %p168, %s25, 1
        %s170 = smul.addr %s169, 22
        %s171 = smul.addr %s170, 8
        %s172 = scalar_lea.vmem %s0, %s171
        %p173 = pneg %p54
        %p174 = pneg %p51
        %p175 = pneg %p75
        %p176 = pneg %p72
        %p177 = pneg %p103
        %p178 = pneg %p100
        %s179 = sand.u32 %s90, 1
        %s180 = scalar_lea.sflag [#allocation4], %s179
        %s181 = sand.u32 %s90, 1
        %s182 = smul.addr %s181, 64
        %s183 = scalar_lea.vmem [#allocation3], %s182
        %p184 = pneg %p131
        %p185 = pneg %p128
        %s186 = sand.u32 %s118, 1
        %s187 = scalar_lea.sflag [#allocation6], %s186
        %s188 = sand.u32 %s118, 1
        %s189 = smul.addr %s188, 2
        %s190 = scalar_lea.vmem [#allocation5], %s189
        %p191 = scmp.lt.s32.totalorder %s25, 1
        %s192 = scalar_select %p191, %s25, 1
        %s193 = smul.addr %s192, 22
        %s194 = smul.addr %s193, 8
        %s195 = scalar_lea.vmem %s0, %s194
        %s196 = smul.u32 8, %s26
        %s197 = smul.u32 %s26, 8
        %s198 = smul.u32 %s197, 16
        %s199 = scalar_lea.vmem %s195, %s198
        %v200 = vld [vmem:[%s199] sm:$0xff]
        %v201 = vld [vmem:[%s199 + $0x10] sm:$0xff]
        %v202 = vld [vmem:[%s199 + $0x20] sm:$0xff]
        %v203 = vld [vmem:[%s199 + $0x30] sm:$0xff]
        %v204 = vld [vmem:[%s199 + $0x40] sm:$0xff]
        %v205 = vld [vmem:[%s199 + $0x50] sm:$0xff]
        %v206 = vld [vmem:[%s199 + $0x60] sm:$0xff]
        %v207 = vld [vmem:[%s199 + $0x70] sm:$0xff]
        %v208 = vld [vmem:[%s1] sm:$0xff]
        %v209 = vld [vmem:[%s1 + $0x8] sm:$0xff]
        %vm210 = vcmask 130048
        %v212 = vsel %vm210, %v200, 0
        %v215 = vsel %vm210, %v201, 0
        %v218 = vsel %vm210, %v202, 0
        %v221 = vsel %vm210, %v203, 0
        %v224 = vsel %vm210, %v204, 0
        %v227 = vsel %vm210, %v205, 0
        %v230 = vsel %vm210, %v206, 0
        %v233 = vsel %vm210, %v207, 0
        %235 = vmatprep.subr.mxu0 0.0
        %236 = vmatpush1.msra.mxu0 0.0
        %237 = vmatprep.subr.mxu0 0.0
        %238 = vmatpush1.msra.mxu0 0.0
        %239 = vmatprep.subr.mxu0 0.0
        %240 = vmatpush1.msra.mxu0 0.0
        %241 = vmatprep.subr.mxu0 0.0
        %242 = vmatpush1.msra.mxu0 0.0
        %243 = vmatprep.subr.mxu0 0.0
        %244 = vmatpush1.msra.mxu0 0.0
        %245 = vmatprep.subr.mxu0 0.0
        %246 = vmatpush1.msra.mxu0 0.0
        %247 = vmatprep.subr.mxu0 0.0
        %248 = vmatpush1.msra.mxu0 0.0
        %249 = vmatprep.subr.mxu0 0.0
        %250 = vmatpush1.msra.mxu0 0.0
        %251 = vmatprep.subr.mxu0 0.0
        %252 = vmatpush1.msra.mxu0 0.0
        %253 = vmatprep.subr.mxu0 0.0
        %254 = vmatpush1.msra.mxu0 0.0
        %255 = vmatprep.subr.mxu0 0.0
        %256 = vmatpush1.msra.mxu0 0.0
        %257 = vmatprep.subr.mxu0 0.0
        %258 = vmatpush1.msra.mxu0 0.0
        %259 = vmatprep.subr.mxu0 0.0
        %260 = vmatpush1.msra.mxu0 0.0
        %261 = vmatprep.subr.mxu0 0.0
        %262 = vmatpush1.msra.mxu0 0.0
        %263 = vmatprep.subr.mxu0 0.0
        %264 = vmatpush1.msra.mxu0 %v209
        %265 = vmatprep.subr.mxu0 0.0
        %266 = vmatpush1.msra.mxu0 %v208
        %267 = vmatprep.subr.mxu0 0.0
        %268 = vmatpush2.msra.mxu0 0.0
        %269 = vmatprep.subr.mxu0 0.0
        %270 = vmatpush2.msra.mxu0 0.0
        %271 = vmatprep.subr.mxu0 0.0
        %272 = vmatpush2.msra.mxu0 0.0
        %273 = vmatprep.subr.mxu0 0.0
        %274 = vmatpush2.msra.mxu0 0.0
        %275 = vmatprep.subr.mxu0 0.0
        %276 = vmatpush2.msra.mxu0 0.0
        %277 = vmatprep.subr.mxu0 0.0
        %278 = vmatpush2.msra.mxu0 0.0
        %279 = vmatprep.subr.mxu0 0.0
        %280 = vmatpush2.msra.mxu0 0.0
        %281 = vmatprep.subr.mxu0 0.0
        %282 = vmatpush2.msra.mxu0 0.0
        %283 = vmatprep.subr.mxu0 0.0
        %284 = vmatpush2.msra.mxu0 0.0
        %285 = vmatprep.subr.mxu0 0.0
        %286 = vmatpush2.msra.mxu0 0.0
        %287 = vmatprep.subr.mxu0 0.0
        %288 = vmatpush2.msra.mxu0 0.0
        %289 = vmatprep.subr.mxu0 0.0
        %290 = vmatpush2.msra.mxu0 0.0
        %291 = vmatprep.subr.mxu0 0.0
        %292 = vmatpush2.msra.mxu0 0.0
        %293 = vmatprep.subr.mxu0 0.0
        %294 = vmatpush2.msra.mxu0 0.0
        %295 = vmatprep.subr.mxu0 0.0
        %296 = vmatpush2.msra.mxu0 0.0
        %297 = vmatprep.subr.mxu0 0.0
        %298 = vmatpush2.msra.mxu0 0.0
        %299 = vmatprep.mubr.f32.mxu0 0.0
        %300 = vmatmul.mubr.f32.gmra.mxu0 %v212
        %v301 = vpop.f32.mrf.mxu0
        %v302 = vadd.f32 0.0, %v301
        %v303 = vpop.f32.mrf.mxu0
        %304 = vmatprep.mubr.f32.mxu0 0.0
        %305 = vmatmul.mubr.f32.gmra.mxu0 %v215
        %v306 = vpop.f32.mrf.mxu0
        %v307 = vadd.f32 0.0, %v306
        %v308 = vpop.f32.mrf.mxu0
        %309 = vmatprep.mubr.f32.mxu0 0.0
        %310 = vmatmul.mubr.f32.gmra.mxu0 %v218
        %v311 = vpop.f32.mrf.mxu0
        %v312 = vadd.f32 0.0, %v311
        %v313 = vpop.f32.mrf.mxu0
        %314 = vmatprep.mubr.f32.mxu0 0.0
        %315 = vmatmul.mubr.f32.gmra.mxu0 %v221
        %v316 = vpop.f32.mrf.mxu0
        %v317 = vadd.f32 0.0, %v316
        %v318 = vpop.f32.mrf.mxu0
        %319 = vmatprep.mubr.f32.mxu0 0.0
        %320 = vmatmul.mubr.f32.gmra.mxu0 %v224
        %v321 = vpop.f32.mrf.mxu0
        %v322 = vadd.f32 0.0, %v321
        %v323 = vpop.f32.mrf.mxu0
        %324 = vmatprep.mubr.f32.mxu0 0.0
        %325 = vmatmul.mubr.f32.gmra.mxu0 %v227
        %v326 = vpop.f32.mrf.mxu0
        %v327 = vadd.f32 0.0, %v326
        %v328 = vpop.f32.mrf.mxu0
        %329 = vmatprep.mubr.f32.mxu0 0.0
        %330 = vmatmul.mubr.f32.gmra.mxu0 %v230
        %v331 = vpop.f32.mrf.mxu0
        %v332 = vadd.f32 0.0, %v331
        %v333 = vpop.f32.mrf.mxu0
        %334 = vmatprep.mubr.f32.mxu0 0.0
        %335 = vmatmul.mubr.f32.gmra.mxu0 %v233
        %v336 = vpop.f32.mrf.mxu0
        %v337 = vadd.f32 0.0, %v336
        %v338 = vpop.f32.mrf.mxu0
        %339 = vdwg.mxu0
        %340 = vst [vmem:[#allocation2] sm:$0xff] %v302
        %341 = vst [vmem:[#allocation2 + $0x8] sm:$0xff] %v307
        %342 = vst [vmem:[#allocation2 + $0x10] sm:$0xff] %v312
        %343 = vst [vmem:[#allocation2 + $0x18] sm:$0xff] %v317
        %344 = vst [vmem:[#allocation2 + $0x20] sm:$0xff] %v322
        %345 = vst [vmem:[#allocation2 + $0x28] sm:$0xff] %v327
        %346 = vst [vmem:[#allocation2 + $0x30] sm:$0xff] %v332
        %347 = vst [vmem:[#allocation2 + $0x38] sm:$0xff] %v337
        %v348 = vld [vmem:[%s199 + $0x1] sm:$0xff]
        %v349 = vld [vmem:[%s199 + $0x11] sm:$0xff]
        %v350 = vld [vmem:[%s199 + $0x21] sm:$0xff]
        %v351 = vld [vmem:[%s199 + $0x31] sm:$0xff]
        %v352 = vld [vmem:[%s199 + $0x41] sm:$0xff]
        %v353 = vld [vmem:[%s199 + $0x51] sm:$0xff]
        %v354 = vld [vmem:[%s199 + $0x61] sm:$0xff]
        %v355 = vld [vmem:[%s199 + $0x71] sm:$0xff]
        %s356 = scalar_lea.vmem %s1, 16
        %v357 = vld [vmem:[%s356] sm:$0xff]
        %v358 = vld [vmem:[%s356 + $0x8] sm:$0xff]
        %v360 = vsel %vm210, %v348, 0
        %v363 = vsel %vm210, %v349, 0
        %v366 = vsel %vm210, %v350, 0
        %v369 = vsel %vm210, %v351, 0
        %v372 = vsel %vm210, %v352, 0
        %v375 = vsel %vm210, %v353, 0
        %v378 = vsel %vm210, %v354, 0
        %v381 = vsel %vm210, %v355, 0
        %383 = vmatprep.subr.mxu0 0.0
        %384 = vmatpush1.msra.mxu0 0.0
        %385 = vmatprep.subr.mxu0 0.0
        %386 = vmatpush1.msra.mxu0 0.0
        %387 = vmatprep.subr.mxu0 0.0
        %388 = vmatpush1.msra.mxu0 0.0
        %389 = vmatprep.subr.mxu0 0.0
        %390 = vmatpush1.msra.mxu0 0.0
        %391 = vmatprep.subr.mxu0 0.0
        %392 = vmatpush1.msra.mxu0 0.0
        %393 = vmatprep.subr.mxu0 0.0
        %394 = vmatpush1.msra.mxu0 0.0
        %395 = vmatprep.subr.mxu0 0.0
        %396 = vmatpush1.msra.mxu0 0.0
        %397 = vmatprep.subr.mxu0 0.0
        %398 = vmatpush1.msra.mxu0 0.0
        %399 = vmatprep.subr.mxu0 0.0
        %400 = vmatpush1.msra.mxu0 0.0
        %401 = vmatprep.subr.mxu0 0.0
        %402 = vmatpush1.msra.mxu0 0.0
        %403 = vmatprep.subr.mxu0 0.0
        %404 = vmatpush1.msra.mxu0 0.0
        %405 = vmatprep.subr.mxu0 0.0
        %406 = vmatpush1.msra.mxu0 0.0
        %407 = vmatprep.subr.mxu0 0.0
        %408 = vmatpush1.msra.mxu0 0.0
        %409 = vmatprep.subr.mxu0 0.0
        %410 = vmatpush1.msra.mxu0 0.0
        %411 = vmatprep.subr.mxu0 0.0
        %412 = vmatpush1.msra.mxu0 %v358
        %413 = vmatprep.subr.mxu0 0.0
        %414 = vmatpush1.msra.mxu0 %v357
        %415 = vmatprep.subr.mxu0 0.0
        %416 = vmatpush2.msra.mxu0 0.0
        %417 = vmatprep.subr.mxu0 0.0
        %418 = vmatpush2.msra.mxu0 0.0
        %419 = vmatprep.subr.mxu0 0.0
        %420 = vmatpush2.msra.mxu0 0.0
        %421 = vmatprep.subr.mxu0 0.0
        %422 = vmatpush2.msra.mxu0 0.0
        %423 = vmatprep.subr.mxu0 0.0
        %424 = vmatpush2.msra.mxu0 0.0
        %425 = vmatprep.subr.mxu0 0.0
        %426 = vmatpush2.msra.mxu0 0.0
        %427 = vmatprep.subr.mxu0 0.0
        %428 = vmatpush2.msra.mxu0 0.0
        %429 = vmatprep.subr.mxu0 0.0
        %430 = vmatpush2.msra.mxu0 0.0
        %431 = vmatprep.subr.mxu0 0.0
        %432 = vmatpush2.msra.mxu0 0.0
        %433 = vmatprep.subr.mxu0 0.0
        %434 = vmatpush2.msra.mxu0 0.0
        %435 = vmatprep.subr.mxu0 0.0
        %436 = vmatpush2.msra.mxu0 0.0
        %437 = vmatprep.subr.mxu0 0.0
        %438 = vmatpush2.msra.mxu0 0.0
        %439 = vmatprep.subr.mxu0 0.0
        %440 = vmatpush2.msra.mxu0 0.0
        %441 = vmatprep.subr.mxu0 0.0
        %442 = vmatpush2.msra.mxu0 0.0
        %443 = vmatprep.subr.mxu0 0.0
        %444 = vmatpush2.msra.mxu0 0.0
        %445 = vmatprep.subr.mxu0 0.0
        %446 = vmatpush2.msra.mxu0 0.0
        %447 = vmatprep.mubr.f32.mxu0 0.0
        %448 = vmatmul.mubr.f32.gmra.mxu0 %v360
        %v449 = vpop.f32.mrf.mxu0
        %v450 = vadd.f32 0.0, %v449
        %v451 = vpop.f32.mrf.mxu0
        %452 = vmatprep.mubr.f32.mxu0 0.0
        %453 = vmatmul.mubr.f32.gmra.mxu0 %v363
        %v454 = vpop.f32.mrf.mxu0
        %v455 = vadd.f32 0.0, %v454
        %v456 = vpop.f32.mrf.mxu0
        %457 = vmatprep.mubr.f32.mxu0 0.0
        %458 = vmatmul.mubr.f32.gmra.mxu0 %v366
        %v459 = vpop.f32.mrf.mxu0
        %v460 = vadd.f32 0.0, %v459
        %v461 = vpop.f32.mrf.mxu0
        %462 = vmatprep.mubr.f32.mxu0 0.0
        %463 = vmatmul.mubr.f32.gmra.mxu0 %v369
        %v464 = vpop.f32.mrf.mxu0
        %v465 = vadd.f32 0.0, %v464
        %v466 = vpop.f32.mrf.mxu0
        %467 = vmatprep.mubr.f32.mxu0 0.0
        %468 = vmatmul.mubr.f32.gmra.mxu0 %v372
        %v469 = vpop.f32.mrf.mxu0
        %v470 = vadd.f32 0.0, %v469
        %v471 = vpop.f32.mrf.mxu0
        %472 = vmatprep.mubr.f32.mxu0 0.0
        %473 = vmatmul.mubr.f32.gmra.mxu0 %v375
        %v474 = vpop.f32.mrf.mxu0
        %v475 = vadd.f32 0.0, %v474
        %v476 = vpop.f32.mrf.mxu0
        %477 = vmatprep.mubr.f32.mxu0 0.0
        %478 = vmatmul.mubr.f32.gmra.mxu0 %v378
        %v479 = vpop.f32.mrf.mxu0
        %v480 = vadd.f32 0.0, %v479
        %v481 = vpop.f32.mrf.mxu0
        %482 = vmatprep.mubr.f32.mxu0 0.0
        %483 = vmatmul.mubr.f32.gmra.mxu0 %v381
        %v484 = vpop.f32.mrf.mxu0
        %v485 = vadd.f32 0.0, %v484
        %v486 = vpop.f32.mrf.mxu0
        %487 = vdwg.mxu0
        %v488 = vld [vmem:[#allocation2] sm:$0xff]
        %v489 = vld [vmem:[#allocation2 + $0x8] sm:$0xff]
        %v490 = vld [vmem:[#allocation2 + $0x10] sm:$0xff]
        %v491 = vld [vmem:[#allocation2 + $0x18] sm:$0xff]
        %v492 = vld [vmem:[#allocation2 + $0x20] sm:$0xff]
        %v493 = vld [vmem:[#allocation2 + $0x28] sm:$0xff]
        %v494 = vld [vmem:[#allocation2 + $0x30] sm:$0xff]
        %v495 = vld [vmem:[#allocation2 + $0x38] sm:$0xff]
        %v496 = vadd.f32 %v488, %v450
        %v497 = vadd.f32 %v489, %v455
        %v498 = vadd.f32 %v490, %v460
        %v499 = vadd.f32 %v491, %v465
        %v500 = vadd.f32 %v492, %v470
        %v501 = vadd.f32 %v493, %v475
        %v502 = vadd.f32 %v494, %v480
        %v503 = vadd.f32 %v495, %v485
        %504 = vst [vmem:[#allocation2] sm:$0xff] %v496
        %505 = vst [vmem:[#allocation2 + $0x8] sm:$0xff] %v497
        %506 = vst [vmem:[#allocation2 + $0x10] sm:$0xff] %v498
        %507 = vst [vmem:[#allocation2 + $0x18] sm:$0xff] %v499
        %508 = vst [vmem:[#allocation2 + $0x20] sm:$0xff] %v500
        %509 = vst [vmem:[#allocation2 + $0x28] sm:$0xff] %v501
        %510 = vst [vmem:[#allocation2 + $0x30] sm:$0xff] %v502
        %511 = vst [vmem:[#allocation2 + $0x38] sm:$0xff] %v503
        %v512 = vld [vmem:[%s199 + $0x2] sm:$0xff]
        %v513 = vld [vmem:[%s199 + $0x12] sm:$0xff]
        %v514 = vld [vmem:[%s199 + $0x22] sm:$0xff]
        %v515 = vld [vmem:[%s199 + $0x32] sm:$0xff]
        %v516 = vld [vmem:[%s199 + $0x42] sm:$0xff]
        %v517 = vld [vmem:[%s199 + $0x52] sm:$0xff]
        %v518 = vld [vmem:[%s199 + $0x62] sm:$0xff]
        %v519 = vld [vmem:[%s199 + $0x72] sm:$0xff]
        %s520 = scalar_lea.vmem %s1, 32
        %v521 = vld [vmem:[%s520] sm:$0xff]
        %v522 = vld [vmem:[%s520 + $0x8] sm:$0xff]
        %v524 = vsel %vm210, %v512, 0
        %v527 = vsel %vm210, %v513, 0
        %v530 = vsel %vm210, %v514, 0
        %v533 = vsel %vm210, %v515, 0
        %v536 = vsel %vm210, %v516, 0
        %v539 = vsel %vm210, %v517, 0
        %v542 = vsel %vm210, %v518, 0
        %v545 = vsel %vm210, %v519, 0
        %547 = vmatprep.subr.mxu0 0.0
        %548 = vmatpush1.msra.mxu0 0.0
        %549 = vmatprep.subr.mxu0 0.0
        %550 = vmatpush1.msra.mxu0 0.0
        %551 = vmatprep.subr.mxu0 0.0
        %552 = vmatpush1.msra.mxu0 0.0
        %553 = vmatprep.subr.mxu0 0.0
        %554 = vmatpush1.msra.mxu0 0.0
        %555 = vmatprep.subr.mxu0 0.0
        %556 = vmatpush1.msra.mxu0 0.0
        %557 = vmatprep.subr.mxu0 0.0
        %558 = vmatpush1.msra.mxu0 0.0
        %559 = vmatprep.subr.mxu0 0.0
        %560 = vmatpush1.msra.mxu0 0.0
        %561 = vmatprep.subr.mxu0 0.0
        %562 = vmatpush1.msra.mxu0 0.0
        %563 = vmatprep.subr.mxu0 0.0
        %564 = vmatpush1.msra.mxu0 0.0
        %565 = vmatprep.subr.mxu0 0.0
        %566 = vmatpush1.msra.mxu0 0.0
        %567 = vmatprep.subr.mxu0 0.0
        %568 = vmatpush1.msra.mxu0 0.0
        %569 = vmatprep.subr.mxu0 0.0
        %570 = vmatpush1.msra.mxu0 0.0
        %571 = vmatprep.subr.mxu0 0.0
        %572 = vmatpush1.msra.mxu0 0.0
        %573 = vmatprep.subr.mxu0 0.0
        %574 = vmatpush1.msra.mxu0 0.0
        %575 = vmatprep.subr.mxu0 0.0
        %576 = vmatpush1.msra.mxu0 %v522
        %577 = vmatprep.subr.mxu0 0.0
        %578 = vmatpush1.msra.mxu0 %v521
        %579 = vmatprep.subr.mxu0 0.0
        %580 = vmatpush2.msra.mxu0 0.0
        %581 = vmatprep.subr.mxu0 0.0
        %582 = vmatpush2.msra.mxu0 0.0
        %583 = vmatprep.subr.mxu0 0.0
        %584 = vmatpush2.msra.mxu0 0.0
        %585 = vmatprep.subr.mxu0 0.0
        %586 = vmatpush2.msra.mxu0 0.0
        %587 = vmatprep.subr.mxu0 0.0
        %588 = vmatpush2.msra.mxu0 0.0
        %589 = vmatprep.subr.mxu0 0.0
        %590 = vmatpush2.msra.mxu0 0.0
        %591 = vmatprep.subr.mxu0 0.0
        %592 = vmatpush2.msra.mxu0 0.0
        %593 = vmatprep.subr.mxu0 0.0
        %594 = vmatpush2.msra.mxu0 0.0
        %595 = vmatprep.subr.mxu0 0.0
        %596 = vmatpush2.msra.mxu0 0.0
        %597 = vmatprep.subr.mxu0 0.0
        %598 = vmatpush2.msra.mxu0 0.0
        %599 = vmatprep.subr.mxu0 0.0
        %600 = vmatpush2.msra.mxu0 0.0
        %601 = vmatprep.subr.mxu0 0.0
        %602 = vmatpush2.msra.mxu0 0.0
        %603 = vmatprep.subr.mxu0 0.0
        %604 = vmatpush2.msra.mxu0 0.0
        %605 = vmatprep.subr.mxu0 0.0
        %606 = vmatpush2.msra.mxu0 0.0
        %607 = vmatprep.subr.mxu0 0.0
        %608 = vmatpush2.msra.mxu0 0.0
        %609 = vmatprep.subr.mxu0 0.0
        %610 = vmatpush2.msra.mxu0 0.0
        %611 = vmatprep.mubr.f32.mxu0 0.0
        %612 = vmatmul.mubr.f32.gmra.mxu0 %v524
        %v613 = vpop.f32.mrf.mxu0
        %v614 = vadd.f32 0.0, %v613
        %v615 = vpop.f32.mrf.mxu0
        %616 = vmatprep.mubr.f32.mxu0 0.0
        %617 = vmatmul.mubr.f32.gmra.mxu0 %v527
        %v618 = vpop.f32.mrf.mxu0
        %v619 = vadd.f32 0.0, %v618
        %v620 = vpop.f32.mrf.mxu0
        %621 = vmatprep.mubr.f32.mxu0 0.0
        %622 = vmatmul.mubr.f32.gmra.mxu0 %v530
        %v623 = vpop.f32.mrf.mxu0
        %v624 = vadd.f32 0.0, %v623
        %v625 = vpop.f32.mrf.mxu0
        %626 = vmatprep.mubr.f32.mxu0 0.0
        %627 = vmatmul.mubr.f32.gmra.mxu0 %v533
        %v628 = vpop.f32.mrf.mxu0
        %v629 = vadd.f32 0.0, %v628
        %v630 = vpop.f32.mrf.mxu0
        %631 = vmatprep.mubr.f32.mxu0 0.0
        %632 = vmatmul.mubr.f32.gmra.mxu0 %v536
        %v633 = vpop.f32.mrf.mxu0
        %v634 = vadd.f32 0.0, %v633
        %v635 = vpop.f32.mrf.mxu0
        %636 = vmatprep.mubr.f32.mxu0 0.0
        %637 = vmatmul.mubr.f32.gmra.mxu0 %v539
        %v638 = vpop.f32.mrf.mxu0
        %v639 = vadd.f32 0.0, %v638
        %v640 = vpop.f32.mrf.mxu0
        %641 = vmatprep.mubr.f32.mxu0 0.0
        %642 = vmatmul.mubr.f32.gmra.mxu0 %v542
        %v643 = vpop.f32.mrf.mxu0
        %v644 = vadd.f32 0.0, %v643
        %v645 = vpop.f32.mrf.mxu0
        %646 = vmatprep.mubr.f32.mxu0 0.0
        %647 = vmatmul.mubr.f32.gmra.mxu0 %v545
        %v648 = vpop.f32.mrf.mxu0
        %v649 = vadd.f32 0.0, %v648
        %v650 = vpop.f32.mrf.mxu0
        %651 = vdwg.mxu0
        %v652 = vld [vmem:[#allocation2] sm:$0xff]
        %v653 = vld [vmem:[#allocation2 + $0x8] sm:$0xff]
        %v654 = vld [vmem:[#allocation2 + $0x10] sm:$0xff]
        %v655 = vld [vmem:[#allocation2 + $0x18] sm:$0xff]
        %v656 = vld [vmem:[#allocation2 + $0x20] sm:$0xff]
        %v657 = vld [vmem:[#allocation2 + $0x28] sm:$0xff]
        %v658 = vld [vmem:[#allocation2 + $0x30] sm:$0xff]
        %v659 = vld [vmem:[#allocation2 + $0x38] sm:$0xff]
        %v660 = vadd.f32 %v652, %v614
        %v661 = vadd.f32 %v653, %v619
        %v662 = vadd.f32 %v654, %v624
        %v663 = vadd.f32 %v655, %v629
        %v664 = vadd.f32 %v656, %v634
        %v665 = vadd.f32 %v657, %v639
        %v666 = vadd.f32 %v658, %v644
        %v667 = vadd.f32 %v659, %v649
        %668 = vst [vmem:[#allocation2] sm:$0xff] %v660
        %669 = vst [vmem:[#allocation2 + $0x8] sm:$0xff] %v661
        %670 = vst [vmem:[#allocation2 + $0x10] sm:$0xff] %v662
        %671 = vst [vmem:[#allocation2 + $0x18] sm:$0xff] %v663
        %672 = vst [vmem:[#allocation2 + $0x20] sm:$0xff] %v664
        %673 = vst [vmem:[#allocation2 + $0x28] sm:$0xff] %v665
        %674 = vst [vmem:[#allocation2 + $0x30] sm:$0xff] %v666
        %675 = vst [vmem:[#allocation2 + $0x38] sm:$0xff] %v667
        %v676 = vld [vmem:[%s199 + $0x3] sm:$0xff]
        %v677 = vld [vmem:[%s199 + $0x13] sm:$0xff]
        %v678 = vld [vmem:[%s199 + $0x23] sm:$0xff]
        %v679 = vld [vmem:[%s199 + $0x33] sm:$0xff]
        %v680 = vld [vmem:[%s199 + $0x43] sm:$0xff]
        %v681 = vld [vmem:[%s199 + $0x53] sm:$0xff]
        %v682 = vld [vmem:[%s199 + $0x63] sm:$0xff]
        %v683 = vld [vmem:[%s199 + $0x73] sm:$0xff]
        %s684 = scalar_lea.vmem %s1, 48
        %v685 = vld [vmem:[%s684] sm:$0xff]
        %v686 = vld [vmem:[%s684 + $0x8] sm:$0xff]
        %v688 = vsel %vm210, %v676, 0
        %v691 = vsel %vm210, %v677, 0
        %v694 = vsel %vm210, %v678, 0
        %v697 = vsel %vm210, %v679, 0
        %v700 = vsel %vm210, %v680, 0
        %v703 = vsel %vm210, %v681, 0
        %v706 = vsel %vm210, %v682, 0
        %v709 = vsel %vm210, %v683, 0
        %711 = vmatprep.subr.mxu0 0.0
        %712 = vmatpush1.msra.mxu0 0.0
        %713 = vmatprep.subr.mxu0 0.0
        %714 = vmatpush1.msra.mxu0 0.0
        %715 = vmatprep.subr.mxu0 0.0
        %716 = vmatpush1.msra.mxu0 0.0
        %717 = vmatprep.subr.mxu0 0.0
        %718 = vmatpush1.msra.mxu0 0.0
        %719 = vmatprep.subr.mxu0 0.0
        %720 = vmatpush1.msra.mxu0 0.0
        %721 = vmatprep.subr.mxu0 0.0
        %722 = vmatpush1.msra.mxu0 0.0
        %723 = vmatprep.subr.mxu0 0.0
        %724 = vmatpush1.msra.mxu0 0.0
        %725 = vmatprep.subr.mxu0 0.0
        %726 = vmatpush1.msra.mxu0 0.0
        %727 = vmatprep.subr.mxu0 0.0
        %728 = vmatpush1.msra.mxu0 0.0
        %729 = vmatprep.subr.mxu0 0.0
        %730 = vmatpush1.msra.mxu0 0.0
        %731 = vmatprep.subr.mxu0 0.0
        %732 = vmatpush1.msra.mxu0 0.0
        %733 = vmatprep.subr.mxu0 0.0
        %734 = vmatpush1.msra.mxu0 0.0
        %735 = vmatprep.subr.mxu0 0.0
        %736 = vmatpush1.msra.mxu0 0.0
        %737 = vmatprep.subr.mxu0 0.0
        %738 = vmatpush1.msra.mxu0 0.0
        %739 = vmatprep.subr.mxu0 0.0
        %740 = vmatpush1.msra.mxu0 %v686
        %741 = vmatprep.subr.mxu0 0.0
        %742 = vmatpush1.msra.mxu0 %v685
        %743 = vmatprep.subr.mxu0 0.0
        %744 = vmatpush2.msra.mxu0 0.0
        %745 = vmatprep.subr.mxu0 0.0
        %746 = vmatpush2.msra.mxu0 0.0
        %747 = vmatprep.subr.mxu0 0.0
        %748 = vmatpush2.msra.mxu0 0.0
        %749 = vmatprep.subr.mxu0 0.0
        %750 = vmatpush2.msra.mxu0 0.0
        %751 = vmatprep.subr.mxu0 0.0
        %752 = vmatpush2.msra.mxu0 0.0
        %753 = vmatprep.subr.mxu0 0.0
        %754 = vmatpush2.msra.mxu0 0.0
        %755 = vmatprep.subr.mxu0 0.0
        %756 = vmatpush2.msra.mxu0 0.0
        %757 = vmatprep.subr.mxu0 0.0
        %758 = vmatpush2.msra.mxu0 0.0
        %759 = vmatprep.subr.mxu0 0.0
        %760 = vmatpush2.msra.mxu0 0.0
        %761 = vmatprep.subr.mxu0 0.0
        %762 = vmatpush2.msra.mxu0 0.0
        %763 = vmatprep.subr.mxu0 0.0
        %764 = vmatpush2.msra.mxu0 0.0
        %765 = vmatprep.subr.mxu0 0.0
        %766 = vmatpush2.msra.mxu0 0.0
        %767 = vmatprep.subr.mxu0 0.0
        %768 = vmatpush2.msra.mxu0 0.0
        %769 = vmatprep.subr.mxu0 0.0
        %770 = vmatpush2.msra.mxu0 0.0
        %771 = vmatprep.subr.mxu0 0.0
        %772 = vmatpush2.msra.mxu0 0.0
        %773 = vmatprep.subr.mxu0 0.0
        %774 = vmatpush2.msra.mxu0 0.0
        %775 = vmatprep.mubr.f32.mxu0 0.0
        %776 = vmatmul.mubr.f32.gmra.mxu0 %v688
        %v777 = vpop.f32.mrf.mxu0
        %v778 = vadd.f32 0.0, %v777
        %v779 = vpop.f32.mrf.mxu0
        %780 = vmatprep.mubr.f32.mxu0 0.0
        %781 = vmatmul.mubr.f32.gmra.mxu0 %v691
        %v782 = vpop.f32.mrf.mxu0
        %v783 = vadd.f32 0.0, %v782
        %v784 = vpop.f32.mrf.mxu0
        %785 = vmatprep.mubr.f32.mxu0 0.0
        %786 = vmatmul.mubr.f32.gmra.mxu0 %v694
        %v787 = vpop.f32.mrf.mxu0
        %v788 = vadd.f32 0.0, %v787
        %v789 = vpop.f32.mrf.mxu0
        %790 = vmatprep.mubr.f32.mxu0 0.0
        %791 = vmatmul.mubr.f32.gmra.mxu0 %v697
        %v792 = vpop.f32.mrf.mxu0
        %v793 = vadd.f32 0.0, %v792
        %v794 = vpop.f32.mrf.mxu0
        %795 = vmatprep.mubr.f32.mxu0 0.0
        %796 = vmatmul.mubr.f32.gmra.mxu0 %v700
        %v797 = vpop.f32.mrf.mxu0
        %v798 = vadd.f32 0.0, %v797
        %v799 = vpop.f32.mrf.mxu0
        %800 = vmatprep.mubr.f32.mxu0 0.0
        %801 = vmatmul.mubr.f32.gmra.mxu0 %v703
        %v802 = vpop.f32.mrf.mxu0
        %v803 = vadd.f32 0.0, %v802
        %v804 = vpop.f32.mrf.mxu0
        %805 = vmatprep.mubr.f32.mxu0 0.0
        %806 = vmatmul.mubr.f32.gmra.mxu0 %v706
        %v807 = vpop.f32.mrf.mxu0
        %v808 = vadd.f32 0.0, %v807
        %v809 = vpop.f32.mrf.mxu0
        %810 = vmatprep.mubr.f32.mxu0 0.0
        %811 = vmatmul.mubr.f32.gmra.mxu0 %v709
        %v812 = vpop.f32.mrf.mxu0
        %v813 = vadd.f32 0.0, %v812
        %v814 = vpop.f32.mrf.mxu0
        %815 = vdwg.mxu0
        %v816 = vld [vmem:[#allocation2] sm:$0xff]
        %v817 = vld [vmem:[#allocation2 + $0x8] sm:$0xff]
        %v818 = vld [vmem:[#allocation2 + $0x10] sm:$0xff]
        %v819 = vld [vmem:[#allocation2 + $0x18] sm:$0xff]
        %v820 = vld [vmem:[#allocation2 + $0x20] sm:$0xff]
        %v821 = vld [vmem:[#allocation2 + $0x28] sm:$0xff]
        %v822 = vld [vmem:[#allocation2 + $0x30] sm:$0xff]
        %v823 = vld [vmem:[#allocation2 + $0x38] sm:$0xff]
        %v824 = vadd.f32 %v816, %v778
        %v825 = vadd.f32 %v817, %v783
        %v826 = vadd.f32 %v818, %v788
        %v827 = vadd.f32 %v819, %v793
        %v828 = vadd.f32 %v820, %v798
        %v829 = vadd.f32 %v821, %v803
        %v830 = vadd.f32 %v822, %v808
        %v831 = vadd.f32 %v823, %v813
        %832 = vst [vmem:[#allocation2] sm:$0xff] %v824
        %833 = vst [vmem:[#allocation2 + $0x8] sm:$0xff] %v825
        %834 = vst [vmem:[#allocation2 + $0x10] sm:$0xff] %v826
        %835 = vst [vmem:[#allocation2 + $0x18] sm:$0xff] %v827
        %836 = vst [vmem:[#allocation2 + $0x20] sm:$0xff] %v828
        %837 = vst [vmem:[#allocation2 + $0x28] sm:$0xff] %v829
        %838 = vst [vmem:[#allocation2 + $0x30] sm:$0xff] %v830
        %839 = vst [vmem:[#allocation2 + $0x38] sm:$0xff] %v831
        %s840 = sadd.s32 %s197, 1
        %s841 = smul.u32 %s840, 16
        %s842 = scalar_lea.vmem %s195, %s841
        %v843 = vld [vmem:[%s842] sm:$0xff]
        %v844 = vld [vmem:[%s842 + $0x10] sm:$0xff]
        %v845 = vld [vmem:[%s842 + $0x20] sm:$0xff]
        %v846 = vld [vmem:[%s842 + $0x30] sm:$0xff]
        %v847 = vld [vmem:[%s842 + $0x40] sm:$0xff]
        %v848 = vld [vmem:[%s842 + $0x50] sm:$0xff]
        %v849 = vld [vmem:[%s842 + $0x60] sm:$0xff]
        %v850 = vld [vmem:[%s842 + $0x70] sm:$0xff]
        %s851 = scalar_lea.vmem %s1, 64
        %v852 = vld [vmem:[%s851] sm:$0xff]
        %v853 = vld [vmem:[%s851 + $0x8] sm:$0xff]
        %v855 = vsel %vm210, %v843, 0
        %v858 = vsel %vm210, %v844, 0
        %v861 = vsel %vm210, %v845, 0
        %v864 = vsel %vm210, %v846, 0
        %v867 = vsel %vm210, %v847, 0
        %v870 = vsel %vm210, %v848, 0
        %v873 = vsel %vm210, %v849, 0
        %v876 = vsel %vm210, %v850, 0
        %878 = vmatprep.subr.mxu0 0.0
        %879 = vmatpush1.msra.mxu0 0.0
        %880 = vmatprep.subr.mxu0 0.0
        %881 = vmatpush1.msra.mxu0 0.0
        %882 = vmatprep.subr.mxu0 0.0
        %883 = vmatpush1.msra.mxu0 0.0
        %884 = vmatprep.subr.mxu0 0.0
        %885 = vmatpush1.msra.mxu0 0.0
        %886 = vmatprep.subr.mxu0 0.0
        %887 = vmatpush1.msra.mxu0 0.0
        %888 = vmatprep.subr.mxu0 0.0
        %889 = vmatpush1.msra.mxu0 0.0
        %890 = vmatprep.subr.mxu0 0.0
        %891 = vmatpush1.msra.mxu0 0.0
        %892 = vmatprep.subr.mxu0 0.0
        %893 = vmatpush1.msra.mxu0 0.0
        %894 = vmatprep.subr.mxu0 0.0
        %895 = vmatpush1.msra.mxu0 0.0
        %896 = vmatprep.subr.mxu0 0.0
        %897 = vmatpush1.msra.mxu0 0.0
        %898 = vmatprep.subr.mxu0 0.0
        %899 = vmatpush1.msra.mxu0 0.0
        %900 = vmatprep.subr.mxu0 0.0
        %901 = vmatpush1.msra.mxu0 0.0
        %902 = vmatprep.subr.mxu0 0.0
        %903 = vmatpush1.msra.mxu0 0.0
        %904 = vmatprep.subr.mxu0 0.0
        %905 = vmatpush1.msra.mxu0 0.0
        %906 = vmatprep.subr.mxu0 0.0
        %907 = vmatpush1.msra.mxu0 %v853
        %908 = vmatprep.subr.mxu0 0.0
        %909 = vmatpush1.msra.mxu0 %v852
        %910 = vmatprep.subr.mxu0 0.0
        %911 = vmatpush2.msra.mxu0 0.0
        %912 = vmatprep.subr.mxu0 0.0
        %913 = vmatpush2.msra.mxu0 0.0
        %914 = vmatprep.subr.mxu0 0.0
        %915 = vmatpush2.msra.mxu0 0.0
        %916 = vmatprep.subr.mxu0 0.0
        %917 = vmatpush2.msra.mxu0 0.0
        %918 = vmatprep.subr.mxu0 0.0
        %919 = vmatpush2.msra.mxu0 0.0
        %920 = vmatprep.subr.mxu0 0.0
        %921 = vmatpush2.msra.mxu0 0.0
        %922 = vmatprep.subr.mxu0 0.0
        %923 = vmatpush2.msra.mxu0 0.0
        %924 = vmatprep.subr.mxu0 0.0
        %925 = vmatpush2.msra.mxu0 0.0
        %926 = vmatprep.subr.mxu0 0.0
        %927 = vmatpush2.msra.mxu0 0.0
        %928 = vmatprep.subr.mxu0 0.0
        %929 = vmatpush2.msra.mxu0 0.0
        %930 = vmatprep.subr.mxu0 0.0
        %931 = vmatpush2.msra.mxu0 0.0
        %932 = vmatprep.subr.mxu0 0.0
        %933 = vmatpush2.msra.mxu0 0.0
        %934 = vmatprep.subr.mxu0 0.0
        %935 = vmatpush2.msra.mxu0 0.0
        %936 = vmatprep.subr.mxu0 0.0
        %937 = vmatpush2.msra.mxu0 0.0
        %938 = vmatprep.subr.mxu0 0.0
        %939 = vmatpush2.msra.mxu0 0.0
        %940 = vmatprep.subr.mxu0 0.0
        %941 = vmatpush2.msra.mxu0 0.0
        %942 = vmatprep.mubr.f32.mxu0 0.0
        %943 = vmatmul.mubr.f32.gmra.mxu0 %v855
        %v944 = vpop.f32.mrf.mxu0
        %v945 = vadd.f32 0.0, %v944
        %v946 = vpop.f32.mrf.mxu0
        %947 = vmatprep.mubr.f32.mxu0 0.0
        %948 = vmatmul.mubr.f32.gmra.mxu0 %v858
        %v949 = vpop.f32.mrf.mxu0
        %v950 = vadd.f32 0.0, %v949
        %v951 = vpop.f32.mrf.mxu0
        %952 = vmatprep.mubr.f32.mxu0 0.0
        %953 = vmatmul.mubr.f32.gmra.mxu0 %v861
        %v954 = vpop.f32.mrf.mxu0
        %v955 = vadd.f32 0.0, %v954
        %v956 = vpop.f32.mrf.mxu0
        %957 = vmatprep.mubr.f32.mxu0 0.0
        %958 = vmatmul.mubr.f32.gmra.mxu0 %v864
        %v959 = vpop.f32.mrf.mxu0
        %v960 = vadd.f32 0.0, %v959
        %v961 = vpop.f32.mrf.mxu0
        %962 = vmatprep.mubr.f32.mxu0 0.0
        %963 = vmatmul.mubr.f32.gmra.mxu0 %v867
        %v964 = vpop.f32.mrf.mxu0
        %v965 = vadd.f32 0.0, %v964
        %v966 = vpop.f32.mrf.mxu0
        %967 = vmatprep.mubr.f32.mxu0 0.0
        %968 = vmatmul.mubr.f32.gmra.mxu0 %v870
        %v969 = vpop.f32.mrf.mxu0
        %v970 = vadd.f32 0.0, %v969
        %v971 = vpop.f32.mrf.mxu0
        %972 = vmatprep.mubr.f32.mxu0 0.0
        %973 = vmatmul.mubr.f32.gmra.mxu0 %v873
        %v974 = vpop.f32.mrf.mxu0
        %v975 = vadd.f32 0.0, %v974
        %v976 = vpop.f32.mrf.mxu0
        %977 = vmatprep.mubr.f32.mxu0 0.0
        %978 = vmatmul.mubr.f32.gmra.mxu0 %v876
        %v979 = vpop.f32.mrf.mxu0
        %v980 = vadd.f32 0.0, %v979
        %v981 = vpop.f32.mrf.mxu0
        %982 = vdwg.mxu0
        %v983 = vld [vmem:[#allocation2] sm:$0xff]
        %v984 = vld [vmem:[#allocation2 + $0x8] sm:$0xff]
        %v985 = vld [vmem:[#allocation2 + $0x10] sm:$0xff]
        %v986 = vld [vmem:[#allocation2 + $0x18] sm:$0xff]
        %v987 = vld [vmem:[#allocation2 + $0x20] sm:$0xff]
        %v988 = vld [vmem:[#allocation2 + $0x28] sm:$0xff]
        %v989 = vld [vmem:[#allocation2 + $0x30] sm:$0xff]
        %v990 = vld [vmem:[#allocation2 + $0x38] sm:$0xff]
        %v991 = vadd.f32 %v983, %v945
        %v992 = vadd.f32 %v984, %v950
        %v993 = vadd.f32 %v985, %v955
        %v994 = vadd.f32 %v986, %v960
        %v995 = vadd.f32 %v987, %v965
        %v996 = vadd.f32 %v988, %v970
        %v997 = vadd.f32 %v989, %v975
        %v998 = vadd.f32 %v990, %v980
        %999 = vst [vmem:[#allocation2] sm:$0xff] %v991
        %1000 = vst [vmem:[#allocation2 + $0x8] sm:$0xff] %v992
        %1001 = vst [vmem:[#allocation2 + $0x10] sm:$0xff] %v993
        %1002 = vst [vmem:[#allocation2 + $0x18] sm:$0xff] %v994
        %1003 = vst [vmem:[#allocation2 + $0x20] sm:$0xff] %v995
        %1004 = vst [vmem:[#allocation2 + $0x28] sm:$0xff] %v996
        %1005 = vst [vmem:[#allocation2 + $0x30] sm:$0xff] %v997
        %1006 = vst [vmem:[#allocation2 + $0x38] sm:$0xff] %v998
        %v1007 = vld [vmem:[%s842 + $0x1] sm:$0xff]
        %v1008 = vld [vmem:[%s842 + $0x11] sm:$0xff]
        %v1009 = vld [vmem:[%s842 + $0x21] sm:$0xff]
        %v1010 = vld [vmem:[%s842 + $0x31] sm:$0xff]
        %v1011 = vld [vmem:[%s842 + $0x41] sm:$0xff]
        %v1012 = vld [vmem:[%s842 + $0x51] sm:$0xff]
        %v1013 = vld [vmem:[%s842 + $0x61] sm:$0xff]
        %v1014 = vld [vmem:[%s842 + $0x71] sm:$0xff]
        %s1015 = scalar_lea.vmem %s1, 80
        %v1016 = vld [vmem:[%s1015] sm:$0xff]
        %v1017 = vld [vmem:[%s1015 + $0x8] sm:$0xff]
        %v1019 = vsel %vm210, %v1007, 0
        %v1022 = vsel %vm210, %v1008, 0
        %v1025 = vsel %vm210, %v1009, 0
        %v1028 = vsel %vm210, %v1010, 0
        %v1031 = vsel %vm210, %v1011, 0
        %v1034 = vsel %vm210, %v1012, 0
        %v1037 = vsel %vm210, %v1013, 0
        %v1040 = vsel %vm210, %v1014, 0
        %1042 = vmatprep.subr.mxu0 0.0
        %1043 = vmatpush1.msra.mxu0 0.0
        %1044 = vmatprep.subr.mxu0 0.0
        %1045 = vmatpush1.msra.mxu0 0.0
        %1046 = vmatprep.subr.mxu0 0.0
        %1047 = vmatpush1.msra.mxu0 0.0
        %1048 = vmatprep.subr.mxu0 0.0
        %1049 = vmatpush1.msra.mxu0 0.0
        %1050 = vmatprep.subr.mxu0 0.0
        %1051 = vmatpush1.msra.mxu0 0.0
        %1052 = vmatprep.subr.mxu0 0.0
        %1053 = vmatpush1.msra.mxu0 0.0
        %1054 = vmatprep.subr.mxu0 0.0
        %1055 = vmatpush1.msra.mxu0 0.0
        %1056 = vmatprep.subr.mxu0 0.0
        %1057 = vmatpush1.msra.mxu0 0.0
        %1058 = vmatprep.subr.mxu0 0.0
        %1059 = vmatpush1.msra.mxu0 0.0
        %1060 = vmatprep.subr.mxu0 0.0
        %1061 = vmatpush1.msra.mxu0 0.0
        %1062 = vmatprep.subr.mxu0 0.0
        %1063 = vmatpush1.msra.mxu0 0.0
        %1064 = vmatprep.subr.mxu0 0.0
        %1065 = vmatpush1.msra.mxu0 0.0
        %1066 = vmatprep.subr.mxu0 0.0
        %1067 = vmatpush1.msra.mxu0 0.0
        %1068 = vmatprep.subr.mxu0 0.0
        %1069 = vmatpush1.msra.mxu0 0.0
        %1070 = vmatprep.subr.mxu0 0.0
        %1071 = vmatpush1.msra.mxu0 %v1017
        %1072 = vmatprep.subr.mxu0 0.0
        %1073 = vmatpush1.msra.mxu0 %v1016
        %1074 = vmatprep.subr.mxu0 0.0
        %1075 = vmatpush2.msra.mxu0 0.0
        %1076 = vmatprep.subr.mxu0 0.0
        %1077 = vmatpush2.msra.mxu0 0.0
        %1078 = vmatprep.subr.mxu0 0.0
        %1079 = vmatpush2.msra.mxu0 0.0
        %1080 = vmatprep.subr.mxu0 0.0
        %1081 = vmatpush2.msra.mxu0 0.0
        %1082 = vmatprep.subr.mxu0 0.0
        %1083 = vmatpush2.msra.mxu0 0.0
        %1084 = vmatprep.subr.mxu0 0.0
        %1085 = vmatpush2.msra.mxu0 0.0
        %1086 = vmatprep.subr.mxu0 0.0
        %1087 = vmatpush2.msra.mxu0 0.0
        %1088 = vmatprep.subr.mxu0 0.0
        %1089 = vmatpush2.msra.mxu0 0.0
        %1090 = vmatprep.subr.mxu0 0.0
        %1091 = vmatpush2.msra.mxu0 0.0
        %1092 = vmatprep.subr.mxu0 0.0
        %1093 = vmatpush2.msra.mxu0 0.0
        %1094 = vmatprep.subr.mxu0 0.0
        %1095 = vmatpush2.msra.mxu0 0.0
        %1096 = vmatprep.subr.mxu0 0.0
        %1097 = vmatpush2.msra.mxu0 0.0
        %1098 = vmatprep.subr.mxu0 0.0
        %1099 = vmatpush2.msra.mxu0 0.0
        %1100 = vmatprep.subr.mxu0 0.0
        %1101 = vmatpush2.msra.mxu0 0.0
        %1102 = vmatprep.subr.mxu0 0.0
        %1103 = vmatpush2.msra.mxu0 0.0
        %1104 = vmatprep.subr.mxu0 0.0
        %1105 = vmatpush2.msra.mxu0 0.0
        %1106 = vmatprep.mubr.f32.mxu0 0.0
        %1107 = vmatmul.mubr.f32.gmra.mxu0 %v1019
        %v1108 = vpop.f32.mrf.mxu0
        %v1109 = vadd.f32 0.0, %v1108
        %v1110 = vpop.f32.mrf.mxu0
        %1111 = vmatprep.mubr.f32.mxu0 0.0
        %1112 = vmatmul.mubr.f32.gmra.mxu0 %v1022
        %v1113 = vpop.f32.mrf.mxu0
        %v1114 = vadd.f32 0.0, %v1113
        %v1115 = vpop.f32.mrf.mxu0
        %1116 = vmatprep.mubr.f32.mxu0 0.0
        %1117 = vmatmul.mubr.f32.gmra.mxu0 %v1025
        %v1118 = vpop.f32.mrf.mxu0
        %v1119 = vadd.f32 0.0, %v1118
        %v1120 = vpop.f32.mrf.mxu0
        %1121 = vmatprep.mubr.f32.mxu0 0.0
        %1122 = vmatmul.mubr.f32.gmra.mxu0 %v1028
        %v1123 = vpop.f32.mrf.mxu0
        %v1124 = vadd.f32 0.0, %v1123
        %v1125 = vpop.f32.mrf.mxu0
        %1126 = vmatprep.mubr.f32.mxu0 0.0
        %1127 = vmatmul.mubr.f32.gmra.mxu0 %v1031
        %v1128 = vpop.f32.mrf.mxu0
        %v1129 = vadd.f32 0.0, %v1128
        %v1130 = vpop.f32.mrf.mxu0
        %1131 = vmatprep.mubr.f32.mxu0 0.0
        %1132 = vmatmul.mubr.f32.gmra.mxu0 %v1034
        %v1133 = vpop.f32.mrf.mxu0
        %v1134 = vadd.f32 0.0, %v1133
        %v1135 = vpop.f32.mrf.mxu0
        %1136 = vmatprep.mubr.f32.mxu0 0.0
        %1137 = vmatmul.mubr.f32.gmra.mxu0 %v1037
        %v1138 = vpop.f32.mrf.mxu0
        %v1139 = vadd.f32 0.0, %v1138
        %v1140 = vpop.f32.mrf.mxu0
        %1141 = vmatprep.mubr.f32.mxu0 0.0
        %1142 = vmatmul.mubr.f32.gmra.mxu0 %v1040
        %v1143 = vpop.f32.mrf.mxu0
        %v1144 = vadd.f32 0.0, %v1143
        %v1145 = vpop.f32.mrf.mxu0
        %1146 = vdwg.mxu0
        %v1147 = vld [vmem:[#allocation2] sm:$0xff]
        %v1148 = vld [vmem:[#allocation2 + $0x8] sm:$0xff]
        %v1149 = vld [vmem:[#allocation2 + $0x10] sm:$0xff]
        %v1150 = vld [vmem:[#allocation2 + $0x18] sm:$0xff]
        %v1151 = vld [vmem:[#allocation2 + $0x20] sm:$0xff]
        %v1152 = vld [vmem:[#allocation2 + $0x28] sm:$0xff]
        %v1153 = vld [vmem:[#allocation2 + $0x30] sm:$0xff]
        %v1154 = vld [vmem:[#allocation2 + $0x38] sm:$0xff]
        %v1155 = vadd.f32 %v1147, %v1109
        %v1156 = vadd.f32 %v1148, %v1114
        %v1157 = vadd.f32 %v1149, %v1119
        %v1158 = vadd.f32 %v1150, %v1124
        %v1159 = vadd.f32 %v1151, %v1129
        %v1160 = vadd.f32 %v1152, %v1134
        %v1161 = vadd.f32 %v1153, %v1139
        %v1162 = vadd.f32 %v1154, %v1144
        %1163 = vst [vmem:[#allocation2] sm:$0xff] %v1155
        %1164 = vst [vmem:[#allocation2 + $0x8] sm:$0xff] %v1156
        %1165 = vst [vmem:[#allocation2 + $0x10] sm:$0xff] %v1157
        %1166 = vst [vmem:[#allocation2 + $0x18] sm:$0xff] %v1158
        %1167 = vst [vmem:[#allocation2 + $0x20] sm:$0xff] %v1159
        %1168 = vst [vmem:[#allocation2 + $0x28] sm:$0xff] %v1160
        %1169 = vst [vmem:[#allocation2 + $0x30] sm:$0xff] %v1161
        %1170 = vst [vmem:[#allocation2 + $0x38] sm:$0xff] %v1162
        %v1171 = vld [vmem:[%s842 + $0x2] sm:$0xff]
        %v1172 = vld [vmem:[%s842 + $0x12] sm:$0xff]
        %v1173 = vld [vmem:[%s842 + $0x22] sm:$0xff]
        %v1174 = vld [vmem:[%s842 + $0x32] sm:$0xff]
        %v1175 = vld [vmem:[%s842 + $0x42] sm:$0xff]
        %v1176 = vld [vmem:[%s842 + $0x52] sm:$0xff]
        %v1177 = vld [vmem:[%s842 + $0x62] sm:$0xff]
        %v1178 = vld [vmem:[%s842 + $0x72] sm:$0xff]
        %s1179 = scalar_lea.vmem %s1, 96
        %v1180 = vld [vmem:[%s1179] sm:$0xff]
        %v1181 = vld [vmem:[%s1179 + $0x8] sm:$0xff]
        %v1183 = vsel %vm210, %v1171, 0
        %v1186 = vsel %vm210, %v1172, 0
        %v1189 = vsel %vm210, %v1173, 0
        %v1192 = vsel %vm210, %v1174, 0
        %v1195 = vsel %vm210, %v1175, 0
        %v1198 = vsel %vm210, %v1176, 0
        %v1201 = vsel %vm210, %v1177, 0
        %v1204 = vsel %vm210, %v1178, 0
        %1206 = vmatprep.subr.mxu0 0.0
        %1207 = vmatpush1.msra.mxu0 0.0
        %1208 = vmatprep.subr.mxu0 0.0
        %1209 = vmatpush1.msra.mxu0 0.0
        %1210 = vmatprep.subr.mxu0 0.0
        %1211 = vmatpush1.msra.mxu0 0.0
        %1212 = vmatprep.subr.mxu0 0.0
        %1213 = vmatpush1.msra.mxu0 0.0
        %1214 = vmatprep.subr.mxu0 0.0
        %1215 = vmatpush1.msra.mxu0 0.0
        %1216 = vmatprep.subr.mxu0 0.0
        %1217 = vmatpush1.msra.mxu0 0.0
        %1218 = vmatprep.subr.mxu0 0.0
        %1219 = vmatpush1.msra.mxu0 0.0
        %1220 = vmatprep.subr.mxu0 0.0
        %1221 = vmatpush1.msra.mxu0 0.0
        %1222 = vmatprep.subr.mxu0 0.0
        %1223 = vmatpush1.msra.mxu0 0.0
        %1224 = vmatprep.subr.mxu0 0.0
        %1225 = vmatpush1.msra.mxu0 0.0
        %1226 = vmatprep.subr.mxu0 0.0
        %1227 = vmatpush1.msra.mxu0 0.0
        %1228 = vmatprep.subr.mxu0 0.0
        %1229 = vmatpush1.msra.mxu0 0.0
        %1230 = vmatprep.subr.mxu0 0.0
        %1231 = vmatpush1.msra.mxu0 0.0
        %1232 = vmatprep.subr.mxu0 0.0
        %1233 = vmatpush1.msra.mxu0 0.0
        %1234 = vmatprep.subr.mxu0 0.0
        %1235 = vmatpush1.msra.mxu0 %v1181
        %1236 = vmatprep.subr.mxu0 0.0
        %1237 = vmatpush1.msra.mxu0 %v1180
        %1238 = vmatprep.subr.mxu0 0.0
        %1239 = vmatpush2.msra.mxu0 0.0
        %1240 = vmatprep.subr.mxu0 0.0
        %1241 = vmatpush2.msra.mxu0 0.0
        %1242 = vmatprep.subr.mxu0 0.0
        %1243 = vmatpush2.msra.mxu0 0.0
        %1244 = vmatprep.subr.mxu0 0.0
        %1245 = vmatpush2.msra.mxu0 0.0
        %1246 = vmatprep.subr.mxu0 0.0
        %1247 = vmatpush2.msra.mxu0 0.0
        %1248 = vmatprep.subr.mxu0 0.0
        %1249 = vmatpush2.msra.mxu0 0.0
        %1250 = vmatprep.subr.mxu0 0.0
        %1251 = vmatpush2.msra.mxu0 0.0
        %1252 = vmatprep.subr.mxu0 0.0
        %1253 = vmatpush2.msra.mxu0 0.0
        %1254 = vmatprep.subr.mxu0 0.0
        %1255 = vmatpush2.msra.mxu0 0.0
        %1256 = vmatprep.subr.mxu0 0.0
        %1257 = vmatpush2.msra.mxu0 0.0
        %1258 = vmatprep.subr.mxu0 0.0
        %1259 = vmatpush2.msra.mxu0 0.0
        %1260 = vmatprep.subr.mxu0 0.0
        %1261 = vmatpush2.msra.mxu0 0.0
        %1262 = vmatprep.subr.mxu0 0.0
        %1263 = vmatpush2.msra.mxu0 0.0
        %1264 = vmatprep.subr.mxu0 0.0
        %1265 = vmatpush2.msra.mxu0 0.0
        %1266 = vmatprep.subr.mxu0 0.0
        %1267 = vmatpush2.msra.mxu0 0.0
        %1268 = vmatprep.subr.mxu0 0.0
        %1269 = vmatpush2.msra.mxu0 0.0
        %1270 = vmatprep.mubr.f32.mxu0 0.0
        %1271 = vmatmul.mubr.f32.gmra.mxu0 %v1183
        %v1272 = vpop.f32.mrf.mxu0
        %v1273 = vadd.f32 0.0, %v1272
        %v1274 = vpop.f32.mrf.mxu0
        %1275 = vmatprep.mubr.f32.mxu0 0.0
        %1276 = vmatmul.mubr.f32.gmra.mxu0 %v1186
        %v1277 = vpop.f32.mrf.mxu0
        %v1278 = vadd.f32 0.0, %v1277
        %v1279 = vpop.f32.mrf.mxu0
        %1280 = vmatprep.mubr.f32.mxu0 0.0
        %1281 = vmatmul.mubr.f32.gmra.mxu0 %v1189
        %v1282 = vpop.f32.mrf.mxu0
        %v1283 = vadd.f32 0.0, %v1282
        %v1284 = vpop.f32.mrf.mxu0
        %1285 = vmatprep.mubr.f32.mxu0 0.0
        %1286 = vmatmul.mubr.f32.gmra.mxu0 %v1192
        %v1287 = vpop.f32.mrf.mxu0
        %v1288 = vadd.f32 0.0, %v1287
        %v1289 = vpop.f32.mrf.mxu0
        %1290 = vmatprep.mubr.f32.mxu0 0.0
        %1291 = vmatmul.mubr.f32.gmra.mxu0 %v1195
        %v1292 = vpop.f32.mrf.mxu0
        %v1293 = vadd.f32 0.0, %v1292
        %v1294 = vpop.f32.mrf.mxu0
        %1295 = vmatprep.mubr.f32.mxu0 0.0
        %1296 = vmatmul.mubr.f32.gmra.mxu0 %v1198
        %v1297 = vpop.f32.mrf.mxu0
        %v1298 = vadd.f32 0.0, %v1297
        %v1299 = vpop.f32.mrf.mxu0
        %1300 = vmatprep.mubr.f32.mxu0 0.0
        %1301 = vmatmul.mubr.f32.gmra.mxu0 %v1201
        %v1302 = vpop.f32.mrf.mxu0
        %v1303 = vadd.f32 0.0, %v1302
        %v1304 = vpop.f32.mrf.mxu0
        %1305 = vmatprep.mubr.f32.mxu0 0.0
        %1306 = vmatmul.mubr.f32.gmra.mxu0 %v1204
        %v1307 = vpop.f32.mrf.mxu0
        %v1308 = vadd.f32 0.0, %v1307
        %v1309 = vpop.f32.mrf.mxu0
        %1310 = vdwg.mxu0
        %v1311 = vld [vmem:[#allocation2] sm:$0xff]
        %v1312 = vld [vmem:[#allocation2 + $0x8] sm:$0xff]
        %v1313 = vld [vmem:[#allocation2 + $0x10] sm:$0xff]
        %v1314 = vld [vmem:[#allocation2 + $0x18] sm:$0xff]
        %v1315 = vld [vmem:[#allocation2 + $0x20] sm:$0xff]
        %v1316 = vld [vmem:[#allocation2 + $0x28] sm:$0xff]
        %v1317 = vld [vmem:[#allocation2 + $0x30] sm:$0xff]
        %v1318 = vld [vmem:[#allocation2 + $0x38] sm:$0xff]
        %v1319 = vadd.f32 %v1311, %v1273
        %v1320 = vadd.f32 %v1312, %v1278
        %v1321 = vadd.f32 %v1313, %v1283
        %v1322 = vadd.f32 %v1314, %v1288
        %v1323 = vadd.f32 %v1315, %v1293
        %v1324 = vadd.f32 %v1316, %v1298
        %v1325 = vadd.f32 %v1317, %v1303
        %v1326 = vadd.f32 %v1318, %v1308
        %1327 = vst [vmem:[#allocation2] sm:$0xff] %v1319
        %1328 = vst [vmem:[#allocation2 + $0x8] sm:$0xff] %v1320
        %1329 = vst [vmem:[#allocation2 + $0x10] sm:$0xff] %v1321
        %1330 = vst [vmem:[#allocation2 + $0x18] sm:$0xff] %v1322
        %1331 = vst [vmem:[#allocation2 + $0x20] sm:$0xff] %v1323
        %1332 = vst [vmem:[#allocation2 + $0x28] sm:$0xff] %v1324
        %1333 = vst [vmem:[#allocation2 + $0x30] sm:$0xff] %v1325
        %1334 = vst [vmem:[#allocation2 + $0x38] sm:$0xff] %v1326
        %v1335 = vld [vmem:[%s842 + $0x3] sm:$0xff]
        %v1336 = vld [vmem:[%s842 + $0x13] sm:$0xff]
        %v1337 = vld [vmem:[%s842 + $0x23] sm:$0xff]
        %v1338 = vld [vmem:[%s842 + $0x33] sm:$0xff]
        %v1339 = vld [vmem:[%s842 + $0x43] sm:$0xff]
        %v1340 = vld [vmem:[%s842 + $0x53] sm:$0xff]
        %v1341 = vld [vmem:[%s842 + $0x63] sm:$0xff]
        %v1342 = vld [vmem:[%s842 + $0x73] sm:$0xff]
        %s1343 = scalar_lea.vmem %s1, 112
        %v1344 = vld [vmem:[%s1343] sm:$0xff]
        %v1345 = vld [vmem:[%s1343 + $0x8] sm:$0xff]
        %v1347 = vsel %vm210, %v1335, 0
        %v1350 = vsel %vm210, %v1336, 0
        %v1353 = vsel %vm210, %v1337, 0
        %v1356 = vsel %vm210, %v1338, 0
        %v1359 = vsel %vm210, %v1339, 0
        %v1362 = vsel %vm210, %v1340, 0
        %v1365 = vsel %vm210, %v1341, 0
        %v1368 = vsel %vm210, %v1342, 0
        %1370 = vmatprep.subr.mxu0 0.0
        %1371 = vmatpush1.msra.mxu0 0.0
        %1372 = vmatprep.subr.mxu0 0.0
        %1373 = vmatpush1.msra.mxu0 0.0
        %1374 = vmatprep.subr.mxu0 0.0
        %1375 = vmatpush1.msra.mxu0 0.0
        %1376 = vmatprep.subr.mxu0 0.0
        %1377 = vmatpush1.msra.mxu0 0.0
        %1378 = vmatprep.subr.mxu0 0.0
        %1379 = vmatpush1.msra.mxu0 0.0
        %1380 = vmatprep.subr.mxu0 0.0
        %1381 = vmatpush1.msra.mxu0 0.0
        %1382 = vmatprep.subr.mxu0 0.0
        %1383 = vmatpush1.msra.mxu0 0.0
        %1384 = vmatprep.subr.mxu0 0.0
        %1385 = vmatpush1.msra.mxu0 0.0
        %1386 = vmatprep.subr.mxu0 0.0
        %1387 = vmatpush1.msra.mxu0 0.0
        %1388 = vmatprep.subr.mxu0 0.0
        %1389 = vmatpush1.msra.mxu0 0.0
        %1390 = vmatprep.subr.mxu0 0.0
        %1391 = vmatpush1.msra.mxu0 0.0
        %1392 = vmatprep.subr.mxu0 0.0
        %1393 = vmatpush1.msra.mxu0 0.0
        %1394 = vmatprep.subr.mxu0 0.0
        %1395 = vmatpush1.msra.mxu0 0.0
        %1396 = vmatprep.subr.mxu0 0.0
        %1397 = vmatpush1.msra.mxu0 0.0
        %1398 = vmatprep.subr.mxu0 0.0
        %1399 = vmatpush1.msra.mxu0 %v1345
        %1400 = vmatprep.subr.mxu0 0.0
        %1401 = vmatpush1.msra.mxu0 %v1344
        %1402 = vmatprep.subr.mxu0 0.0
        %1403 = vmatpush2.msra.mxu0 0.0
        %1404 = vmatprep.subr.mxu0 0.0
        %1405 = vmatpush2.msra.mxu0 0.0
        %1406 = vmatprep.subr.mxu0 0.0
        %1407 = vmatpush2.msra.mxu0 0.0
        %1408 = vmatprep.subr.mxu0 0.0
        %1409 = vmatpush2.msra.mxu0 0.0
        %1410 = vmatprep.subr.mxu0 0.0
        %1411 = vmatpush2.msra.mxu0 0.0
        %1412 = vmatprep.subr.mxu0 0.0
        %1413 = vmatpush2.msra.mxu0 0.0
        %1414 = vmatprep.subr.mxu0 0.0
        %1415 = vmatpush2.msra.mxu0 0.0
        %1416 = vmatprep.subr.mxu0 0.0
        %1417 = vmatpush2.msra.mxu0 0.0
        %1418 = vmatprep.subr.mxu0 0.0
        %1419 = vmatpush2.msra.mxu0 0.0
        %1420 = vmatprep.subr.mxu0 0.0
        %1421 = vmatpush2.msra.mxu0 0.0
        %1422 = vmatprep.subr.mxu0 0.0
        %1423 = vmatpush2.msra.mxu0 0.0
        %1424 = vmatprep.subr.mxu0 0.0
        %1425 = vmatpush2.msra.mxu0 0.0
        %1426 = vmatprep.subr.mxu0 0.0
        %1427 = vmatpush2.msra.mxu0 0.0
        %1428 = vmatprep.subr.mxu0 0.0
        %1429 = vmatpush2.msra.mxu0 0.0
        %1430 = vmatprep.subr.mxu0 0.0
        %1431 = vmatpush2.msra.mxu0 0.0
        %1432 = vmatprep.subr.mxu0 0.0
        %1433 = vmatpush2.msra.mxu0 0.0
        %1434 = vmatprep.mubr.f32.mxu0 0.0
        %1435 = vmatmul.mubr.f32.gmra.mxu0 %v1347
        %v1436 = vpop.f32.mrf.mxu0
        %v1437 = vadd.f32 0.0, %v1436
        %v1438 = vpop.f32.mrf.mxu0
        %1439 = vmatprep.mubr.f32.mxu0 0.0
        %1440 = vmatmul.mubr.f32.gmra.mxu0 %v1350
        %v1441 = vpop.f32.mrf.mxu0
        %v1442 = vadd.f32 0.0, %v1441
        %v1443 = vpop.f32.mrf.mxu0
        %1444 = vmatprep.mubr.f32.mxu0 0.0
        %1445 = vmatmul.mubr.f32.gmra.mxu0 %v1353
        %v1446 = vpop.f32.mrf.mxu0
        %v1447 = vadd.f32 0.0, %v1446
        %v1448 = vpop.f32.mrf.mxu0
        %1449 = vmatprep.mubr.f32.mxu0 0.0
        %1450 = vmatmul.mubr.f32.gmra.mxu0 %v1356
        %v1451 = vpop.f32.mrf.mxu0
        %v1452 = vadd.f32 0.0, %v1451
        %v1453 = vpop.f32.mrf.mxu0
        %1454 = vmatprep.mubr.f32.mxu0 0.0
        %1455 = vmatmul.mubr.f32.gmra.mxu0 %v1359
        %v1456 = vpop.f32.mrf.mxu0
        %v1457 = vadd.f32 0.0, %v1456
        %v1458 = vpop.f32.mrf.mxu0
        %1459 = vmatprep.mubr.f32.mxu0 0.0
        %1460 = vmatmul.mubr.f32.gmra.mxu0 %v1362
        %v1461 = vpop.f32.mrf.mxu0
        %v1462 = vadd.f32 0.0, %v1461
        %v1463 = vpop.f32.mrf.mxu0
        %1464 = vmatprep.mubr.f32.mxu0 0.0
        %1465 = vmatmul.mubr.f32.gmra.mxu0 %v1365
        %v1466 = vpop.f32.mrf.mxu0
        %v1467 = vadd.f32 0.0, %v1466
        %v1468 = vpop.f32.mrf.mxu0
        %1469 = vmatprep.mubr.f32.mxu0 0.0
        %1470 = vmatmul.mubr.f32.gmra.mxu0 %v1368
        %v1471 = vpop.f32.mrf.mxu0
        %v1472 = vadd.f32 0.0, %v1471
        %v1473 = vpop.f32.mrf.mxu0
        %1474 = vdwg.mxu0
        %v1475 = vld [vmem:[#allocation2] sm:$0xff]
        %v1476 = vld [vmem:[#allocation2 + $0x8] sm:$0xff]
        %v1477 = vld [vmem:[#allocation2 + $0x10] sm:$0xff]
        %v1478 = vld [vmem:[#allocation2 + $0x18] sm:$0xff]
        %v1479 = vld [vmem:[#allocation2 + $0x20] sm:$0xff]
        %v1480 = vld [vmem:[#allocation2 + $0x28] sm:$0xff]
        %v1481 = vld [vmem:[#allocation2 + $0x30] sm:$0xff]
        %v1482 = vld [vmem:[#allocation2 + $0x38] sm:$0xff]
        %v1483 = vadd.f32 %v1475, %v1437
        %v1484 = vadd.f32 %v1476, %v1442
        %v1485 = vadd.f32 %v1477, %v1447
        %v1486 = vadd.f32 %v1478, %v1452
        %v1487 = vadd.f32 %v1479, %v1457
        %v1488 = vadd.f32 %v1480, %v1462
        %v1489 = vadd.f32 %v1481, %v1467
        %v1490 = vadd.f32 %v1482, %v1472
        %1491 = vst [vmem:[#allocation2] sm:$0xff] %v1483
        %1492 = vst [vmem:[#allocation2 + $0x8] sm:$0xff] %v1484
        %1493 = vst [vmem:[#allocation2 + $0x10] sm:$0xff] %v1485
        %1494 = vst [vmem:[#allocation2 + $0x18] sm:$0xff] %v1486
        %1495 = vst [vmem:[#allocation2 + $0x20] sm:$0xff] %v1487
        %1496 = vst [vmem:[#allocation2 + $0x28] sm:$0xff] %v1488
        %1497 = vst [vmem:[#allocation2 + $0x30] sm:$0xff] %v1489
        %1498 = vst [vmem:[#allocation2 + $0x38] sm:$0xff] %v1490
        %s1499 = sadd.s32 %s197, 2
        %s1500 = smul.u32 %s1499, 16
        %s1501 = scalar_lea.vmem %s195, %s1500
        %v1502 = vld [vmem:[%s1501] sm:$0xff]
        %v1503 = vld [vmem:[%s1501 + $0x10] sm:$0xff]
        %v1504 = vld [vmem:[%s1501 + $0x20] sm:$0xff]
        %v1505 = vld [vmem:[%s1501 + $0x30] sm:$0xff]
        %v1506 = vld [vmem:[%s1501 + $0x40] sm:$0xff]
        %v1507 = vld [vmem:[%s1501 + $0x50] sm:$0xff]
        %v1508 = vld [vmem:[%s1501 + $0x60] sm:$0xff]
        %v1509 = vld [vmem:[%s1501 + $0x70] sm:$0xff]
        %s1510 = scalar_lea.vmem %s1, 128
        %v1511 = vld [vmem:[%s1510] sm:$0xff]
        %v1512 = vld [vmem:[%s1510 + $0x8] sm:$0xff]
        %v1514 = vsel %vm210, %v1502, 0
        %v1517 = vsel %vm210, %v1503, 0
        %v1520 = vsel %vm210, %v1504, 0
        %v1523 = vsel %vm210, %v1505, 0
        %v1526 = vsel %vm210, %v1506, 0
        %v1529 = vsel %vm210, %v1507, 0
        %v1532 = vsel %vm210, %v1508, 0
        %v1535 = vsel %vm210, %v1509, 0
        %1537 = vmatprep.subr.mxu0 0.0
        %1538 = vmatpush1.msra.mxu0 0.0
        %1539 = vmatprep.subr.mxu0 0.0
        %1540 = vmatpush1.msra.mxu0 0.0
        %1541 = vmatprep.subr.mxu0 0.0
        %1542 = vmatpush1.msra.mxu0 0.0
        %1543 = vmatprep.subr.mxu0 0.0
        %1544 = vmatpush1.msra.mxu0 0.0
        %1545 = vmatprep.subr.mxu0 0.0
        %1546 = vmatpush1.msra.mxu0 0.0
        %1547 = vmatprep.subr.mxu0 0.0
        %1548 = vmatpush1.msra.mxu0 0.0
        %1549 = vmatprep.subr.mxu0 0.0
        %1550 = vmatpush1.msra.mxu0 0.0
        %1551 = vmatprep.subr.mxu0 0.0
        %1552 = vmatpush1.msra.mxu0 0.0
        %1553 = vmatprep.subr.mxu0 0.0
        %1554 = vmatpush1.msra.mxu0 0.0
        %1555 = vmatprep.subr.mxu0 0.0
        %1556 = vmatpush1.msra.mxu0 0.0
        %1557 = vmatprep.subr.mxu0 0.0
        %1558 = vmatpush1.msra.mxu0 0.0
        %1559 = vmatprep.subr.mxu0 0.0
        %1560 = vmatpush1.msra.mxu0 0.0
        %1561 = vmatprep.subr.mxu0 0.0
        %1562 = vmatpush1.msra.mxu0 0.0
        %1563 = vmatprep.subr.mxu0 0.0
        %1564 = vmatpush1.msra.mxu0 0.0
        %1565 = vmatprep.subr.mxu0 0.0
        %1566 = vmatpush1.msra.mxu0 %v1512
        %1567 = vmatprep.subr.mxu0 0.0
        %1568 = vmatpush1.msra.mxu0 %v1511
        %1569 = vmatprep.subr.mxu0 0.0
        %1570 = vmatpush2.msra.mxu0 0.0
        %1571 = vmatprep.subr.mxu0 0.0
        %1572 = vmatpush2.msra.mxu0 0.0
        %1573 = vmatprep.subr.mxu0 0.0
        %1574 = vmatpush2.msra.mxu0 0.0
        %1575 = vmatprep.subr.mxu0 0.0
        %1576 = vmatpush2.msra.mxu0 0.0
        %1577 = vmatprep.subr.mxu0 0.0
        %1578 = vmatpush2.msra.mxu0 0.0
        %1579 = vmatprep.subr.mxu0 0.0
        %1580 = vmatpush2.msra.mxu0 0.0
        %1581 = vmatprep.subr.mxu0 0.0
        %1582 = vmatpush2.msra.mxu0 0.0
        %1583 = vmatprep.subr.mxu0 0.0
        %1584 = vmatpush2.msra.mxu0 0.0
        %1585 = vmatprep.subr.mxu0 0.0
        %1586 = vmatpush2.msra.mxu0 0.0
        %1587 = vmatprep.subr.mxu0 0.0
        %1588 = vmatpush2.msra.mxu0 0.0
        %1589 = vmatprep.subr.mxu0 0.0
        %1590 = vmatpush2.msra.mxu0 0.0
        %1591 = vmatprep.subr.mxu0 0.0
        %1592 = vmatpush2.msra.mxu0 0.0
        %1593 = vmatprep.subr.mxu0 0.0
        %1594 = vmatpush2.msra.mxu0 0.0
        %1595 = vmatprep.subr.mxu0 0.0
        %1596 = vmatpush2.msra.mxu0 0.0
        %1597 = vmatprep.subr.mxu0 0.0
        %1598 = vmatpush2.msra.mxu0 0.0
        %1599 = vmatprep.subr.mxu0 0.0
        %1600 = vmatpush2.msra.mxu0 0.0
        %1601 = vmatprep.mubr.f32.mxu0 0.0
        %1602 = vmatmul.mubr.f32.gmra.mxu0 %v1514
        %v1603 = vpop.f32.mrf.mxu0
        %v1604 = vadd.f32 0.0, %v1603
        %v1605 = vpop.f32.mrf.mxu0
        %1606 = vmatprep.mubr.f32.mxu0 0.0
        %1607 = vmatmul.mubr.f32.gmra.mxu0 %v1517
        %v1608 = vpop.f32.mrf.mxu0
        %v1609 = vadd.f32 0.0, %v1608
        %v1610 = vpop.f32.mrf.mxu0
        %1611 = vmatprep.mubr.f32.mxu0 0.0
        %1612 = vmatmul.mubr.f32.gmra.mxu0 %v1520
        %v1613 = vpop.f32.mrf.mxu0
        %v1614 = vadd.f32 0.0, %v1613
        %v1615 = vpop.f32.mrf.mxu0
        %1616 = vmatprep.mubr.f32.mxu0 0.0
        %1617 = vmatmul.mubr.f32.gmra.mxu0 %v1523
        %v1618 = vpop.f32.mrf.mxu0
        %v1619 = vadd.f32 0.0, %v1618
        %v1620 = vpop.f32.mrf.mxu0
        %1621 = vmatprep.mubr.f32.mxu0 0.0
        %1622 = vmatmul.mubr.f32.gmra.mxu0 %v1526
        %v1623 = vpop.f32.mrf.mxu0
        %v1624 = vadd.f32 0.0, %v1623
        %v1625 = vpop.f32.mrf.mxu0
        %1626 = vmatprep.mubr.f32.mxu0 0.0
        %1627 = vmatmul.mubr.f32.gmra.mxu0 %v1529
        %v1628 = vpop.f32.mrf.mxu0
        %v1629 = vadd.f32 0.0, %v1628
        %v1630 = vpop.f32.mrf.mxu0
        %1631 = vmatprep.mubr.f32.mxu0 0.0
        %1632 = vmatmul.mubr.f32.gmra.mxu0 %v1532
        %v1633 = vpop.f32.mrf.mxu0
        %v1634 = vadd.f32 0.0, %v1633
        %v1635 = vpop.f32.mrf.mxu0
        %1636 = vmatprep.mubr.f32.mxu0 0.0
        %1637 = vmatmul.mubr.f32.gmra.mxu0 %v1535
        %v1638 = vpop.f32.mrf.mxu0
        %v1639 = vadd.f32 0.0, %v1638
        %v1640 = vpop.f32.mrf.mxu0
        %1641 = vdwg.mxu0
        %v1642 = vld [vmem:[#allocation2] sm:$0xff]
        %v1643 = vld [vmem:[#allocation2 + $0x8] sm:$0xff]
        %v1644 = vld [vmem:[#allocation2 + $0x10] sm:$0xff]
        %v1645 = vld [vmem:[#allocation2 + $0x18] sm:$0xff]
        %v1646 = vld [vmem:[#allocation2 + $0x20] sm:$0xff]
        %v1647 = vld [vmem:[#allocation2 + $0x28] sm:$0xff]
        %v1648 = vld [vmem:[#allocation2 + $0x30] sm:$0xff]
        %v1649 = vld [vmem:[#allocation2 + $0x38] sm:$0xff]
        %v1650 = vadd.f32 %v1642, %v1604
        %v1651 = vadd.f32 %v1643, %v1609
        %v1652 = vadd.f32 %v1644, %v1614
        %v1653 = vadd.f32 %v1645, %v1619
        %v1654 = vadd.f32 %v1646, %v1624
        %v1655 = vadd.f32 %v1647, %v1629
        %v1656 = vadd.f32 %v1648, %v1634
        %v1657 = vadd.f32 %v1649, %v1639
        %1658 = vst [vmem:[#allocation2] sm:$0xff] %v1650
        %1659 = vst [vmem:[#allocation2 + $0x8] sm:$0xff] %v1651
        %1660 = vst [vmem:[#allocation2 + $0x10] sm:$0xff] %v1652
        %1661 = vst [vmem:[#allocation2 + $0x18] sm:$0xff] %v1653
        %1662 = vst [vmem:[#allocation2 + $0x20] sm:$0xff] %v1654
        %1663 = vst [vmem:[#allocation2 + $0x28] sm:$0xff] %v1655
        %1664 = vst [vmem:[#allocation2 + $0x30] sm:$0xff] %v1656
        %1665 = vst [vmem:[#allocation2 + $0x38] sm:$0xff] %v1657
        %v1666 = vld [vmem:[%s1501 + $0x1] sm:$0xff]
        %v1667 = vld [vmem:[%s1501 + $0x11] sm:$0xff]
        %v1668 = vld [vmem:[%s1501 + $0x21] sm:$0xff]
        %v1669 = vld [vmem:[%s1501 + $0x31] sm:$0xff]
        %v1670 = vld [vmem:[%s1501 + $0x41] sm:$0xff]
        %v1671 = vld [vmem:[%s1501 + $0x51] sm:$0xff]
        %v1672 = vld [vmem:[%s1501 + $0x61] sm:$0xff]
        %v1673 = vld [vmem:[%s1501 + $0x71] sm:$0xff]
        %s1674 = scalar_lea.vmem %s1, 144
        %v1675 = vld [vmem:[%s1674] sm:$0xff]
        %v1676 = vld [vmem:[%s1674 + $0x8] sm:$0xff]
        %v1678 = vsel %vm210, %v1666, 0
        %v1681 = vsel %vm210, %v1667, 0
        %v1684 = vsel %vm210, %v1668, 0
        %v1687 = vsel %vm210, %v1669, 0
        %v1690 = vsel %vm210, %v1670, 0
        %v1693 = vsel %vm210, %v1671, 0
        %v1696 = vsel %vm210, %v1672, 0
        %v1699 = vsel %vm210, %v1673, 0
        %1701 = vmatprep.subr.mxu0 0.0
        %1702 = vmatpush1.msra.mxu0 0.0
        %1703 = vmatprep.subr.mxu0 0.0
        %1704 = vmatpush1.msra.mxu0 0.0
        %1705 = vmatprep.subr.mxu0 0.0
        %1706 = vmatpush1.msra.mxu0 0.0
        %1707 = vmatprep.subr.mxu0 0.0
        %1708 = vmatpush1.msra.mxu0 0.0
        %1709 = vmatprep.subr.mxu0 0.0
        %1710 = vmatpush1.msra.mxu0 0.0
        %1711 = vmatprep.subr.mxu0 0.0
        %1712 = vmatpush1.msra.mxu0 0.0
        %1713 = vmatprep.subr.mxu0 0.0
        %1714 = vmatpush1.msra.mxu0 0.0
        %1715 = vmatprep.subr.mxu0 0.0
        %1716 = vmatpush1.msra.mxu0 0.0
        %1717 = vmatprep.subr.mxu0 0.0
        %1718 = vmatpush1.msra.mxu0 0.0
        %1719 = vmatprep.subr.mxu0 0.0
        %1720 = vmatpush1.msra.mxu0 0.0
        %1721 = vmatprep.subr.mxu0 0.0
        %1722 = vmatpush1.msra.mxu0 0.0
        %1723 = vmatprep.subr.mxu0 0.0
        %1724 = vmatpush1.msra.mxu0 0.0
        %1725 = vmatprep.subr.mxu0 0.0
        %1726 = vmatpush1.msra.mxu0 0.0
        %1727 = vmatprep.subr.mxu0 0.0
        %1728 = vmatpush1.msra.mxu0 0.0
        %1729 = vmatprep.subr.mxu0 0.0
        %1730 = vmatpush1.msra.mxu0 %v1676
        %1731 = vmatprep.subr.mxu0 0.0
        %1732 = vmatpush1.msra.mxu0 %v1675
        %1733 = vmatprep.subr.mxu0 0.0
        %1734 = vmatpush2.msra.mxu0 0.0
        %1735 = vmatprep.subr.mxu0 0.0
        %1736 = vmatpush2.msra.mxu0 0.0
        %1737 = vmatprep.subr.mxu0 0.0
        %1738 = vmatpush2.msra.mxu0 0.0
        %1739 = vmatprep.subr.mxu0 0.0
        %1740 = vmatpush2.msra.mxu0 0.0
        %1741 = vmatprep.subr.mxu0 0.0
        %1742 = vmatpush2.msra.mxu0 0.0
        %1743 = vmatprep.subr.mxu0 0.0
        %1744 = vmatpush2.msra.mxu0 0.0
        %1745 = vmatprep.subr.mxu0 0.0
        %1746 = vmatpush2.msra.mxu0 0.0
        %1747 = vmatprep.subr.mxu0 0.0
        %1748 = vmatpush2.msra.mxu0 0.0
        %1749 = vmatprep.subr.mxu0 0.0
        %1750 = vmatpush2.msra.mxu0 0.0
        %1751 = vmatprep.subr.mxu0 0.0
        %1752 = vmatpush2.msra.mxu0 0.0
        %1753 = vmatprep.subr.mxu0 0.0
        %1754 = vmatpush2.msra.mxu0 0.0
        %1755 = vmatprep.subr.mxu0 0.0
        %1756 = vmatpush2.msra.mxu0 0.0
        %1757 = vmatprep.subr.mxu0 0.0
        %1758 = vmatpush2.msra.mxu0 0.0
        %1759 = vmatprep.subr.mxu0 0.0
        %1760 = vmatpush2.msra.mxu0 0.0
        %1761 = vmatprep.subr.mxu0 0.0
        %1762 = vmatpush2.msra.mxu0 0.0
        %1763 = vmatprep.subr.mxu0 0.0
        %1764 = vmatpush2.msra.mxu0 0.0
        %1765 = vmatprep.mubr.f32.mxu0 0.0
        %1766 = vmatmul.mubr.f32.gmra.mxu0 %v1678
        %v1767 = vpop.f32.mrf.mxu0
        %v1768 = vadd.f32 0.0, %v1767
        %v1769 = vpop.f32.mrf.mxu0
        %1770 = vmatprep.mubr.f32.mxu0 0.0
        %1771 = vmatmul.mubr.f32.gmra.mxu0 %v1681
        %v1772 = vpop.f32.mrf.mxu0
        %v1773 = vadd.f32 0.0, %v1772
        %v1774 = vpop.f32.mrf.mxu0
        %1775 = vmatprep.mubr.f32.mxu0 0.0
        %1776 = vmatmul.mubr.f32.gmra.mxu0 %v1684
        %v1777 = vpop.f32.mrf.mxu0
        %v1778 = vadd.f32 0.0, %v1777
        %v1779 = vpop.f32.mrf.mxu0
        %1780 = vmatprep.mubr.f32.mxu0 0.0
        %1781 = vmatmul.mubr.f32.gmra.mxu0 %v1687
        %v1782 = vpop.f32.mrf.mxu0
        %v1783 = vadd.f32 0.0, %v1782
        %v1784 = vpop.f32.mrf.mxu0
        %1785 = vmatprep.mubr.f32.mxu0 0.0
        %1786 = vmatmul.mubr.f32.gmra.mxu0 %v1690
        %v1787 = vpop.f32.mrf.mxu0
        %v1788 = vadd.f32 0.0, %v1787
        %v1789 = vpop.f32.mrf.mxu0
        %1790 = vmatprep.mubr.f32.mxu0 0.0
        %1791 = vmatmul.mubr.f32.gmra.mxu0 %v1693
        %v1792 = vpop.f32.mrf.mxu0
        %v1793 = vadd.f32 0.0, %v1792
        %v1794 = vpop.f32.mrf.mxu0
        %1795 = vmatprep.mubr.f32.mxu0 0.0
        %1796 = vmatmul.mubr.f32.gmra.mxu0 %v1696
        %v1797 = vpop.f32.mrf.mxu0
        %v1798 = vadd.f32 0.0, %v1797
        %v1799 = vpop.f32.mrf.mxu0
        %1800 = vmatprep.mubr.f32.mxu0 0.0
        %1801 = vmatmul.mubr.f32.gmra.mxu0 %v1699
        %v1802 = vpop.f32.mrf.mxu0
        %v1803 = vadd.f32 0.0, %v1802
        %v1804 = vpop.f32.mrf.mxu0
        %1805 = vdwg.mxu0
        %v1806 = vld [vmem:[#allocation2] sm:$0xff]
        %v1807 = vld [vmem:[#allocation2 + $0x8] sm:$0xff]
        %v1808 = vld [vmem:[#allocation2 + $0x10] sm:$0xff]
        %v1809 = vld [vmem:[#allocation2 + $0x18] sm:$0xff]
        %v1810 = vld [vmem:[#allocation2 + $0x20] sm:$0xff]
        %v1811 = vld [vmem:[#allocation2 + $0x28] sm:$0xff]
        %v1812 = vld [vmem:[#allocation2 + $0x30] sm:$0xff]
        %v1813 = vld [vmem:[#allocation2 + $0x38] sm:$0xff]
        %v1814 = vadd.f32 %v1806, %v1768
        %v1815 = vadd.f32 %v1807, %v1773
        %v1816 = vadd.f32 %v1808, %v1778
        %v1817 = vadd.f32 %v1809, %v1783
        %v1818 = vadd.f32 %v1810, %v1788
        %v1819 = vadd.f32 %v1811, %v1793
        %v1820 = vadd.f32 %v1812, %v1798
        %v1821 = vadd.f32 %v1813, %v1803
        %1822 = vst [vmem:[#allocation2] sm:$0xff] %v1814
        %1823 = vst [vmem:[#allocation2 + $0x8] sm:$0xff] %v1815
        %1824 = vst [vmem:[#allocation2 + $0x10] sm:$0xff] %v1816
        %1825 = vst [vmem:[#allocation2 + $0x18] sm:$0xff] %v1817
        %1826 = vst [vmem:[#allocation2 + $0x20] sm:$0xff] %v1818
        %1827 = vst [vmem:[#allocation2 + $0x28] sm:$0xff] %v1819
        %1828 = vst [vmem:[#allocation2 + $0x30] sm:$0xff] %v1820
        %1829 = vst [vmem:[#allocation2 + $0x38] sm:$0xff] %v1821
        %v1830 = vld [vmem:[%s1501 + $0x2] sm:$0xff]
        %v1831 = vld [vmem:[%s1501 + $0x12] sm:$0xff]
        %v1832 = vld [vmem:[%s1501 + $0x22] sm:$0xff]
        %v1833 = vld [vmem:[%s1501 + $0x32] sm:$0xff]
        %v1834 = vld [vmem:[%s1501 + $0x42] sm:$0xff]
        %v1835 = vld [vmem:[%s1501 + $0x52] sm:$0xff]
        %v1836 = vld [vmem:[%s1501 + $0x62] sm:$0xff]
        %v1837 = vld [vmem:[%s1501 + $0x72] sm:$0xff]
        %s1838 = scalar_lea.vmem %s1, 160
        %v1839 = vld [vmem:[%s1838] sm:$0xff]
        %v1840 = vld [vmem:[%s1838 + $0x8] sm:$0xff]
        %v1842 = vsel %vm210, %v1830, 0
        %v1845 = vsel %vm210, %v1831, 0
        %v1848 = vsel %vm210, %v1832, 0
        %v1851 = vsel %vm210, %v1833, 0
        %v1854 = vsel %vm210, %v1834, 0
        %v1857 = vsel %vm210, %v1835, 0
        %v1860 = vsel %vm210, %v1836, 0
        %v1863 = vsel %vm210, %v1837, 0
        %1865 = vmatprep.subr.mxu0 0.0
        %1866 = vmatpush1.msra.mxu0 0.0
        %1867 = vmatprep.subr.mxu0 0.0
        %1868 = vmatpush1.msra.mxu0 0.0
        %1869 = vmatprep.subr.mxu0 0.0
        %1870 = vmatpush1.msra.mxu0 0.0
        %1871 = vmatprep.subr.mxu0 0.0
        %1872 = vmatpush1.msra.mxu0 0.0
        %1873 = vmatprep.subr.mxu0 0.0
        %1874 = vmatpush1.msra.mxu0 0.0
        %1875 = vmatprep.subr.mxu0 0.0
        %1876 = vmatpush1.msra.mxu0 0.0
        %1877 = vmatprep.subr.mxu0 0.0
        %1878 = vmatpush1.msra.mxu0 0.0
        %1879 = vmatprep.subr.mxu0 0.0
        %1880 = vmatpush1.msra.mxu0 0.0
        %1881 = vmatprep.subr.mxu0 0.0
        %1882 = vmatpush1.msra.mxu0 0.0
        %1883 = vmatprep.subr.mxu0 0.0
        %1884 = vmatpush1.msra.mxu0 0.0
        %1885 = vmatprep.subr.mxu0 0.0
        %1886 = vmatpush1.msra.mxu0 0.0
        %1887 = vmatprep.subr.mxu0 0.0
        %1888 = vmatpush1.msra.mxu0 0.0
        %1889 = vmatprep.subr.mxu0 0.0
        %1890 = vmatpush1.msra.mxu0 0.0
        %1891 = vmatprep.subr.mxu0 0.0
        %1892 = vmatpush1.msra.mxu0 0.0
        %1893 = vmatprep.subr.mxu0 0.0
        %1894 = vmatpush1.msra.mxu0 %v1840
        %1895 = vmatprep.subr.mxu0 0.0
        %1896 = vmatpush1.msra.mxu0 %v1839
        %1897 = vmatprep.subr.mxu0 0.0
        %1898 = vmatpush2.msra.mxu0 0.0
        %1899 = vmatprep.subr.mxu0 0.0
        %1900 = vmatpush2.msra.mxu0 0.0
        %1901 = vmatprep.subr.mxu0 0.0
        %1902 = vmatpush2.msra.mxu0 0.0
        %1903 = vmatprep.subr.mxu0 0.0
        %1904 = vmatpush2.msra.mxu0 0.0
        %1905 = vmatprep.subr.mxu0 0.0
        %1906 = vmatpush2.msra.mxu0 0.0
        %1907 = vmatprep.subr.mxu0 0.0
        %1908 = vmatpush2.msra.mxu0 0.0
        %1909 = vmatprep.subr.mxu0 0.0
        %1910 = vmatpush2.msra.mxu0 0.0
        %1911 = vmatprep.subr.mxu0 0.0
        %1912 = vmatpush2.msra.mxu0 0.0
        %1913 = vmatprep.subr.mxu0 0.0
        %1914 = vmatpush2.msra.mxu0 0.0
        %1915 = vmatprep.subr.mxu0 0.0
        %1916 = vmatpush2.msra.mxu0 0.0
        %1917 = vmatprep.subr.mxu0 0.0
        %1918 = vmatpush2.msra.mxu0 0.0
        %1919 = vmatprep.subr.mxu0 0.0
        %1920 = vmatpush2.msra.mxu0 0.0
        %1921 = vmatprep.subr.mxu0 0.0
        %1922 = vmatpush2.msra.mxu0 0.0
        %1923 = vmatprep.subr.mxu0 0.0
        %1924 = vmatpush2.msra.mxu0 0.0
        %1925 = vmatprep.subr.mxu0 0.0
        %1926 = vmatpush2.msra.mxu0 0.0
        %1927 = vmatprep.subr.mxu0 0.0
        %1928 = vmatpush2.msra.mxu0 0.0
        %1929 = vmatprep.mubr.f32.mxu0 0.0
        %1930 = vmatmul.mubr.f32.gmra.mxu0 %v1842
        %v1931 = vpop.f32.mrf.mxu0
        %v1932 = vadd.f32 0.0, %v1931
        %v1933 = vpop.f32.mrf.mxu0
        %1934 = vmatprep.mubr.f32.mxu0 0.0
        %1935 = vmatmul.mubr.f32.gmra.mxu0 %v1845
        %v1936 = vpop.f32.mrf.mxu0
        %v1937 = vadd.f32 0.0, %v1936
        %v1938 = vpop.f32.mrf.mxu0
        %1939 = vmatprep.mubr.f32.mxu0 0.0
        %1940 = vmatmul.mubr.f32.gmra.mxu0 %v1848
        %v1941 = vpop.f32.mrf.mxu0
        %v1942 = vadd.f32 0.0, %v1941
        %v1943 = vpop.f32.mrf.mxu0
        %1944 = vmatprep.mubr.f32.mxu0 0.0
        %1945 = vmatmul.mubr.f32.gmra.mxu0 %v1851
        %v1946 = vpop.f32.mrf.mxu0
        %v1947 = vadd.f32 0.0, %v1946
        %v1948 = vpop.f32.mrf.mxu0
        %1949 = vmatprep.mubr.f32.mxu0 0.0
        %1950 = vmatmul.mubr.f32.gmra.mxu0 %v1854
        %v1951 = vpop.f32.mrf.mxu0
        %v1952 = vadd.f32 0.0, %v1951
        %v1953 = vpop.f32.mrf.mxu0
        %1954 = vmatprep.mubr.f32.mxu0 0.0
        %1955 = vmatmul.mubr.f32.gmra.mxu0 %v1857
        %v1956 = vpop.f32.mrf.mxu0
        %v1957 = vadd.f32 0.0, %v1956
        %v1958 = vpop.f32.mrf.mxu0
        %1959 = vmatprep.mubr.f32.mxu0 0.0
        %1960 = vmatmul.mubr.f32.gmra.mxu0 %v1860
        %v1961 = vpop.f32.mrf.mxu0
        %v1962 = vadd.f32 0.0, %v1961
        %v1963 = vpop.f32.mrf.mxu0
        %1964 = vmatprep.mubr.f32.mxu0 0.0
        %1965 = vmatmul.mubr.f32.gmra.mxu0 %v1863
        %v1966 = vpop.f32.mrf.mxu0
        %v1967 = vadd.f32 0.0, %v1966
        %v1968 = vpop.f32.mrf.mxu0
        %1969 = vdwg.mxu0
        %v1970 = vld [vmem:[#allocation2] sm:$0xff]
        %v1971 = vld [vmem:[#allocation2 + $0x8] sm:$0xff]
        %v1972 = vld [vmem:[#allocation2 + $0x10] sm:$0xff]
        %v1973 = vld [vmem:[#allocation2 + $0x18] sm:$0xff]
        %v1974 = vld [vmem:[#allocation2 + $0x20] sm:$0xff]
        %v1975 = vld [vmem:[#allocation2 + $0x28] sm:$0xff]
        %v1976 = vld [vmem:[#allocation2 + $0x30] sm:$0xff]
        %v1977 = vld [vmem:[#allocation2 + $0x38] sm:$0xff]
        %v1978 = vadd.f32 %v1970, %v1932
        %v1979 = vadd.f32 %v1971, %v1937
        %v1980 = vadd.f32 %v1972, %v1942
        %v1981 = vadd.f32 %v1973, %v1947
        %v1982 = vadd.f32 %v1974, %v1952
        %v1983 = vadd.f32 %v1975, %v1957
        %v1984 = vadd.f32 %v1976, %v1962
        %v1985 = vadd.f32 %v1977, %v1967
        %1986 = vst [vmem:[#allocation2] sm:$0xff] %v1978
        %1987 = vst [vmem:[#allocation2 + $0x8] sm:$0xff] %v1979
        %1988 = vst [vmem:[#allocation2 + $0x10] sm:$0xff] %v1980
        %1989 = vst [vmem:[#allocation2 + $0x18] sm:$0xff] %v1981
        %1990 = vst [vmem:[#allocation2 + $0x20] sm:$0xff] %v1982
        %1991 = vst [vmem:[#allocation2 + $0x28] sm:$0xff] %v1983
        %1992 = vst [vmem:[#allocation2 + $0x30] sm:$0xff] %v1984
        %1993 = vst [vmem:[#allocation2 + $0x38] sm:$0xff] %v1985
        %v1994 = vld [vmem:[%s1501 + $0x3] sm:$0xff]
        %v1995 = vld [vmem:[%s1501 + $0x13] sm:$0xff]
        %v1996 = vld [vmem:[%s1501 + $0x23] sm:$0xff]
        %v1997 = vld [vmem:[%s1501 + $0x33] sm:$0xff]
        %v1998 = vld [vmem:[%s1501 + $0x43] sm:$0xff]
        %v1999 = vld [vmem:[%s1501 + $0x53] sm:$0xff]
        %v2000 = vld [vmem:[%s1501 + $0x63] sm:$0xff]
        %v2001 = vld [vmem:[%s1501 + $0x73] sm:$0xff]
        %s2002 = scalar_lea.vmem %s1, 176
        %v2003 = vld [vmem:[%s2002] sm:$0xff]
        %v2004 = vld [vmem:[%s2002 + $0x8] sm:$0xff]
        %v2006 = vsel %vm210, %v1994, 0
        %v2009 = vsel %vm210, %v1995, 0
        %v2012 = vsel %vm210, %v1996, 0
        %v2015 = vsel %vm210, %v1997, 0
        %v2018 = vsel %vm210, %v1998, 0
        %v2021 = vsel %vm210, %v1999, 0
        %v2024 = vsel %vm210, %v2000, 0
        %v2027 = vsel %vm210, %v2001, 0
        %2029 = vmatprep.subr.mxu0 0.0
        %2030 = vmatpush1.msra.mxu0 0.0
        %2031 = vmatprep.subr.mxu0 0.0
        %2032 = vmatpush1.msra.mxu0 0.0
        %2033 = vmatprep.subr.mxu0 0.0
        %2034 = vmatpush1.msra.mxu0 0.0
        %2035 = vmatprep.subr.mxu0 0.0
        %2036 = vmatpush1.msra.mxu0 0.0
        %2037 = vmatprep.subr.mxu0 0.0
        %2038 = vmatpush1.msra.mxu0 0.0
        %2039 = vmatprep.subr.mxu0 0.0
        %2040 = vmatpush1.msra.mxu0 0.0
        %2041 = vmatprep.subr.mxu0 0.0
        %2042 = vmatpush1.msra.mxu0 0.0
        %2043 = vmatprep.subr.mxu0 0.0
        %2044 = vmatpush1.msra.mxu0 0.0
        %2045 = vmatprep.subr.mxu0 0.0
        %2046 = vmatpush1.msra.mxu0 0.0
        %2047 = vmatprep.subr.mxu0 0.0
        %2048 = vmatpush1.msra.mxu0 0.0
        %2049 = vmatprep.subr.mxu0 0.0
        %2050 = vmatpush1.msra.mxu0 0.0
        %2051 = vmatprep.subr.mxu0 0.0
        %2052 = vmatpush1.msra.mxu0 0.0
        %2053 = vmatprep.subr.mxu0 0.0
        %2054 = vmatpush1.msra.mxu0 0.0
        %2055 = vmatprep.subr.mxu0 0.0
        %2056 = vmatpush1.msra.mxu0 0.0
        %2057 = vmatprep.subr.mxu0 0.0
        %2058 = vmatpush1.msra.mxu0 %v2004
        %2059 = vmatprep.subr.mxu0 0.0
        %2060 = vmatpush1.msra.mxu0 %v2003
        %2061 = vmatprep.subr.mxu0 0.0
        %2062 = vmatpush2.msra.mxu0 0.0
        %2063 = vmatprep.subr.mxu0 0.0
        %2064 = vmatpush2.msra.mxu0 0.0
        %2065 = vmatprep.subr.mxu0 0.0
        %2066 = vmatpush2.msra.mxu0 0.0
        %2067 = vmatprep.subr.mxu0 0.0
        %2068 = vmatpush2.msra.mxu0 0.0
        %2069 = vmatprep.subr.mxu0 0.0
        %2070 = vmatpush2.msra.mxu0 0.0
        %2071 = vmatprep.subr.mxu0 0.0
        %2072 = vmatpush2.msra.mxu0 0.0
        %2073 = vmatprep.subr.mxu0 0.0
        %2074 = vmatpush2.msra.mxu0 0.0
        %2075 = vmatprep.subr.mxu0 0.0
        %2076 = vmatpush2.msra.mxu0 0.0
        %2077 = vmatprep.subr.mxu0 0.0
        %2078 = vmatpush2.msra.mxu0 0.0
        %2079 = vmatprep.subr.mxu0 0.0
        %2080 = vmatpush2.msra.mxu0 0.0
        %2081 = vmatprep.subr.mxu0 0.0
        %2082 = vmatpush2.msra.mxu0 0.0
        %2083 = vmatprep.subr.mxu0 0.0
        %2084 = vmatpush2.msra.mxu0 0.0
        %2085 = vmatprep.subr.mxu0 0.0
        %2086 = vmatpush2.msra.mxu0 0.0
        %2087 = vmatprep.subr.mxu0 0.0
        %2088 = vmatpush2.msra.mxu0 0.0
        %2089 = vmatprep.subr.mxu0 0.0
        %2090 = vmatpush2.msra.mxu0 0.0
        %2091 = vmatprep.subr.mxu0 0.0
        %2092 = vmatpush2.msra.mxu0 0.0
        %2093 = vmatprep.mubr.f32.mxu0 0.0
        %2094 = vmatmul.mubr.f32.gmra.mxu0 %v2006
        %v2095 = vpop.f32.mrf.mxu0
        %v2096 = vadd.f32 0.0, %v2095
        %v2097 = vpop.f32.mrf.mxu0
        %2098 = vmatprep.mubr.f32.mxu0 0.0
        %2099 = vmatmul.mubr.f32.gmra.mxu0 %v2009
        %v2100 = vpop.f32.mrf.mxu0
        %v2101 = vadd.f32 0.0, %v2100
        %v2102 = vpop.f32.mrf.mxu0
        %2103 = vmatprep.mubr.f32.mxu0 0.0
        %2104 = vmatmul.mubr.f32.gmra.mxu0 %v2012
        %v2105 = vpop.f32.mrf.mxu0
        %v2106 = vadd.f32 0.0, %v2105
        %v2107 = vpop.f32.mrf.mxu0
        %2108 = vmatprep.mubr.f32.mxu0 0.0
        %2109 = vmatmul.mubr.f32.gmra.mxu0 %v2015
        %v2110 = vpop.f32.mrf.mxu0
        %v2111 = vadd.f32 0.0, %v2110
        %v2112 = vpop.f32.mrf.mxu0
        %2113 = vmatprep.mubr.f32.mxu0 0.0
        %2114 = vmatmul.mubr.f32.gmra.mxu0 %v2018
        %v2115 = vpop.f32.mrf.mxu0
        %v2116 = vadd.f32 0.0, %v2115
        %v2117 = vpop.f32.mrf.mxu0
        %2118 = vmatprep.mubr.f32.mxu0 0.0
        %2119 = vmatmul.mubr.f32.gmra.mxu0 %v2021
        %v2120 = vpop.f32.mrf.mxu0
        %v2121 = vadd.f32 0.0, %v2120
        %v2122 = vpop.f32.mrf.mxu0
        %2123 = vmatprep.mubr.f32.mxu0 0.0
        %2124 = vmatmul.mubr.f32.gmra.mxu0 %v2024
        %v2125 = vpop.f32.mrf.mxu0
        %v2126 = vadd.f32 0.0, %v2125
        %v2127 = vpop.f32.mrf.mxu0
        %2128 = vmatprep.mubr.f32.mxu0 0.0
        %2129 = vmatmul.mubr.f32.gmra.mxu0 %v2027
        %v2130 = vpop.f32.mrf.mxu0
        %v2131 = vadd.f32 0.0, %v2130
        %v2132 = vpop.f32.mrf.mxu0
        %2133 = vdwg.mxu0
        %v2134 = vld [vmem:[#allocation2] sm:$0xff]
        %v2135 = vld [vmem:[#allocation2 + $0x8] sm:$0xff]
        %v2136 = vld [vmem:[#allocation2 + $0x10] sm:$0xff]
        %v2137 = vld [vmem:[#allocation2 + $0x18] sm:$0xff]
        %v2138 = vld [vmem:[#allocation2 + $0x20] sm:$0xff]
        %v2139 = vld [vmem:[#allocation2 + $0x28] sm:$0xff]
        %v2140 = vld [vmem:[#allocation2 + $0x30] sm:$0xff]
        %v2141 = vld [vmem:[#allocation2 + $0x38] sm:$0xff]
        %v2142 = vadd.f32 %v2134, %v2096
        %v2143 = vadd.f32 %v2135, %v2101
        %v2144 = vadd.f32 %v2136, %v2106
        %v2145 = vadd.f32 %v2137, %v2111
        %v2146 = vadd.f32 %v2138, %v2116
        %v2147 = vadd.f32 %v2139, %v2121
        %v2148 = vadd.f32 %v2140, %v2126
        %v2149 = vadd.f32 %v2141, %v2131
        %2150 = vst [vmem:[#allocation2] sm:$0xff] %v2142
        %2151 = vst [vmem:[#allocation2 + $0x8] sm:$0xff] %v2143
        %2152 = vst [vmem:[#allocation2 + $0x10] sm:$0xff] %v2144
        %2153 = vst [vmem:[#allocation2 + $0x18] sm:$0xff] %v2145
        %2154 = vst [vmem:[#allocation2 + $0x20] sm:$0xff] %v2146
        %2155 = vst [vmem:[#allocation2 + $0x28] sm:$0xff] %v2147
        %2156 = vst [vmem:[#allocation2 + $0x30] sm:$0xff] %v2148
        %2157 = vst [vmem:[#allocation2 + $0x38] sm:$0xff] %v2149
        %s2158 = sadd.s32 %s197, 3
        %s2159 = smul.u32 %s2158, 16
        %s2160 = scalar_lea.vmem %s195, %s2159
        %v2161 = vld [vmem:[%s2160] sm:$0xff]
        %v2162 = vld [vmem:[%s2160 + $0x10] sm:$0xff]
        %v2163 = vld [vmem:[%s2160 + $0x20] sm:$0xff]
        %v2164 = vld [vmem:[%s2160 + $0x30] sm:$0xff]
        %v2165 = vld [vmem:[%s2160 + $0x40] sm:$0xff]
        %v2166 = vld [vmem:[%s2160 + $0x50] sm:$0xff]
        %v2167 = vld [vmem:[%s2160 + $0x60] sm:$0xff]
        %v2168 = vld [vmem:[%s2160 + $0x70] sm:$0xff]
        %s2169 = scalar_lea.vmem %s1, 192
        %v2170 = vld [vmem:[%s2169] sm:$0xff]
        %v2171 = vld [vmem:[%s2169 + $0x8] sm:$0xff]
        %v2173 = vsel %vm210, %v2161, 0
        %v2176 = vsel %vm210, %v2162, 0
        %v2179 = vsel %vm210, %v2163, 0
        %v2182 = vsel %vm210, %v2164, 0
        %v2185 = vsel %vm210, %v2165, 0
        %v2188 = vsel %vm210, %v2166, 0
        %v2191 = vsel %vm210, %v2167, 0
        %v2194 = vsel %vm210, %v2168, 0
        %2196 = vmatprep.subr.mxu0 0.0
        %2197 = vmatpush1.msra.mxu0 0.0
        %2198 = vmatprep.subr.mxu0 0.0
        %2199 = vmatpush1.msra.mxu0 0.0
        %2200 = vmatprep.subr.mxu0 0.0
        %2201 = vmatpush1.msra.mxu0 0.0
        %2202 = vmatprep.subr.mxu0 0.0
        %2203 = vmatpush1.msra.mxu0 0.0
        %2204 = vmatprep.subr.mxu0 0.0
        %2205 = vmatpush1.msra.mxu0 0.0
        %2206 = vmatprep.subr.mxu0 0.0
        %2207 = vmatpush1.msra.mxu0 0.0
        %2208 = vmatprep.subr.mxu0 0.0
        %2209 = vmatpush1.msra.mxu0 0.0
        %2210 = vmatprep.subr.mxu0 0.0
        %2211 = vmatpush1.msra.mxu0 0.0
        %2212 = vmatprep.subr.mxu0 0.0
        %2213 = vmatpush1.msra.mxu0 0.0
        %2214 = vmatprep.subr.mxu0 0.0
        %2215 = vmatpush1.msra.mxu0 0.0
        %2216 = vmatprep.subr.mxu0 0.0
        %2217 = vmatpush1.msra.mxu0 0.0
        %2218 = vmatprep.subr.mxu0 0.0
        %2219 = vmatpush1.msra.mxu0 0.0
        %2220 = vmatprep.subr.mxu0 0.0
        %2221 = vmatpush1.msra.mxu0 0.0
        %2222 = vmatprep.subr.mxu0 0.0
        %2223 = vmatpush1.msra.mxu0 0.0
        %2224 = vmatprep.subr.mxu0 0.0
        %2225 = vmatpush1.msra.mxu0 %v2171
        %2226 = vmatprep.subr.mxu0 0.0
        %2227 = vmatpush1.msra.mxu0 %v2170
        %2228 = vmatprep.subr.mxu0 0.0
        %2229 = vmatpush2.msra.mxu0 0.0
        %2230 = vmatprep.subr.mxu0 0.0
        %2231 = vmatpush2.msra.mxu0 0.0
        %2232 = vmatprep.subr.mxu0 0.0
        %2233 = vmatpush2.msra.mxu0 0.0
        %2234 = vmatprep.subr.mxu0 0.0
        %2235 = vmatpush2.msra.mxu0 0.0
        %2236 = vmatprep.subr.mxu0 0.0
        %2237 = vmatpush2.msra.mxu0 0.0
        %2238 = vmatprep.subr.mxu0 0.0
        %2239 = vmatpush2.msra.mxu0 0.0
        %2240 = vmatprep.subr.mxu0 0.0
        %2241 = vmatpush2.msra.mxu0 0.0
        %2242 = vmatprep.subr.mxu0 0.0
        %2243 = vmatpush2.msra.mxu0 0.0
        %2244 = vmatprep.subr.mxu0 0.0
        %2245 = vmatpush2.msra.mxu0 0.0
        %2246 = vmatprep.subr.mxu0 0.0
        %2247 = vmatpush2.msra.mxu0 0.0
        %2248 = vmatprep.subr.mxu0 0.0
        %2249 = vmatpush2.msra.mxu0 0.0
        %2250 = vmatprep.subr.mxu0 0.0
        %2251 = vmatpush2.msra.mxu0 0.0
        %2252 = vmatprep.subr.mxu0 0.0
        %2253 = vmatpush2.msra.mxu0 0.0
        %2254 = vmatprep.subr.mxu0 0.0
        %2255 = vmatpush2.msra.mxu0 0.0
        %2256 = vmatprep.subr.mxu0 0.0
        %2257 = vmatpush2.msra.mxu0 0.0
        %2258 = vmatprep.subr.mxu0 0.0
        %2259 = vmatpush2.msra.mxu0 0.0
        %2260 = vmatprep.mubr.f32.mxu0 0.0
        %2261 = vmatmul.mubr.f32.gmra.mxu0 %v2173
        %v2262 = vpop.f32.mrf.mxu0
        %v2263 = vadd.f32 0.0, %v2262
        %v2264 = vpop.f32.mrf.mxu0
        %2265 = vmatprep.mubr.f32.mxu0 0.0
        %2266 = vmatmul.mubr.f32.gmra.mxu0 %v2176
        %v2267 = vpop.f32.mrf.mxu0
        %v2268 = vadd.f32 0.0, %v2267
        %v2269 = vpop.f32.mrf.mxu0
        %2270 = vmatprep.mubr.f32.mxu0 0.0
        %2271 = vmatmul.mubr.f32.gmra.mxu0 %v2179
        %v2272 = vpop.f32.mrf.mxu0
        %v2273 = vadd.f32 0.0, %v2272
        %v2274 = vpop.f32.mrf.mxu0
        %2275 = vmatprep.mubr.f32.mxu0 0.0
        %2276 = vmatmul.mubr.f32.gmra.mxu0 %v2182
        %v2277 = vpop.f32.mrf.mxu0
        %v2278 = vadd.f32 0.0, %v2277
        %v2279 = vpop.f32.mrf.mxu0
        %2280 = vmatprep.mubr.f32.mxu0 0.0
        %2281 = vmatmul.mubr.f32.gmra.mxu0 %v2185
        %v2282 = vpop.f32.mrf.mxu0
        %v2283 = vadd.f32 0.0, %v2282
        %v2284 = vpop.f32.mrf.mxu0
        %2285 = vmatprep.mubr.f32.mxu0 0.0
        %2286 = vmatmul.mubr.f32.gmra.mxu0 %v2188
        %v2287 = vpop.f32.mrf.mxu0
        %v2288 = vadd.f32 0.0, %v2287
        %v2289 = vpop.f32.mrf.mxu0
        %2290 = vmatprep.mubr.f32.mxu0 0.0
        %2291 = vmatmul.mubr.f32.gmra.mxu0 %v2191
        %v2292 = vpop.f32.mrf.mxu0
        %v2293 = vadd.f32 0.0, %v2292
        %v2294 = vpop.f32.mrf.mxu0
        %2295 = vmatprep.mubr.f32.mxu0 0.0
        %2296 = vmatmul.mubr.f32.gmra.mxu0 %v2194
        %v2297 = vpop.f32.mrf.mxu0
        %v2298 = vadd.f32 0.0, %v2297
        %v2299 = vpop.f32.mrf.mxu0
        %2300 = vdwg.mxu0
        %v2301 = vld [vmem:[#allocation2] sm:$0xff]
        %v2302 = vld [vmem:[#allocation2 + $0x8] sm:$0xff]
        %v2303 = vld [vmem:[#allocation2 + $0x10] sm:$0xff]
        %v2304 = vld [vmem:[#allocation2 + $0x18] sm:$0xff]
        %v2305 = vld [vmem:[#allocation2 + $0x20] sm:$0xff]
        %v2306 = vld [vmem:[#allocation2 + $0x28] sm:$0xff]
        %v2307 = vld [vmem:[#allocation2 + $0x30] sm:$0xff]
        %v2308 = vld [vmem:[#allocation2 + $0x38] sm:$0xff]
        %v2309 = vadd.f32 %v2301, %v2263
        %v2310 = vadd.f32 %v2302, %v2268
        %v2311 = vadd.f32 %v2303, %v2273
        %v2312 = vadd.f32 %v2304, %v2278
        %v2313 = vadd.f32 %v2305, %v2283
        %v2314 = vadd.f32 %v2306, %v2288
        %v2315 = vadd.f32 %v2307, %v2293
        %v2316 = vadd.f32 %v2308, %v2298
        %2317 = vst [vmem:[#allocation2] sm:$0xff] %v2309
        %2318 = vst [vmem:[#allocation2 + $0x8] sm:$0xff] %v2310
        %2319 = vst [vmem:[#allocation2 + $0x10] sm:$0xff] %v2311
        %2320 = vst [vmem:[#allocation2 + $0x18] sm:$0xff] %v2312
        %2321 = vst [vmem:[#allocation2 + $0x20] sm:$0xff] %v2313
        %2322 = vst [vmem:[#allocation2 + $0x28] sm:$0xff] %v2314
        %2323 = vst [vmem:[#allocation2 + $0x30] sm:$0xff] %v2315
        %2324 = vst [vmem:[#allocation2 + $0x38] sm:$0xff] %v2316
        %v2325 = vld [vmem:[%s2160 + $0x1] sm:$0xff]
        %v2326 = vld [vmem:[%s2160 + $0x11] sm:$0xff]
        %v2327 = vld [vmem:[%s2160 + $0x21] sm:$0xff]
        %v2328 = vld [vmem:[%s2160 + $0x31] sm:$0xff]
        %v2329 = vld [vmem:[%s2160 + $0x41] sm:$0xff]
        %v2330 = vld [vmem:[%s2160 + $0x51] sm:$0xff]
        %v2331 = vld [vmem:[%s2160 + $0x61] sm:$0xff]
        %v2332 = vld [vmem:[%s2160 + $0x71] sm:$0xff]
        %s2333 = scalar_lea.vmem %s1, 208
        %v2334 = vld [vmem:[%s2333] sm:$0xff]
        %v2335 = vld [vmem:[%s2333 + $0x8] sm:$0xff]
        %v2337 = vsel %vm210, %v2325, 0
        %v2340 = vsel %vm210, %v2326, 0
        %v2343 = vsel %vm210, %v2327, 0
        %v2346 = vsel %vm210, %v2328, 0
        %v2349 = vsel %vm210, %v2329, 0
        %v2352 = vsel %vm210, %v2330, 0
        %v2355 = vsel %vm210, %v2331, 0
        %v2358 = vsel %vm210, %v2332, 0
        %2360 = vmatprep.subr.mxu0 0.0
        %2361 = vmatpush1.msra.mxu0 0.0
        %2362 = vmatprep.subr.mxu0 0.0
        %2363 = vmatpush1.msra.mxu0 0.0
        %2364 = vmatprep.subr.mxu0 0.0
        %2365 = vmatpush1.msra.mxu0 0.0
        %2366 = vmatprep.subr.mxu0 0.0
        %2367 = vmatpush1.msra.mxu0 0.0
        %2368 = vmatprep.subr.mxu0 0.0
        %2369 = vmatpush1.msra.mxu0 0.0
        %2370 = vmatprep.subr.mxu0 0.0
        %2371 = vmatpush1.msra.mxu0 0.0
        %2372 = vmatprep.subr.mxu0 0.0
        %2373 = vmatpush1.msra.mxu0 0.0
        %2374 = vmatprep.subr.mxu0 0.0
        %2375 = vmatpush1.msra.mxu0 0.0
        %2376 = vmatprep.subr.mxu0 0.0
        %2377 = vmatpush1.msra.mxu0 0.0
        %2378 = vmatprep.subr.mxu0 0.0
        %2379 = vmatpush1.msra.mxu0 0.0
        %2380 = vmatprep.subr.mxu0 0.0
        %2381 = vmatpush1.msra.mxu0 0.0
        %2382 = vmatprep.subr.mxu0 0.0
        %2383 = vmatpush1.msra.mxu0 0.0
        %2384 = vmatprep.subr.mxu0 0.0
        %2385 = vmatpush1.msra.mxu0 0.0
        %2386 = vmatprep.subr.mxu0 0.0
        %2387 = vmatpush1.msra.mxu0 0.0
        %2388 = vmatprep.subr.mxu0 0.0
        %2389 = vmatpush1.msra.mxu0 %v2335
        %2390 = vmatprep.subr.mxu0 0.0
        %2391 = vmatpush1.msra.mxu0 %v2334
        %2392 = vmatprep.subr.mxu0 0.0
        %2393 = vmatpush2.msra.mxu0 0.0
        %2394 = vmatprep.subr.mxu0 0.0
        %2395 = vmatpush2.msra.mxu0 0.0
        %2396 = vmatprep.subr.mxu0 0.0
        %2397 = vmatpush2.msra.mxu0 0.0
        %2398 = vmatprep.subr.mxu0 0.0
        %2399 = vmatpush2.msra.mxu0 0.0
        %2400 = vmatprep.subr.mxu0 0.0
        %2401 = vmatpush2.msra.mxu0 0.0
        %2402 = vmatprep.subr.mxu0 0.0
        %2403 = vmatpush2.msra.mxu0 0.0
        %2404 = vmatprep.subr.mxu0 0.0
        %2405 = vmatpush2.msra.mxu0 0.0
        %2406 = vmatprep.subr.mxu0 0.0
        %2407 = vmatpush2.msra.mxu0 0.0
        %2408 = vmatprep.subr.mxu0 0.0
        %2409 = vmatpush2.msra.mxu0 0.0
        %2410 = vmatprep.subr.mxu0 0.0
        %2411 = vmatpush2.msra.mxu0 0.0
        %2412 = vmatprep.subr.mxu0 0.0
        %2413 = vmatpush2.msra.mxu0 0.0
        %2414 = vmatprep.subr.mxu0 0.0
        %2415 = vmatpush2.msra.mxu0 0.0
        %2416 = vmatprep.subr.mxu0 0.0
        %2417 = vmatpush2.msra.mxu0 0.0
        %2418 = vmatprep.subr.mxu0 0.0
        %2419 = vmatpush2.msra.mxu0 0.0
        %2420 = vmatprep.subr.mxu0 0.0
        %2421 = vmatpush2.msra.mxu0 0.0
        %2422 = vmatprep.subr.mxu0 0.0
        %2423 = vmatpush2.msra.mxu0 0.0
        %2424 = vmatprep.mubr.f32.mxu0 0.0
        %2425 = vmatmul.mubr.f32.gmra.mxu0 %v2337
        %v2426 = vpop.f32.mrf.mxu0
        %v2427 = vadd.f32 0.0, %v2426
        %v2428 = vpop.f32.mrf.mxu0
        %2429 = vmatprep.mubr.f32.mxu0 0.0
        %2430 = vmatmul.mubr.f32.gmra.mxu0 %v2340
        %v2431 = vpop.f32.mrf.mxu0
        %v2432 = vadd.f32 0.0, %v2431
        %v2433 = vpop.f32.mrf.mxu0
        %2434 = vmatprep.mubr.f32.mxu0 0.0
        %2435 = vmatmul.mubr.f32.gmra.mxu0 %v2343
        %v2436 = vpop.f32.mrf.mxu0
        %v2437 = vadd.f32 0.0, %v2436
        %v2438 = vpop.f32.mrf.mxu0
        %2439 = vmatprep.mubr.f32.mxu0 0.0
        %2440 = vmatmul.mubr.f32.gmra.mxu0 %v2346
        %v2441 = vpop.f32.mrf.mxu0
        %v2442 = vadd.f32 0.0, %v2441
        %v2443 = vpop.f32.mrf.mxu0
        %2444 = vmatprep.mubr.f32.mxu0 0.0
        %2445 = vmatmul.mubr.f32.gmra.mxu0 %v2349
        %v2446 = vpop.f32.mrf.mxu0
        %v2447 = vadd.f32 0.0, %v2446
        %v2448 = vpop.f32.mrf.mxu0
        %2449 = vmatprep.mubr.f32.mxu0 0.0
        %2450 = vmatmul.mubr.f32.gmra.mxu0 %v2352
        %v2451 = vpop.f32.mrf.mxu0
        %v2452 = vadd.f32 0.0, %v2451
        %v2453 = vpop.f32.mrf.mxu0
        %2454 = vmatprep.mubr.f32.mxu0 0.0
        %2455 = vmatmul.mubr.f32.gmra.mxu0 %v2355
        %v2456 = vpop.f32.mrf.mxu0
        %v2457 = vadd.f32 0.0, %v2456
        %v2458 = vpop.f32.mrf.mxu0
        %2459 = vmatprep.mubr.f32.mxu0 0.0
        %2460 = vmatmul.mubr.f32.gmra.mxu0 %v2358
        %v2461 = vpop.f32.mrf.mxu0
        %v2462 = vadd.f32 0.0, %v2461
        %v2463 = vpop.f32.mrf.mxu0
        %2464 = vdwg.mxu0
        %v2465 = vld [vmem:[#allocation2] sm:$0xff]
        %v2466 = vld [vmem:[#allocation2 + $0x8] sm:$0xff]
        %v2467 = vld [vmem:[#allocation2 + $0x10] sm:$0xff]
        %v2468 = vld [vmem:[#allocation2 + $0x18] sm:$0xff]
        %v2469 = vld [vmem:[#allocation2 + $0x20] sm:$0xff]
        %v2470 = vld [vmem:[#allocation2 + $0x28] sm:$0xff]
        %v2471 = vld [vmem:[#allocation2 + $0x30] sm:$0xff]
        %v2472 = vld [vmem:[#allocation2 + $0x38] sm:$0xff]
        %v2473 = vadd.f32 %v2465, %v2427
        %v2474 = vadd.f32 %v2466, %v2432
        %v2475 = vadd.f32 %v2467, %v2437
        %v2476 = vadd.f32 %v2468, %v2442
        %v2477 = vadd.f32 %v2469, %v2447
        %v2478 = vadd.f32 %v2470, %v2452
        %v2479 = vadd.f32 %v2471, %v2457
        %v2480 = vadd.f32 %v2472, %v2462
        %2481 = vst [vmem:[#allocation2] sm:$0xff] %v2473
        %2482 = vst [vmem:[#allocation2 + $0x8] sm:$0xff] %v2474
        %2483 = vst [vmem:[#allocation2 + $0x10] sm:$0xff] %v2475
        %2484 = vst [vmem:[#allocation2 + $0x18] sm:$0xff] %v2476
        %2485 = vst [vmem:[#allocation2 + $0x20] sm:$0xff] %v2477
        %2486 = vst [vmem:[#allocation2 + $0x28] sm:$0xff] %v2478
        %2487 = vst [vmem:[#allocation2 + $0x30] sm:$0xff] %v2479
        %2488 = vst [vmem:[#allocation2 + $0x38] sm:$0xff] %v2480
        %v2489 = vld [vmem:[%s2160 + $0x2] sm:$0xff]
        %v2490 = vld [vmem:[%s2160 + $0x12] sm:$0xff]
        %v2491 = vld [vmem:[%s2160 + $0x22] sm:$0xff]
        %v2492 = vld [vmem:[%s2160 + $0x32] sm:$0xff]
        %v2493 = vld [vmem:[%s2160 + $0x42] sm:$0xff]
        %v2494 = vld [vmem:[%s2160 + $0x52] sm:$0xff]
        %v2495 = vld [vmem:[%s2160 + $0x62] sm:$0xff]
        %v2496 = vld [vmem:[%s2160 + $0x72] sm:$0xff]
        %s2497 = scalar_lea.vmem %s1, 224
        %v2498 = vld [vmem:[%s2497] sm:$0xff]
        %v2499 = vld [vmem:[%s2497 + $0x8] sm:$0xff]
        %v2501 = vsel %vm210, %v2489, 0
        %v2504 = vsel %vm210, %v2490, 0
        %v2507 = vsel %vm210, %v2491, 0
        %v2510 = vsel %vm210, %v2492, 0
        %v2513 = vsel %vm210, %v2493, 0
        %v2516 = vsel %vm210, %v2494, 0
        %v2519 = vsel %vm210, %v2495, 0
        %v2522 = vsel %vm210, %v2496, 0
        %2524 = vmatprep.subr.mxu0 0.0
        %2525 = vmatpush1.msra.mxu0 0.0
        %2526 = vmatprep.subr.mxu0 0.0
        %2527 = vmatpush1.msra.mxu0 0.0
        %2528 = vmatprep.subr.mxu0 0.0
        %2529 = vmatpush1.msra.mxu0 0.0
        %2530 = vmatprep.subr.mxu0 0.0
        %2531 = vmatpush1.msra.mxu0 0.0
        %2532 = vmatprep.subr.mxu0 0.0
        %2533 = vmatpush1.msra.mxu0 0.0
        %2534 = vmatprep.subr.mxu0 0.0
        %2535 = vmatpush1.msra.mxu0 0.0
        %2536 = vmatprep.subr.mxu0 0.0
        %2537 = vmatpush1.msra.mxu0 0.0
        %2538 = vmatprep.subr.mxu0 0.0
        %2539 = vmatpush1.msra.mxu0 0.0
        %2540 = vmatprep.subr.mxu0 0.0
        %2541 = vmatpush1.msra.mxu0 0.0
        %2542 = vmatprep.subr.mxu0 0.0
        %2543 = vmatpush1.msra.mxu0 0.0
        %2544 = vmatprep.subr.mxu0 0.0
        %2545 = vmatpush1.msra.mxu0 0.0
        %2546 = vmatprep.subr.mxu0 0.0
        %2547 = vmatpush1.msra.mxu0 0.0
        %2548 = vmatprep.subr.mxu0 0.0
        %2549 = vmatpush1.msra.mxu0 0.0
        %2550 = vmatprep.subr.mxu0 0.0
        %2551 = vmatpush1.msra.mxu0 0.0
        %2552 = vmatprep.subr.mxu0 0.0
        %2553 = vmatpush1.msra.mxu0 %v2499
        %2554 = vmatprep.subr.mxu0 0.0
        %2555 = vmatpush1.msra.mxu0 %v2498
        %2556 = vmatprep.subr.mxu0 0.0
        %2557 = vmatpush2.msra.mxu0 0.0
        %2558 = vmatprep.subr.mxu0 0.0
        %2559 = vmatpush2.msra.mxu0 0.0
        %2560 = vmatprep.subr.mxu0 0.0
        %2561 = vmatpush2.msra.mxu0 0.0
        %2562 = vmatprep.subr.mxu0 0.0
        %2563 = vmatpush2.msra.mxu0 0.0
        %2564 = vmatprep.subr.mxu0 0.0
        %2565 = vmatpush2.msra.mxu0 0.0
        %2566 = vmatprep.subr.mxu0 0.0
        %2567 = vmatpush2.msra.mxu0 0.0
        %2568 = vmatprep.subr.mxu0 0.0
        %2569 = vmatpush2.msra.mxu0 0.0
        %2570 = vmatprep.subr.mxu0 0.0
        %2571 = vmatpush2.msra.mxu0 0.0
        %2572 = vmatprep.subr.mxu0 0.0
        %2573 = vmatpush2.msra.mxu0 0.0
        %2574 = vmatprep.subr.mxu0 0.0
        %2575 = vmatpush2.msra.mxu0 0.0
        %2576 = vmatprep.subr.mxu0 0.0
        %2577 = vmatpush2.msra.mxu0 0.0
        %2578 = vmatprep.subr.mxu0 0.0
        %2579 = vmatpush2.msra.mxu0 0.0
        %2580 = vmatprep.subr.mxu0 0.0
        %2581 = vmatpush2.msra.mxu0 0.0
        %2582 = vmatprep.subr.mxu0 0.0
        %2583 = vmatpush2.msra.mxu0 0.0
        %2584 = vmatprep.subr.mxu0 0.0
        %2585 = vmatpush2.msra.mxu0 0.0
        %2586 = vmatprep.subr.mxu0 0.0
        %2587 = vmatpush2.msra.mxu0 0.0
        %2588 = vmatprep.mubr.f32.mxu0 0.0
        %2589 = vmatmul.mubr.f32.gmra.mxu0 %v2501
        %v2590 = vpop.f32.mrf.mxu0
        %v2591 = vadd.f32 0.0, %v2590
        %v2592 = vpop.f32.mrf.mxu0
        %2593 = vmatprep.mubr.f32.mxu0 0.0
        %2594 = vmatmul.mubr.f32.gmra.mxu0 %v2504
        %v2595 = vpop.f32.mrf.mxu0
        %v2596 = vadd.f32 0.0, %v2595
        %v2597 = vpop.f32.mrf.mxu0
        %2598 = vmatprep.mubr.f32.mxu0 0.0
        %2599 = vmatmul.mubr.f32.gmra.mxu0 %v2507
        %v2600 = vpop.f32.mrf.mxu0
        %v2601 = vadd.f32 0.0, %v2600
        %v2602 = vpop.f32.mrf.mxu0
        %2603 = vmatprep.mubr.f32.mxu0 0.0
        %2604 = vmatmul.mubr.f32.gmra.mxu0 %v2510
        %v2605 = vpop.f32.mrf.mxu0
        %v2606 = vadd.f32 0.0, %v2605
        %v2607 = vpop.f32.mrf.mxu0
        %2608 = vmatprep.mubr.f32.mxu0 0.0
        %2609 = vmatmul.mubr.f32.gmra.mxu0 %v2513
        %v2610 = vpop.f32.mrf.mxu0
        %v2611 = vadd.f32 0.0, %v2610
        %v2612 = vpop.f32.mrf.mxu0
        %2613 = vmatprep.mubr.f32.mxu0 0.0
        %2614 = vmatmul.mubr.f32.gmra.mxu0 %v2516
        %v2615 = vpop.f32.mrf.mxu0
        %v2616 = vadd.f32 0.0, %v2615
        %v2617 = vpop.f32.mrf.mxu0
        %2618 = vmatprep.mubr.f32.mxu0 0.0
        %2619 = vmatmul.mubr.f32.gmra.mxu0 %v2519
        %v2620 = vpop.f32.mrf.mxu0
        %v2621 = vadd.f32 0.0, %v2620
        %v2622 = vpop.f32.mrf.mxu0
        %2623 = vmatprep.mubr.f32.mxu0 0.0
        %2624 = vmatmul.mubr.f32.gmra.mxu0 %v2522
        %v2625 = vpop.f32.mrf.mxu0
        %v2626 = vadd.f32 0.0, %v2625
        %v2627 = vpop.f32.mrf.mxu0
        %2628 = vdwg.mxu0
        %v2629 = vld [vmem:[#allocation2] sm:$0xff]
        %v2630 = vld [vmem:[#allocation2 + $0x8] sm:$0xff]
        %v2631 = vld [vmem:[#allocation2 + $0x10] sm:$0xff]
        %v2632 = vld [vmem:[#allocation2 + $0x18] sm:$0xff]
        %v2633 = vld [vmem:[#allocation2 + $0x20] sm:$0xff]
        %v2634 = vld [vmem:[#allocation2 + $0x28] sm:$0xff]
        %v2635 = vld [vmem:[#allocation2 + $0x30] sm:$0xff]
        %v2636 = vld [vmem:[#allocation2 + $0x38] sm:$0xff]
        %v2637 = vadd.f32 %v2629, %v2591
        %v2638 = vadd.f32 %v2630, %v2596
        %v2639 = vadd.f32 %v2631, %v2601
        %v2640 = vadd.f32 %v2632, %v2606
        %v2641 = vadd.f32 %v2633, %v2611
        %v2642 = vadd.f32 %v2634, %v2616
        %v2643 = vadd.f32 %v2635, %v2621
        %v2644 = vadd.f32 %v2636, %v2626
        %2645 = vst [vmem:[#allocation2] sm:$0xff] %v2637
        %2646 = vst [vmem:[#allocation2 + $0x8] sm:$0xff] %v2638
        %2647 = vst [vmem:[#allocation2 + $0x10] sm:$0xff] %v2639
        %2648 = vst [vmem:[#allocation2 + $0x18] sm:$0xff] %v2640
        %2649 = vst [vmem:[#allocation2 + $0x20] sm:$0xff] %v2641
        %2650 = vst [vmem:[#allocation2 + $0x28] sm:$0xff] %v2642
        %2651 = vst [vmem:[#allocation2 + $0x30] sm:$0xff] %v2643
        %2652 = vst [vmem:[#allocation2 + $0x38] sm:$0xff] %v2644
        %v2653 = vld [vmem:[%s2160 + $0x3] sm:$0xff]
        %v2654 = vld [vmem:[%s2160 + $0x13] sm:$0xff]
        %v2655 = vld [vmem:[%s2160 + $0x23] sm:$0xff]
        %v2656 = vld [vmem:[%s2160 + $0x33] sm:$0xff]
        %v2657 = vld [vmem:[%s2160 + $0x43] sm:$0xff]
        %v2658 = vld [vmem:[%s2160 + $0x53] sm:$0xff]
        %v2659 = vld [vmem:[%s2160 + $0x63] sm:$0xff]
        %v2660 = vld [vmem:[%s2160 + $0x73] sm:$0xff]
        %s2661 = scalar_lea.vmem %s1, 240
        %v2662 = vld [vmem:[%s2661] sm:$0xff]
        %v2663 = vld [vmem:[%s2661 + $0x8] sm:$0xff]
        %v2665 = vsel %vm210, %v2653, 0
        %v2668 = vsel %vm210, %v2654, 0
        %v2671 = vsel %vm210, %v2655, 0
        %v2674 = vsel %vm210, %v2656, 0
        %v2677 = vsel %vm210, %v2657, 0
        %v2680 = vsel %vm210, %v2658, 0
        %v2683 = vsel %vm210, %v2659, 0
        %v2686 = vsel %vm210, %v2660, 0
        %2688 = vmatprep.subr.mxu0 0.0
        %2689 = vmatpush1.msra.mxu0 0.0
        %2690 = vmatprep.subr.mxu0 0.0
        %2691 = vmatpush1.msra.mxu0 0.0
        %2692 = vmatprep.subr.mxu0 0.0
        %2693 = vmatpush1.msra.mxu0 0.0
        %2694 = vmatprep.subr.mxu0 0.0
        %2695 = vmatpush1.msra.mxu0 0.0
        %2696 = vmatprep.subr.mxu0 0.0
        %2697 = vmatpush1.msra.mxu0 0.0
        %2698 = vmatprep.subr.mxu0 0.0
        %2699 = vmatpush1.msra.mxu0 0.0
        %2700 = vmatprep.subr.mxu0 0.0
        %2701 = vmatpush1.msra.mxu0 0.0
        %2702 = vmatprep.subr.mxu0 0.0
        %2703 = vmatpush1.msra.mxu0 0.0
        %2704 = vmatprep.subr.mxu0 0.0
        %2705 = vmatpush1.msra.mxu0 0.0
        %2706 = vmatprep.subr.mxu0 0.0
        %2707 = vmatpush1.msra.mxu0 0.0
        %2708 = vmatprep.subr.mxu0 0.0
        %2709 = vmatpush1.msra.mxu0 0.0
        %2710 = vmatprep.subr.mxu0 0.0
        %2711 = vmatpush1.msra.mxu0 0.0
        %2712 = vmatprep.subr.mxu0 0.0
        %2713 = vmatpush1.msra.mxu0 0.0
        %2714 = vmatprep.subr.mxu0 0.0
        %2715 = vmatpush1.msra.mxu0 0.0
        %2716 = vmatprep.subr.mxu0 0.0
        %2717 = vmatpush1.msra.mxu0 %v2663
        %2718 = vmatprep.subr.mxu0 0.0
        %2719 = vmatpush1.msra.mxu0 %v2662
        %2720 = vmatprep.subr.mxu0 0.0
        %2721 = vmatpush2.msra.mxu0 0.0
        %2722 = vmatprep.subr.mxu0 0.0
        %2723 = vmatpush2.msra.mxu0 0.0
        %2724 = vmatprep.subr.mxu0 0.0
        %2725 = vmatpush2.msra.mxu0 0.0
        %2726 = vmatprep.subr.mxu0 0.0
        %2727 = vmatpush2.msra.mxu0 0.0
        %2728 = vmatprep.subr.mxu0 0.0
        %2729 = vmatpush2.msra.mxu0 0.0
        %2730 = vmatprep.subr.mxu0 0.0
        %2731 = vmatpush2.msra.mxu0 0.0
        %2732 = vmatprep.subr.mxu0 0.0
        %2733 = vmatpush2.msra.mxu0 0.0
        %2734 = vmatprep.subr.mxu0 0.0
        %2735 = vmatpush2.msra.mxu0 0.0
        %2736 = vmatprep.subr.mxu0 0.0
        %2737 = vmatpush2.msra.mxu0 0.0
        %2738 = vmatprep.subr.mxu0 0.0
        %2739 = vmatpush2.msra.mxu0 0.0
        %2740 = vmatprep.subr.mxu0 0.0
        %2741 = vmatpush2.msra.mxu0 0.0
        %2742 = vmatprep.subr.mxu0 0.0
        %2743 = vmatpush2.msra.mxu0 0.0
        %2744 = vmatprep.subr.mxu0 0.0
        %2745 = vmatpush2.msra.mxu0 0.0
        %2746 = vmatprep.subr.mxu0 0.0
        %2747 = vmatpush2.msra.mxu0 0.0
        %2748 = vmatprep.subr.mxu0 0.0
        %2749 = vmatpush2.msra.mxu0 0.0
        %2750 = vmatprep.subr.mxu0 0.0
        %2751 = vmatpush2.msra.mxu0 0.0
        %2752 = vmatprep.mubr.f32.mxu0 0.0
        %2753 = vmatmul.mubr.f32.gmra.mxu0 %v2665
        %v2754 = vpop.f32.mrf.mxu0
        %v2755 = vadd.f32 0.0, %v2754
        %v2756 = vpop.f32.mrf.mxu0
        %2757 = vmatprep.mubr.f32.mxu0 0.0
        %2758 = vmatmul.mubr.f32.gmra.mxu0 %v2668
        %v2759 = vpop.f32.mrf.mxu0
        %v2760 = vadd.f32 0.0, %v2759
        %v2761 = vpop.f32.mrf.mxu0
        %2762 = vmatprep.mubr.f32.mxu0 0.0
        %2763 = vmatmul.mubr.f32.gmra.mxu0 %v2671
        %v2764 = vpop.f32.mrf.mxu0
        %v2765 = vadd.f32 0.0, %v2764
        %v2766 = vpop.f32.mrf.mxu0
        %2767 = vmatprep.mubr.f32.mxu0 0.0
        %2768 = vmatmul.mubr.f32.gmra.mxu0 %v2674
        %v2769 = vpop.f32.mrf.mxu0
        %v2770 = vadd.f32 0.0, %v2769
        %v2771 = vpop.f32.mrf.mxu0
        %2772 = vmatprep.mubr.f32.mxu0 0.0
        %2773 = vmatmul.mubr.f32.gmra.mxu0 %v2677
        %v2774 = vpop.f32.mrf.mxu0
        %v2775 = vadd.f32 0.0, %v2774
        %v2776 = vpop.f32.mrf.mxu0
        %2777 = vmatprep.mubr.f32.mxu0 0.0
        %2778 = vmatmul.mubr.f32.gmra.mxu0 %v2680
        %v2779 = vpop.f32.mrf.mxu0
        %v2780 = vadd.f32 0.0, %v2779
        %v2781 = vpop.f32.mrf.mxu0
        %2782 = vmatprep.mubr.f32.mxu0 0.0
        %2783 = vmatmul.mubr.f32.gmra.mxu0 %v2683
        %v2784 = vpop.f32.mrf.mxu0
        %v2785 = vadd.f32 0.0, %v2784
        %v2786 = vpop.f32.mrf.mxu0
        %2787 = vmatprep.mubr.f32.mxu0 0.0
        %2788 = vmatmul.mubr.f32.gmra.mxu0 %v2686
        %v2789 = vpop.f32.mrf.mxu0
        %v2790 = vadd.f32 0.0, %v2789
        %v2791 = vpop.f32.mrf.mxu0
        %2792 = vdwg.mxu0
        %v2793 = vld [vmem:[#allocation2] sm:$0xff]
        %v2794 = vld [vmem:[#allocation2 + $0x8] sm:$0xff]
        %v2795 = vld [vmem:[#allocation2 + $0x10] sm:$0xff]
        %v2796 = vld [vmem:[#allocation2 + $0x18] sm:$0xff]
        %v2797 = vld [vmem:[#allocation2 + $0x20] sm:$0xff]
        %v2798 = vld [vmem:[#allocation2 + $0x28] sm:$0xff]
        %v2799 = vld [vmem:[#allocation2 + $0x30] sm:$0xff]
        %v2800 = vld [vmem:[#allocation2 + $0x38] sm:$0xff]
        %v2801 = vadd.f32 %v2793, %v2755
        %v2802 = vadd.f32 %v2794, %v2760
        %v2803 = vadd.f32 %v2795, %v2765
        %v2804 = vadd.f32 %v2796, %v2770
        %v2805 = vadd.f32 %v2797, %v2775
        %v2806 = vadd.f32 %v2798, %v2780
        %v2807 = vadd.f32 %v2799, %v2785
        %v2808 = vadd.f32 %v2800, %v2790
        %2809 = vst [vmem:[#allocation2] sm:$0xff] %v2801
        %2810 = vst [vmem:[#allocation2 + $0x8] sm:$0xff] %v2802
        %2811 = vst [vmem:[#allocation2 + $0x10] sm:$0xff] %v2803
        %2812 = vst [vmem:[#allocation2 + $0x18] sm:$0xff] %v2804
        %2813 = vst [vmem:[#allocation2 + $0x20] sm:$0xff] %v2805
        %2814 = vst [vmem:[#allocation2 + $0x28] sm:$0xff] %v2806
        %2815 = vst [vmem:[#allocation2 + $0x30] sm:$0xff] %v2807
        %2816 = vst [vmem:[#allocation2 + $0x38] sm:$0xff] %v2808
        %v2817 = vld [vmem:[#allocation2] sm:$0xff]
        %v2818 = vld [vmem:[#allocation2 + $0x8] sm:$0xff]
        %v2819 = vld [vmem:[#allocation2 + $0x10] sm:$0xff]
        %v2820 = vld [vmem:[#allocation2 + $0x18] sm:$0xff]
        %v2821 = vld [vmem:[#allocation2 + $0x20] sm:$0xff]
        %v2822 = vld [vmem:[#allocation2 + $0x28] sm:$0xff]
        %v2823 = vld [vmem:[#allocation2 + $0x30] sm:$0xff]
        %v2824 = vld [vmem:[#allocation2 + $0x38] sm:$0xff]
        %2825 = vst [vmem:[%s183] sm:$0xff] %v2817
        %2826 = vst [vmem:[%s183 + $0x8] sm:$0xff] %v2818
        %2827 = vst [vmem:[%s183 + $0x10] sm:$0xff] %v2819
        %2828 = vst [vmem:[%s183 + $0x18] sm:$0xff] %v2820
        %2829 = vst [vmem:[%s183 + $0x20] sm:$0xff] %v2821
        %2830 = vst [vmem:[%s183 + $0x28] sm:$0xff] %v2822
        %2831 = vst [vmem:[%s183 + $0x30] sm:$0xff] %v2823
        %2832 = vst [vmem:[%s183 + $0x38] sm:$0xff] %v2824
        %v2833 = vadd.f32 %v2817, %v2818
        %v2834 = vadd.f32 %v2833, %v2819
        %v2835 = vadd.f32 %v2834, %v2820
        %v2836 = vadd.f32 %v2835, %v2821
        %v2837 = vadd.f32 %v2836, %v2822
        %v2838 = vadd.f32 %v2837, %v2823
        %v2839 = vadd.f32 %v2838, %v2824
        %v2840 = vrot.slane %v2839, 4
        %v2841 = vadd.f32 %v2839, %v2840
        %v2842 = vrot.slane %v2841, 2
        %v2843 = vadd.f32 %v2841, %v2842
        %v2844 = vrot.slane %v2843, 1
        %v2845 = vadd.f32 %v2843, %v2844
        %v2846 = vmul.f32 %v2817, %v2817
        %v2847 = vmul.f32 %v2818, %v2818
        %v2848 = vmul.f32 %v2819, %v2819
        %v2849 = vmul.f32 %v2820, %v2820
        %v2850 = vmul.f32 %v2821, %v2821
        %v2851 = vmul.f32 %v2822, %v2822
        %v2852 = vmul.f32 %v2823, %v2823
        %v2853 = vmul.f32 %v2824, %v2824
        %v2854 = vadd.f32 %v2846, %v2847
        %v2855 = vadd.f32 %v2854, %v2848
        %v2856 = vadd.f32 %v2855, %v2849
        %v2857 = vadd.f32 %v2856, %v2850
        %v2858 = vadd.f32 %v2857, %v2851
        %v2859 = vadd.f32 %v2858, %v2852
        %v2860 = vadd.f32 %v2859, %v2853
        %v2861 = vrot.slane %v2860, 4
        %v2862 = vadd.f32 %v2860, %v2861
        %v2863 = vrot.slane %v2862, 2
        %v2864 = vadd.f32 %v2862, %v2863
        %v2865 = vrot.slane %v2864, 1
        %v2866 = vadd.f32 %v2864, %v2865
        %vm2867 = vcmask 1040384
        %v2868 = vsel %vm2867, %v2845, %v2866
        %2869 = vst [vmem:[%s190] sm:$0x3] %v2868
        %s2870 = sand.u32 %s90, 1
        %s2871 = scalar_lea.sflag [#allocation4], %s2870
        %s2872 = sand.u32 %s90, 1
        %s2873 = smul.addr %s2872, 64
        %s2874 = scalar_lea.vmem [#allocation3], %s2873
        %s2875 = sand.u32 %s118, 1
        %s2876 = scalar_lea.sflag [#allocation6], %s2875
        %s2877 = sand.u32 %s118, 1
        %s2878 = smul.addr %s2877, 2
        %s2879 = scalar_lea.vmem [#allocation5], %s2878
        // Predicated region
        $region29: #{tpu_custom_call.1} parent=27 // pred_check
          %p2880 = pneg %p100
        $region30: #{tpu_custom_call.1} parent=27 // pred_check_branch
          %2882 = sbr.rel (%p2880) target = $region32
        $region31: #{tpu_custom_call.1} parent=27 // pred_region
          %s2883 = smul.u32 8, %s26
          %s2885 = ssub.s32 1024, 1024
          %2886 = vsyncadd %s2871, %s2885
          %s2887 = smul.addr %s25, 8
          %s2888 = sadd.s32 %s2883, %s2887
          %s2889 = smul.addr %s2888, 128
          %s2890 = scalar_lea.hbm %s2, %s2889
          %s2891 = sshll.u32 %s2874, 4
          %s2892 = int_to_ptr.vmem [resolvable:$true] %s2891
          %2897 = dma.vmem_to_hbm [thread:$0]  %s2892, 1024, %s2890, %s2871, 128, 128, 8
        $region32: #{tpu_custom_call.1} parent=27 // pred_fallthru
          _
        // Predicated region
        $region33: #{tpu_custom_call.1} parent=27 // pred_check
          %p2898 = pneg %p128
        $region34: #{tpu_custom_call.1} parent=27 // pred_check_branch
          %2900 = sbr.rel (%p2898) target = $region36
        $region35: #{tpu_custom_call.1} parent=27 // pred_region
          %s2902 = ssub.s32 32, 32
          %2903 = vsyncadd %s2876, %s2902
          %s2904 = sadd.s32 %s26, %s25
          %s2905 = smul.addr %s2904, 32
          %s2906 = scalar_lea.hbm %s3, %s2905
          %s2908 = sshll.u32 %s2879, 4
          %s2909 = int_to_ptr.vmem [resolvable:$true] %s2908
          %2911 = dma.vmem_to_hbm [thread:$0]  %s2909, 32, %s2906, %s2876
        $region36: #{tpu_custom_call.1} parent=27 // pred_fallthru
          _
      $region28: #{tpu_custom_call.1} parent=5 // pred_fallthru
        _
      %p2912 = scmp.le.s32.totalorder 2, %s16
      // Predicated region
      $region37: #{tpu_custom_call.1} parent=5 // pred_check
        %p2913 = pneg %p2912
      $region38: #{tpu_custom_call.1} parent=5 // pred_check_branch
        %2915 = sbr.rel (%p2913) target = $region40
      $region39: #{tpu_custom_call.1} parent=5 // pred_region
        %s2916 = ssub.s32 %s16, 2
        // Predicated region
        $region41: #{tpu_custom_call.1} parent=39 // pred_check
          %p2917 = pneg %p106
        $region42: #{tpu_custom_call.1} parent=39 // pred_check_branch
          %2919 = sbr.rel (%p2917) target = $region44
        $region43: #{tpu_custom_call.1} parent=39 // pred_region
          %s2920 = sand.u32 %s91, 1
          %s2921 = scalar_lea.sflag [#allocation4], %s2920
          %s2922 = sand.u32 %s91, 1
          %s2923 = smul.addr %s2922, 64
          %s2924 = scalar_lea.vmem [#allocation3], %s2923
          %2925 = dma.done %s2921, 1024
        $region44: #{tpu_custom_call.1} parent=39 // pred_fallthru
          _
        // Predicated region
        $region45: #{tpu_custom_call.1} parent=39 // pred_check
          %p2926 = pneg %p134
        $region46: #{tpu_custom_call.1} parent=39 // pred_check_branch
          %2928 = sbr.rel (%p2926) target = $region48
        $region47: #{tpu_custom_call.1} parent=39 // pred_region
          %s2929 = sand.u32 %s119, 1
          %s2930 = scalar_lea.sflag [#allocation6], %s2929
          %s2931 = sand.u32 %s119, 1
          %s2932 = smul.addr %s2931, 2
          %s2933 = scalar_lea.vmem [#allocation5], %s2932
          %2934 = dma.done %s2930, 32
        $region48: #{tpu_custom_call.1} parent=39 // pred_fallthru
          _
      $region40: #{tpu_custom_call.1} parent=5 // pred_fallthru
        _
    $region6: #{tpu_custom_call.1} parent=1 // loop_footer
      %s20 = sadd.s32 1, %s16
    $region7: #{tpu_custom_call.1} parent=1 // loop_footer_branch
      %15 = sbr.rel target = $region3
    $region8: #{tpu_custom_call.1} parent=1 // loop_exit
      _
    %2935 = vsyncpa [#allocation4], 1
    %s2936 = scalar_lea.sflag [#allocation4], 1
    %2937 = vsyncpa %s2936, 1
    %2938 = vsyncpa [#allocation6], 1
    %s2939 = scalar_lea.sflag [#allocation6], 1
    %2940 = vsyncpa %s2939, 1

</llo_original>
